<compile_context>
chip_gen: v6e
topology: v6e:2x2x1
jax: 0.10.0
libtpu: 0.0.40
codegen_flags: <defaults>
</compile_context>

<pallas_src>
import functools

import jax
import jax.numpy as jnp
from jax.experimental import pallas as pl
from jax.experimental.pallas import tpu as pltpu

EPS = 1e-5  # PyTorch LayerNorm default eps


def _layernorm(x, w, b):
    mu = jnp.mean(x, axis=-1, keepdims=True)
    var = jnp.mean((x - mu) ** 2, axis=-1, keepdims=True)  # biased, like torch
    return (x - mu) * jax.lax.rsqrt(var + EPS) * w + b


def transformer_kernel(x_ref,
                       wqkv_ref, bqkv_ref, wo_ref, bo_ref, ln1w_ref, ln1b_ref,
                       w1_ref, b1_ref, w2_ref, b2_ref, ln2w_ref, ln2b_ref,
                       wf_ref, bf_ref, o_ref,
                       *, num_layers, num_heads, embed_dim, out_dim):
    """One sequence per program instance: x block is (1, S, E)."""
    E, H = embed_dim, num_heads
    dh = E // H
    x = x_ref[0]                                   # (S, E), VMEM resident
    S = x.shape[0]

    for l in range(num_layers):                    # static loop, weights indexed by l
        # ---- fused QKV projection: single (S,E)@(E,3E) MXU dot + one bias add ----
        qkv = jnp.dot(x, wqkv_ref[l], preferred_element_type=jnp.float32) + bqkv_ref[l]

        # Split heads with static lane slices, stack along a new leading (batch) axis.
        # (1/sqrt(dh) already folded into the Q columns of wqkv by the wrapper.)
        def heads_of(off):
            return jnp.stack(
                [qkv[:, off + h * dh: off + (h + 1) * dh] for h in range(H)], axis=0)

        q = heads_of(0)                            # (H, S, dh)
        k = heads_of(E)                            # (H, S, dh)
        v = heads_of(2 * E)                        # (H, S, dh)

        # ---- attention, batched over heads ----
        s = jnp.einsum('hqd,hkd->hqk', q, k,
                       preferred_element_type=jnp.float32)          # (H, S, S)
        s = s - jnp.max(s, axis=-1, keepdims=True)
        p = jnp.exp(s)
        p = p / jnp.sum(p, axis=-1, keepdims=True)                   # exact divide (f32 parity)
        ctx = jnp.einsum('hqk,hkd->hqd', p, v,
                         preferred_element_type=jnp.float32)         # (H, S, dh)

        # Merge heads along lanes (E=32 -> one lane tile, effectively free),
        # then ONE full (S,E)@(E,E) output projection.
        ctx = jnp.concatenate([ctx[h] for h in range(H)], axis=-1)   # (S, E)
        attn = jnp.dot(ctx, wo_ref[l], preferred_element_type=jnp.float32) + bo_ref[l]
        x = _layernorm(x + attn, ln1w_ref[l], ln1b_ref[l])

        # ---- feed-forward ----
        h1 = jnp.maximum(
            jnp.dot(x, w1_ref[l], preferred_element_type=jnp.float32) + b1_ref[l], 0.0)
        ff = jnp.dot(h1, w2_ref[l], preferred_element_type=jnp.float32) + b2_ref[l]
        x = _layernorm(x + ff, ln2w_ref[l], ln2b_ref[l])

    # ---- final linear, fused into the same kernel ----
    if out_dim == 1:
        # E->1 projection as a VPU multiply + lane reduce (avoids a 1-column MXU op).
        o_ref[0] = jnp.sum(x * wf_ref[...], axis=-1, keepdims=True) + bf_ref[...]
    else:
        o_ref[0] = jax.lax.dot_general(
            x, wf_ref[...], (((1,), (1,)), ((), ())),
            preferred_element_type=jnp.float32) + bf_ref[...]


def bare_transformer_forward(x, params, *, num_layers, num_heads):
    """x: (B, S, E) float32.  params: tuple produced by init_params."""
    B, S, E = x.shape
    wf_t = params[-2]                    # (O, E), lane-dense
    O = wf_t.shape[0]

    kernel = functools.partial(transformer_kernel, num_layers=num_layers,
                               num_heads=num_heads, embed_dim=E, out_dim=O)

    def rep(arr):
        # Whole array as one block, same block for every grid step (stays in VMEM).
        n = arr.ndim

        def imap(b):
            return (0,) * n

        return pl.BlockSpec(arr.shape, imap)

    out = pl.pallas_call(
        kernel,
        out_shape=jax.ShapeDtypeStruct((B, S, O), jnp.float32),
        grid=(B,),
        in_specs=[pl.BlockSpec((1, S, E), lambda b: (b, 0, 0))] + [rep(p) for p in params],
        out_specs=pl.BlockSpec((1, S, O), lambda b: (b, 0, 0)),
        compiler_params=pltpu.CompilerParams(dimension_semantics=("parallel",)),
    )(x, *params)

    return jnp.squeeze(out, -1) if O == 1 else out   # matches .squeeze(-1)


# ----------------------------- parameter init ------------------------------
def xavier_uniform(key, fan_in, fan_out, shape):
    bound = (6.0 / (fan_in + fan_out)) ** 0.5
    return jax.random.uniform(key, shape, jnp.float32, -bound, bound)


def init_params(key, embed_dim, num_layers, num_heads, dim_feedforward, output_dim):
    """Weights lane-dense, pre-transposed to (in, out), stacked per layer.
    The 1/sqrt(dh) attention scale is folded into the Q columns of Wqkv."""
    E, FF, H = embed_dim, dim_feedforward, num_heads
    assert E % H == 0
    dh = E // H
    scale = 1.0 / float(dh) ** 0.5

    wqkv, bqkv, wo, bo = [], [], [], []
    ln1w, ln1b, w1, b1, w2, b2, ln2w, ln2b = ([] for _ in range(8))

    for _ in range(num_layers):
        key, k_in, k_out, k_f1, k_f2 = jax.random.split(key, 5)
        w_in_t = xavier_uniform(k_in, E, 3 * E, (E, 3 * E))       # [Wq^T | Wk^T | Wv^T]
        w_in_t = w_in_t.at[:, :E].multiply(scale)                  # fold 1/sqrt(dh) into Wq
        wqkv.append(w_in_t)
        bqkv.append(jnp.zeros((1, 3 * E), jnp.float32))            # in_proj bias (zero init)
        wo.append(xavier_uniform(k_out, E, E, (E, E)))             # out_proj, lane-dense (E,E)
        bo.append(jnp.zeros((1, E), jnp.float32))
        ln1w.append(jnp.ones((1, E), jnp.float32)); ln1b.append(jnp.zeros((1, E), jnp.float32))
        w1.append(xavier_uniform(k_f1, E, FF, (E, FF))); b1.append(jnp.zeros((1, FF), jnp.float32))
        w2.append(xavier_uniform(k_f2, FF, E, (FF, E))); b2.append(jnp.zeros((1, E), jnp.float32))
        ln2w.append(jnp.ones((1, E), jnp.float32)); ln2b.append(jnp.zeros((1, E), jnp.float32))

    key, kf = jax.random.split(key)
    wf_t = xavier_uniform(kf, E, output_dim, (output_dim, E))      # final Linear, stored (O, E)
    bf = jnp.zeros((1, output_dim), jnp.float32)

    stk = jnp.stack
    return (stk(wqkv), stk(bqkv), stk(wo), stk(bo), stk(ln1w), stk(ln1b),
            stk(w1), stk(b1), stk(w2), stk(b2), stk(ln2w), stk(ln2b), wf_t, bf)


# --------------------------- pure-JAX reference -----------------------------
def reference_forward(x, params, *, num_layers, num_heads):
    (wqkv, bqkv, wo, bo, ln1w, ln1b, w1, b1, w2, b2, ln2w, ln2b, wf_t, bf) = params
    B, S, E = x.shape
    H = num_heads
    dh = E // H
    h_x = x
    for l in range(num_layers):
        qkv = jnp.einsum('bse,ef->bsf', h_x, wqkv[l]) + bqkv[l]
        q = qkv[..., :E].reshape(B, S, H, dh).transpose(0, 2, 1, 3)
        k = qkv[..., E:2 * E].reshape(B, S, H, dh).transpose(0, 2, 1, 3)
        v = qkv[..., 2 * E:].reshape(B, S, H, dh).transpose(0, 2, 1, 3)
        s = jnp.einsum('bhqd,bhkd->bhqk', q, k)
        p = jax.nn.softmax(s, axis=-1)
        ctx = jnp.einsum('bhqk,bhkd->bhqd', p, v).transpose(0, 2, 1, 3).reshape(B, S, E)
        attn = jnp.einsum('bse,ef->bsf', ctx, wo[l]) + bo[l]
        h_x = _layernorm(h_x + attn, ln1w[l], ln1b[l])
        ff = jnp.maximum(jnp.einsum('bse,ef->bsf', h_x, w1[l]) + b1[l], 0.0)
        ff = jnp.einsum('bsf,fe->bse', ff, w2[l]) + b2[l]
        h_x = _layernorm(h_x + ff, ln2w[l], ln2b[l])
    out = jnp.einsum('bse,oe->bso', h_x, wf_t) + bf
    return jnp.squeeze(out, -1) if out.shape[-1] == 1 else out


if __name__ == "__main__":
    # Small config consistent with the module's forward: x is (batch, seq, embed_dim)
    B, S = 2, 8
    embed_dim, output_dim = 32, 1
    num_layers, num_heads, dim_feedforward = 2, 4, 64

    key = jax.random.PRNGKey(0)
    key, kx = jax.random.split(key)
    x = jax.random.normal(kx, (B, S, embed_dim), jnp.float32)

    params = init_params(key, embed_dim, num_layers, num_heads,
                         dim_feedforward, output_dim)

    out = bare_transformer_forward(x, params,
                                   num_layers=num_layers, num_heads=num_heads)
    out = jax.block_until_ready(out)
    assert out.shape == (B, S), out.shape
    assert bool(jnp.all(jnp.isfinite(out)))

    ref = reference_forward(x, params, num_layers=num_layers, num_heads=num_heads)
    ref = jax.block_until_ready(ref)
    max_err = float(jnp.max(jnp.abs(out - ref)))
    assert max_err < 1e-3, f"kernel vs reference mismatch: max abs err = {max_err}"

    print("KERNEL_OK")
</pallas_src>

<mosaic_0001>
module attributes {stable_mosaic.version = 11 : i64} {
  func.func @transformer_kernel(%arg0: i32, %arg1: memref<1x8x32xf32, #tpu.memory_space<vmem>>, %arg2: memref<2x32x96xf32, #tpu.memory_space<vmem>>, %arg3: memref<2x1x96xf32, #tpu.memory_space<vmem>>, %arg4: memref<2x32x32xf32, #tpu.memory_space<vmem>>, %arg5: memref<2x1x32xf32, #tpu.memory_space<vmem>>, %arg6: memref<2x1x32xf32, #tpu.memory_space<vmem>>, %arg7: memref<2x1x32xf32, #tpu.memory_space<vmem>>, %arg8: memref<2x32x64xf32, #tpu.memory_space<vmem>>, %arg9: memref<2x1x64xf32, #tpu.memory_space<vmem>>, %arg10: memref<2x64x32xf32, #tpu.memory_space<vmem>>, %arg11: memref<2x1x32xf32, #tpu.memory_space<vmem>>, %arg12: memref<2x1x32xf32, #tpu.memory_space<vmem>>, %arg13: memref<2x1x32xf32, #tpu.memory_space<vmem>>, %arg14: memref<1x32xf32, #tpu.memory_space<vmem>>, %arg15: memref<1x1xf32, #tpu.memory_space<vmem>>, %arg16: memref<1x8x1xf32, #tpu.memory_space<vmem>>) attributes {dimension_semantics = [#tpu.dimension_semantics<parallel>], iteration_bounds = array<i64: 2>, scalar_prefetch = 0 : i64, scratch_operands = 0 : i64, tpu.core_type = #tpu.core_type<tc>, window_params = [{transform_indices = @transform_0, window_bounds = array<i64: 1, 8, 32>}, {pipeline_mode = #tpu.pipeline_mode<synchronous>, transform_indices = @transform_1, window_bounds = array<i64: 2, 32, 96>}, {pipeline_mode = #tpu.pipeline_mode<synchronous>, transform_indices = @transform_2, window_bounds = array<i64: 2, 1, 96>}, {pipeline_mode = #tpu.pipeline_mode<synchronous>, transform_indices = @transform_3, window_bounds = array<i64: 2, 32, 32>}, {pipeline_mode = #tpu.pipeline_mode<synchronous>, transform_indices = @transform_4, window_bounds = array<i64: 2, 1, 32>}, {pipeline_mode = #tpu.pipeline_mode<synchronous>, transform_indices = @transform_5, window_bounds = array<i64: 2, 1, 32>}, {pipeline_mode = #tpu.pipeline_mode<synchronous>, transform_indices = @transform_6, window_bounds = array<i64: 2, 1, 32>}, {pipeline_mode = #tpu.pipeline_mode<synchronous>, transform_indices = @transform_7, window_bounds = array<i64: 2, 32, 64>}, {pipeline_mode = #tpu.pipeline_mode<synchronous>, transform_indices = @transform_8, window_bounds = array<i64: 2, 1, 64>}, {pipeline_mode = #tpu.pipeline_mode<synchronous>, transform_indices = @transform_9, window_bounds = array<i64: 2, 64, 32>}, {pipeline_mode = #tpu.pipeline_mode<synchronous>, transform_indices = @transform_10, window_bounds = array<i64: 2, 1, 32>}, {pipeline_mode = #tpu.pipeline_mode<synchronous>, transform_indices = @transform_11, window_bounds = array<i64: 2, 1, 32>}, {pipeline_mode = #tpu.pipeline_mode<synchronous>, transform_indices = @transform_12, window_bounds = array<i64: 2, 1, 32>}, {pipeline_mode = #tpu.pipeline_mode<synchronous>, transform_indices = @transform_13, window_bounds = array<i64: 1, 32>}, {pipeline_mode = #tpu.pipeline_mode<synchronous>, transform_indices = @transform_14, window_bounds = array<i64: 1, 1>}, {transform_indices = @transform_15, window_bounds = array<i64: 1, 8, 1>}]} {
    %c0 = arith.constant 0 : index
    %c0_0 = arith.constant 0 : index
    %c0_1 = arith.constant 0 : index
    %0 = vector.load %arg1[%c0, %c0_0, %c0_1] : memref<1x8x32xf32, #tpu.memory_space<vmem>>, vector<1x8x32xf32>
    %1 = vector.shape_cast %0 : vector<1x8x32xf32> to vector<8x32xf32>
    %c0_2 = arith.constant 0 : index
    %c0_3 = arith.constant 0 : index
    %c0_4 = arith.constant 0 : index
    %2 = vector.load %arg2[%c0_2, %c0_3, %c0_4] : memref<2x32x96xf32, #tpu.memory_space<vmem>>, vector<1x32x96xf32>
    %3 = vector.shape_cast %2 : vector<1x32x96xf32> to vector<32x96xf32>
    %cst = arith.constant dense<0.000000e+00> : vector<8x96xf32>
    %4 = tpu.matmul %1, %3, %cst {dimension_numbers = #tpu.dot_dimension_numbers<[1], [0], [0], [1], [0, 0, 1, 1], [], []>} : vector<8x32xf32>, vector<32x96xf32>, vector<8x96xf32> -> vector<8x96xf32>
    %c0_5 = arith.constant 0 : index
    %c0_6 = arith.constant 0 : index
    %c0_7 = arith.constant 0 : index
    %5 = vector.load %arg3[%c0_5, %c0_6, %c0_7] : memref<2x1x96xf32, #tpu.memory_space<vmem>>, vector<1x1x96xf32>
    %6 = vector.shape_cast %5 : vector<1x1x96xf32> to vector<1x96xf32>
    %7 = vector.broadcast %6 : vector<1x96xf32> to vector<8x96xf32>
    %8 = arith.addf %4, %7 : vector<8x96xf32>
    %9 = vector.extract_strided_slice %8 {offsets = [0, 0], sizes = [8, 8], strides = [1, 1]} : vector<8x96xf32> to vector<8x8xf32>
    %10 = vector.extract_strided_slice %8 {offsets = [0, 8], sizes = [8, 8], strides = [1, 1]} : vector<8x96xf32> to vector<8x8xf32>
    %11 = vector.extract_strided_slice %8 {offsets = [0, 16], sizes = [8, 8], strides = [1, 1]} : vector<8x96xf32> to vector<8x8xf32>
    %12 = vector.extract_strided_slice %8 {offsets = [0, 24], sizes = [8, 8], strides = [1, 1]} : vector<8x96xf32> to vector<8x8xf32>
    %13 = vector.shape_cast %9 : vector<8x8xf32> to vector<1x8x8xf32>
    %14 = vector.shape_cast %10 : vector<8x8xf32> to vector<1x8x8xf32>
    %15 = vector.shape_cast %11 : vector<8x8xf32> to vector<1x8x8xf32>
    %16 = vector.shape_cast %12 : vector<8x8xf32> to vector<1x8x8xf32>
    %17 = tpu.concatenate %13, %14, %15, %16 in 0 : vector<1x8x8xf32>, vector<1x8x8xf32>, vector<1x8x8xf32>, vector<1x8x8xf32> -> vector<4x8x8xf32>
    %18 = vector.extract_strided_slice %8 {offsets = [0, 32], sizes = [8, 8], strides = [1, 1]} : vector<8x96xf32> to vector<8x8xf32>
    %19 = vector.extract_strided_slice %8 {offsets = [0, 40], sizes = [8, 8], strides = [1, 1]} : vector<8x96xf32> to vector<8x8xf32>
    %20 = vector.extract_strided_slice %8 {offsets = [0, 48], sizes = [8, 8], strides = [1, 1]} : vector<8x96xf32> to vector<8x8xf32>
    %21 = vector.extract_strided_slice %8 {offsets = [0, 56], sizes = [8, 8], strides = [1, 1]} : vector<8x96xf32> to vector<8x8xf32>
    %22 = vector.shape_cast %18 : vector<8x8xf32> to vector<1x8x8xf32>
    %23 = vector.shape_cast %19 : vector<8x8xf32> to vector<1x8x8xf32>
    %24 = vector.shape_cast %20 : vector<8x8xf32> to vector<1x8x8xf32>
    %25 = vector.shape_cast %21 : vector<8x8xf32> to vector<1x8x8xf32>
    %26 = tpu.concatenate %22, %23, %24, %25 in 0 : vector<1x8x8xf32>, vector<1x8x8xf32>, vector<1x8x8xf32>, vector<1x8x8xf32> -> vector<4x8x8xf32>
    %27 = vector.extract_strided_slice %8 {offsets = [0, 64], sizes = [8, 8], strides = [1, 1]} : vector<8x96xf32> to vector<8x8xf32>
    %28 = vector.extract_strided_slice %8 {offsets = [0, 72], sizes = [8, 8], strides = [1, 1]} : vector<8x96xf32> to vector<8x8xf32>
    %29 = vector.extract_strided_slice %8 {offsets = [0, 80], sizes = [8, 8], strides = [1, 1]} : vector<8x96xf32> to vector<8x8xf32>
    %30 = vector.extract_strided_slice %8 {offsets = [0, 88], sizes = [8, 8], strides = [1, 1]} : vector<8x96xf32> to vector<8x8xf32>
    %31 = vector.shape_cast %27 : vector<8x8xf32> to vector<1x8x8xf32>
    %32 = vector.shape_cast %28 : vector<8x8xf32> to vector<1x8x8xf32>
    %33 = vector.shape_cast %29 : vector<8x8xf32> to vector<1x8x8xf32>
    %34 = vector.shape_cast %30 : vector<8x8xf32> to vector<1x8x8xf32>
    %35 = tpu.concatenate %31, %32, %33, %34 in 0 : vector<1x8x8xf32>, vector<1x8x8xf32>, vector<1x8x8xf32>, vector<1x8x8xf32> -> vector<4x8x8xf32>
    "tpu.trace_start"() <{level = 10 : i32, message = "hqd,hkd->hqk"}> : () -> ()
    %cst_8 = arith.constant dense<0.000000e+00> : vector<4x8x8xf32>
    %36 = tpu.matmul %17, %26, %cst_8 {dimension_numbers = #tpu.dot_dimension_numbers<[2], [2], [1], [1], [0, 0, 0, 1, 1, 1], [0], [0]>} : vector<4x8x8xf32>, vector<4x8x8xf32>, vector<4x8x8xf32> -> vector<4x8x8xf32>
    "tpu.trace_stop"() : () -> ()
    %cst_9 = arith.constant dense<0xFF800000> : vector<4x8xf32>
    %37 = vector.multi_reduction <maximumf>, %36, %cst_9 [2] : vector<4x8x8xf32> to vector<4x8xf32>
    %38 = vector.shape_cast %37 : vector<4x8xf32> to vector<4x8x1xf32>
    %39 = vector.broadcast %38 : vector<4x8x1xf32> to vector<4x8x8xf32>
    %40 = arith.subf %36, %39 : vector<4x8x8xf32>
    %41 = math.exp %40 : vector<4x8x8xf32>
    %cst_10 = arith.constant dense<0.000000e+00> : vector<4x8xf32>
    %42 = vector.multi_reduction <add>, %41, %cst_10 [2] : vector<4x8x8xf32> to vector<4x8xf32>
    %43 = vector.shape_cast %42 : vector<4x8xf32> to vector<4x8x1xf32>
    %44 = vector.broadcast %43 : vector<4x8x1xf32> to vector<4x8x8xf32>
    %45 = arith.divf %41, %44 : vector<4x8x8xf32>
    "tpu.trace_start"() <{level = 10 : i32, message = "hqk,hkd->hqd"}> : () -> ()
    %cst_11 = arith.constant dense<0.000000e+00> : vector<4x8x8xf32>
    %46 = tpu.matmul %45, %35, %cst_11 {dimension_numbers = #tpu.dot_dimension_numbers<[2], [1], [1], [2], [0, 0, 0, 1, 1, 2], [0], [0]>} : vector<4x8x8xf32>, vector<4x8x8xf32>, vector<4x8x8xf32> -> vector<4x8x8xf32>
    "tpu.trace_stop"() : () -> ()
    %47 = vector.extract_strided_slice %46 {offsets = [0, 0, 0], sizes = [1, 8, 8], strides = [1, 1, 1]} : vector<4x8x8xf32> to vector<1x8x8xf32>
    %48 = vector.shape_cast %47 : vector<1x8x8xf32> to vector<8x8xf32>
    %49 = vector.extract_strided_slice %46 {offsets = [1, 0, 0], sizes = [1, 8, 8], strides = [1, 1, 1]} : vector<4x8x8xf32> to vector<1x8x8xf32>
    %50 = vector.shape_cast %49 : vector<1x8x8xf32> to vector<8x8xf32>
    %51 = vector.extract_strided_slice %46 {offsets = [2, 0, 0], sizes = [1, 8, 8], strides = [1, 1, 1]} : vector<4x8x8xf32> to vector<1x8x8xf32>
    %52 = vector.shape_cast %51 : vector<1x8x8xf32> to vector<8x8xf32>
    %53 = vector.extract_strided_slice %46 {offsets = [3, 0, 0], sizes = [1, 8, 8], strides = [1, 1, 1]} : vector<4x8x8xf32> to vector<1x8x8xf32>
    %54 = vector.shape_cast %53 : vector<1x8x8xf32> to vector<8x8xf32>
    %55 = tpu.concatenate %48, %50, %52, %54 in 1 : vector<8x8xf32>, vector<8x8xf32>, vector<8x8xf32>, vector<8x8xf32> -> vector<8x32xf32>
    %c0_12 = arith.constant 0 : index
    %c0_13 = arith.constant 0 : index
    %c0_14 = arith.constant 0 : index
    %56 = vector.load %arg4[%c0_12, %c0_13, %c0_14] : memref<2x32x32xf32, #tpu.memory_space<vmem>>, vector<1x32x32xf32>
    %57 = vector.shape_cast %56 : vector<1x32x32xf32> to vector<32x32xf32>
    %cst_15 = arith.constant dense<0.000000e+00> : vector<8x32xf32>
    %58 = tpu.matmul %55, %57, %cst_15 {dimension_numbers = #tpu.dot_dimension_numbers<[1], [0], [0], [1], [0, 0, 1, 1], [], []>} : vector<8x32xf32>, vector<32x32xf32>, vector<8x32xf32> -> vector<8x32xf32>
    %c0_16 = arith.constant 0 : index
    %c0_17 = arith.constant 0 : index
    %c0_18 = arith.constant 0 : index
    %59 = vector.load %arg5[%c0_16, %c0_17, %c0_18] : memref<2x1x32xf32, #tpu.memory_space<vmem>>, vector<1x1x32xf32>
    %60 = vector.shape_cast %59 : vector<1x1x32xf32> to vector<1x32xf32>
    %61 = vector.broadcast %60 : vector<1x32xf32> to vector<8x32xf32>
    %62 = arith.addf %58, %61 : vector<8x32xf32>
    %63 = arith.addf %1, %62 : vector<8x32xf32>
    %c0_19 = arith.constant 0 : index
    %c0_20 = arith.constant 0 : index
    %c0_21 = arith.constant 0 : index
    %64 = vector.load %arg6[%c0_19, %c0_20, %c0_21] : memref<2x1x32xf32, #tpu.memory_space<vmem>>, vector<1x1x32xf32>
    %65 = vector.shape_cast %64 : vector<1x1x32xf32> to vector<1x32xf32>
    %c0_22 = arith.constant 0 : index
    %c0_23 = arith.constant 0 : index
    %c0_24 = arith.constant 0 : index
    %66 = vector.load %arg7[%c0_22, %c0_23, %c0_24] : memref<2x1x32xf32, #tpu.memory_space<vmem>>, vector<1x1x32xf32>
    %67 = vector.shape_cast %66 : vector<1x1x32xf32> to vector<1x32xf32>
    %cst_25 = arith.constant dense<0.000000e+00> : vector<8xf32>
    %68 = vector.multi_reduction <add>, %63, %cst_25 [1] : vector<8x32xf32> to vector<8xf32>
    %69 = vector.shape_cast %68 : vector<8xf32> to vector<8x1xf32>
    %cst_26 = arith.constant 3.200000e+01 : f32
    %70 = vector.broadcast %cst_26 : f32 to vector<8x1xf32>
    %71 = arith.divf %69, %70 : vector<8x1xf32>
    %72 = vector.broadcast %71 : vector<8x1xf32> to vector<8x32xf32>
    %73 = arith.subf %63, %72 : vector<8x32xf32>
    %74 = arith.mulf %73, %73 : vector<8x32xf32>
    %cst_27 = arith.constant dense<0.000000e+00> : vector<8xf32>
    %75 = vector.multi_reduction <add>, %74, %cst_27 [1] : vector<8x32xf32> to vector<8xf32>
    %76 = vector.shape_cast %75 : vector<8xf32> to vector<8x1xf32>
    %cst_28 = arith.constant 3.200000e+01 : f32
    %77 = vector.broadcast %cst_28 : f32 to vector<8x1xf32>
    %78 = arith.divf %76, %77 : vector<8x1xf32>
    %79 = vector.broadcast %71 : vector<8x1xf32> to vector<8x32xf32>
    %80 = arith.subf %63, %79 : vector<8x32xf32>
    %cst_29 = arith.constant 9.99999974E-6 : f32
    %81 = vector.broadcast %cst_29 : f32 to vector<8x1xf32>
    %82 = arith.addf %78, %81 : vector<8x1xf32>
    %83 = math.rsqrt %82 : vector<8x1xf32>
    %84 = vector.broadcast %83 : vector<8x1xf32> to vector<8x32xf32>
    %85 = arith.mulf %80, %84 : vector<8x32xf32>
    %86 = vector.broadcast %65 : vector<1x32xf32> to vector<8x32xf32>
    %87 = arith.mulf %85, %86 : vector<8x32xf32>
    %88 = vector.broadcast %67 : vector<1x32xf32> to vector<8x32xf32>
    %89 = arith.addf %87, %88 : vector<8x32xf32>
    %c0_30 = arith.constant 0 : index
    %c0_31 = arith.constant 0 : index
    %c0_32 = arith.constant 0 : index
    %90 = vector.load %arg8[%c0_30, %c0_31, %c0_32] : memref<2x32x64xf32, #tpu.memory_space<vmem>>, vector<1x32x64xf32>
    %91 = vector.shape_cast %90 : vector<1x32x64xf32> to vector<32x64xf32>
    %cst_33 = arith.constant dense<0.000000e+00> : vector<8x64xf32>
    %92 = tpu.matmul %89, %91, %cst_33 {dimension_numbers = #tpu.dot_dimension_numbers<[1], [0], [0], [1], [0, 0, 1, 1], [], []>} : vector<8x32xf32>, vector<32x64xf32>, vector<8x64xf32> -> vector<8x64xf32>
    %c0_34 = arith.constant 0 : index
    %c0_35 = arith.constant 0 : index
    %c0_36 = arith.constant 0 : index
    %93 = vector.load %arg9[%c0_34, %c0_35, %c0_36] : memref<2x1x64xf32, #tpu.memory_space<vmem>>, vector<1x1x64xf32>
    %94 = vector.shape_cast %93 : vector<1x1x64xf32> to vector<1x64xf32>
    %95 = vector.broadcast %94 : vector<1x64xf32> to vector<8x64xf32>
    %96 = arith.addf %92, %95 : vector<8x64xf32>
    %cst_37 = arith.constant 0.000000e+00 : f32
    %97 = vector.broadcast %cst_37 : f32 to vector<8x64xf32>
    %98 = arith.maximumf %96, %97 : vector<8x64xf32>
    %c0_38 = arith.constant 0 : index
    %c0_39 = arith.constant 0 : index
    %c0_40 = arith.constant 0 : index
    %99 = vector.load %arg10[%c0_38, %c0_39, %c0_40] : memref<2x64x32xf32, #tpu.memory_space<vmem>>, vector<1x64x32xf32>
    %100 = vector.shape_cast %99 : vector<1x64x32xf32> to vector<64x32xf32>
    %cst_41 = arith.constant dense<0.000000e+00> : vector<8x32xf32>
    %101 = tpu.matmul %98, %100, %cst_41 {dimension_numbers = #tpu.dot_dimension_numbers<[1], [0], [0], [1], [0, 0, 1, 1], [], []>} : vector<8x64xf32>, vector<64x32xf32>, vector<8x32xf32> -> vector<8x32xf32>
    %c0_42 = arith.constant 0 : index
    %c0_43 = arith.constant 0 : index
    %c0_44 = arith.constant 0 : index
    %102 = vector.load %arg11[%c0_42, %c0_43, %c0_44] : memref<2x1x32xf32, #tpu.memory_space<vmem>>, vector<1x1x32xf32>
    %103 = vector.shape_cast %102 : vector<1x1x32xf32> to vector<1x32xf32>
    %104 = vector.broadcast %103 : vector<1x32xf32> to vector<8x32xf32>
    %105 = arith.addf %101, %104 : vector<8x32xf32>
    %106 = arith.addf %89, %105 : vector<8x32xf32>
    %c0_45 = arith.constant 0 : index
    %c0_46 = arith.constant 0 : index
    %c0_47 = arith.constant 0 : index
    %107 = vector.load %arg12[%c0_45, %c0_46, %c0_47] : memref<2x1x32xf32, #tpu.memory_space<vmem>>, vector<1x1x32xf32>
    %108 = vector.shape_cast %107 : vector<1x1x32xf32> to vector<1x32xf32>
    %c0_48 = arith.constant 0 : index
    %c0_49 = arith.constant 0 : index
    %c0_50 = arith.constant 0 : index
    %109 = vector.load %arg13[%c0_48, %c0_49, %c0_50] : memref<2x1x32xf32, #tpu.memory_space<vmem>>, vector<1x1x32xf32>
    %110 = vector.shape_cast %109 : vector<1x1x32xf32> to vector<1x32xf32>
    %cst_51 = arith.constant dense<0.000000e+00> : vector<8xf32>
    %111 = vector.multi_reduction <add>, %106, %cst_51 [1] : vector<8x32xf32> to vector<8xf32>
    %112 = vector.shape_cast %111 : vector<8xf32> to vector<8x1xf32>
    %cst_52 = arith.constant 3.200000e+01 : f32
    %113 = vector.broadcast %cst_52 : f32 to vector<8x1xf32>
    %114 = arith.divf %112, %113 : vector<8x1xf32>
    %115 = vector.broadcast %114 : vector<8x1xf32> to vector<8x32xf32>
    %116 = arith.subf %106, %115 : vector<8x32xf32>
    %117 = arith.mulf %116, %116 : vector<8x32xf32>
    %cst_53 = arith.constant dense<0.000000e+00> : vector<8xf32>
    %118 = vector.multi_reduction <add>, %117, %cst_53 [1] : vector<8x32xf32> to vector<8xf32>
    %119 = vector.shape_cast %118 : vector<8xf32> to vector<8x1xf32>
    %cst_54 = arith.constant 3.200000e+01 : f32
    %120 = vector.broadcast %cst_54 : f32 to vector<8x1xf32>
    %121 = arith.divf %119, %120 : vector<8x1xf32>
    %122 = vector.broadcast %114 : vector<8x1xf32> to vector<8x32xf32>
    %123 = arith.subf %106, %122 : vector<8x32xf32>
    %cst_55 = arith.constant 9.99999974E-6 : f32
    %124 = vector.broadcast %cst_55 : f32 to vector<8x1xf32>
    %125 = arith.addf %121, %124 : vector<8x1xf32>
    %126 = math.rsqrt %125 : vector<8x1xf32>
    %127 = vector.broadcast %126 : vector<8x1xf32> to vector<8x32xf32>
    %128 = arith.mulf %123, %127 : vector<8x32xf32>
    %129 = vector.broadcast %108 : vector<1x32xf32> to vector<8x32xf32>
    %130 = arith.mulf %128, %129 : vector<8x32xf32>
    %131 = vector.broadcast %110 : vector<1x32xf32> to vector<8x32xf32>
    %132 = arith.addf %130, %131 : vector<8x32xf32>
    %c1 = arith.constant 1 : index
    %c0_56 = arith.constant 0 : index
    %c0_57 = arith.constant 0 : index
    %133 = vector.load %arg2[%c1, %c0_56, %c0_57] : memref<2x32x96xf32, #tpu.memory_space<vmem>>, vector<1x32x96xf32>
    %134 = vector.shape_cast %133 : vector<1x32x96xf32> to vector<32x96xf32>
    %cst_58 = arith.constant dense<0.000000e+00> : vector<8x96xf32>
    %135 = tpu.matmul %132, %134, %cst_58 {dimension_numbers = #tpu.dot_dimension_numbers<[1], [0], [0], [1], [0, 0, 1, 1], [], []>} : vector<8x32xf32>, vector<32x96xf32>, vector<8x96xf32> -> vector<8x96xf32>
    %c1_59 = arith.constant 1 : index
    %c0_60 = arith.constant 0 : index
    %c0_61 = arith.constant 0 : index
    %136 = vector.load %arg3[%c1_59, %c0_60, %c0_61] : memref<2x1x96xf32, #tpu.memory_space<vmem>>, vector<1x1x96xf32>
    %137 = vector.shape_cast %136 : vector<1x1x96xf32> to vector<1x96xf32>
    %138 = vector.broadcast %137 : vector<1x96xf32> to vector<8x96xf32>
    %139 = arith.addf %135, %138 : vector<8x96xf32>
    %140 = vector.extract_strided_slice %139 {offsets = [0, 0], sizes = [8, 8], strides = [1, 1]} : vector<8x96xf32> to vector<8x8xf32>
    %141 = vector.extract_strided_slice %139 {offsets = [0, 8], sizes = [8, 8], strides = [1, 1]} : vector<8x96xf32> to vector<8x8xf32>
    %142 = vector.extract_strided_slice %139 {offsets = [0, 16], sizes = [8, 8], strides = [1, 1]} : vector<8x96xf32> to vector<8x8xf32>
    %143 = vector.extract_strided_slice %139 {offsets = [0, 24], sizes = [8, 8], strides = [1, 1]} : vector<8x96xf32> to vector<8x8xf32>
    %144 = vector.shape_cast %140 : vector<8x8xf32> to vector<1x8x8xf32>
    %145 = vector.shape_cast %141 : vector<8x8xf32> to vector<1x8x8xf32>
    %146 = vector.shape_cast %142 : vector<8x8xf32> to vector<1x8x8xf32>
    %147 = vector.shape_cast %143 : vector<8x8xf32> to vector<1x8x8xf32>
    %148 = tpu.concatenate %144, %145, %146, %147 in 0 : vector<1x8x8xf32>, vector<1x8x8xf32>, vector<1x8x8xf32>, vector<1x8x8xf32> -> vector<4x8x8xf32>
    %149 = vector.extract_strided_slice %139 {offsets = [0, 32], sizes = [8, 8], strides = [1, 1]} : vector<8x96xf32> to vector<8x8xf32>
    %150 = vector.extract_strided_slice %139 {offsets = [0, 40], sizes = [8, 8], strides = [1, 1]} : vector<8x96xf32> to vector<8x8xf32>
    %151 = vector.extract_strided_slice %139 {offsets = [0, 48], sizes = [8, 8], strides = [1, 1]} : vector<8x96xf32> to vector<8x8xf32>
    %152 = vector.extract_strided_slice %139 {offsets = [0, 56], sizes = [8, 8], strides = [1, 1]} : vector<8x96xf32> to vector<8x8xf32>
    %153 = vector.shape_cast %149 : vector<8x8xf32> to vector<1x8x8xf32>
    %154 = vector.shape_cast %150 : vector<8x8xf32> to vector<1x8x8xf32>
    %155 = vector.shape_cast %151 : vector<8x8xf32> to vector<1x8x8xf32>
    %156 = vector.shape_cast %152 : vector<8x8xf32> to vector<1x8x8xf32>
    %157 = tpu.concatenate %153, %154, %155, %156 in 0 : vector<1x8x8xf32>, vector<1x8x8xf32>, vector<1x8x8xf32>, vector<1x8x8xf32> -> vector<4x8x8xf32>
    %158 = vector.extract_strided_slice %139 {offsets = [0, 64], sizes = [8, 8], strides = [1, 1]} : vector<8x96xf32> to vector<8x8xf32>
    %159 = vector.extract_strided_slice %139 {offsets = [0, 72], sizes = [8, 8], strides = [1, 1]} : vector<8x96xf32> to vector<8x8xf32>
    %160 = vector.extract_strided_slice %139 {offsets = [0, 80], sizes = [8, 8], strides = [1, 1]} : vector<8x96xf32> to vector<8x8xf32>
    %161 = vector.extract_strided_slice %139 {offsets = [0, 88], sizes = [8, 8], strides = [1, 1]} : vector<8x96xf32> to vector<8x8xf32>
    %162 = vector.shape_cast %158 : vector<8x8xf32> to vector<1x8x8xf32>
    %163 = vector.shape_cast %159 : vector<8x8xf32> to vector<1x8x8xf32>
    %164 = vector.shape_cast %160 : vector<8x8xf32> to vector<1x8x8xf32>
    %165 = vector.shape_cast %161 : vector<8x8xf32> to vector<1x8x8xf32>
    %166 = tpu.concatenate %162, %163, %164, %165 in 0 : vector<1x8x8xf32>, vector<1x8x8xf32>, vector<1x8x8xf32>, vector<1x8x8xf32> -> vector<4x8x8xf32>
    "tpu.trace_start"() <{level = 10 : i32, message = "hqd,hkd->hqk"}> : () -> ()
    %cst_62 = arith.constant dense<0.000000e+00> : vector<4x8x8xf32>
    %167 = tpu.matmul %148, %157, %cst_62 {dimension_numbers = #tpu.dot_dimension_numbers<[2], [2], [1], [1], [0, 0, 0, 1, 1, 1], [0], [0]>} : vector<4x8x8xf32>, vector<4x8x8xf32>, vector<4x8x8xf32> -> vector<4x8x8xf32>
    "tpu.trace_stop"() : () -> ()
    %cst_63 = arith.constant dense<0xFF800000> : vector<4x8xf32>
    %168 = vector.multi_reduction <maximumf>, %167, %cst_63 [2] : vector<4x8x8xf32> to vector<4x8xf32>
    %169 = vector.shape_cast %168 : vector<4x8xf32> to vector<4x8x1xf32>
    %170 = vector.broadcast %169 : vector<4x8x1xf32> to vector<4x8x8xf32>
    %171 = arith.subf %167, %170 : vector<4x8x8xf32>
    %172 = math.exp %171 : vector<4x8x8xf32>
    %cst_64 = arith.constant dense<0.000000e+00> : vector<4x8xf32>
    %173 = vector.multi_reduction <add>, %172, %cst_64 [2] : vector<4x8x8xf32> to vector<4x8xf32>
    %174 = vector.shape_cast %173 : vector<4x8xf32> to vector<4x8x1xf32>
    %175 = vector.broadcast %174 : vector<4x8x1xf32> to vector<4x8x8xf32>
    %176 = arith.divf %172, %175 : vector<4x8x8xf32>
    "tpu.trace_start"() <{level = 10 : i32, message = "hqk,hkd->hqd"}> : () -> ()
    %cst_65 = arith.constant dense<0.000000e+00> : vector<4x8x8xf32>
    %177 = tpu.matmul %176, %166, %cst_65 {dimension_numbers = #tpu.dot_dimension_numbers<[2], [1], [1], [2], [0, 0, 0, 1, 1, 2], [0], [0]>} : vector<4x8x8xf32>, vector<4x8x8xf32>, vector<4x8x8xf32> -> vector<4x8x8xf32>
    "tpu.trace_stop"() : () -> ()
    %178 = vector.extract_strided_slice %177 {offsets = [0, 0, 0], sizes = [1, 8, 8], strides = [1, 1, 1]} : vector<4x8x8xf32> to vector<1x8x8xf32>
    %179 = vector.shape_cast %178 : vector<1x8x8xf32> to vector<8x8xf32>
    %180 = vector.extract_strided_slice %177 {offsets = [1, 0, 0], sizes = [1, 8, 8], strides = [1, 1, 1]} : vector<4x8x8xf32> to vector<1x8x8xf32>
    %181 = vector.shape_cast %180 : vector<1x8x8xf32> to vector<8x8xf32>
    %182 = vector.extract_strided_slice %177 {offsets = [2, 0, 0], sizes = [1, 8, 8], strides = [1, 1, 1]} : vector<4x8x8xf32> to vector<1x8x8xf32>
    %183 = vector.shape_cast %182 : vector<1x8x8xf32> to vector<8x8xf32>
    %184 = vector.extract_strided_slice %177 {offsets = [3, 0, 0], sizes = [1, 8, 8], strides = [1, 1, 1]} : vector<4x8x8xf32> to vector<1x8x8xf32>
    %185 = vector.shape_cast %184 : vector<1x8x8xf32> to vector<8x8xf32>
    %186 = tpu.concatenate %179, %181, %183, %185 in 1 : vector<8x8xf32>, vector<8x8xf32>, vector<8x8xf32>, vector<8x8xf32> -> vector<8x32xf32>
    %c1_66 = arith.constant 1 : index
    %c0_67 = arith.constant 0 : index
    %c0_68 = arith.constant 0 : index
    %187 = vector.load %arg4[%c1_66, %c0_67, %c0_68] : memref<2x32x32xf32, #tpu.memory_space<vmem>>, vector<1x32x32xf32>
    %188 = vector.shape_cast %187 : vector<1x32x32xf32> to vector<32x32xf32>
    %cst_69 = arith.constant dense<0.000000e+00> : vector<8x32xf32>
    %189 = tpu.matmul %186, %188, %cst_69 {dimension_numbers = #tpu.dot_dimension_numbers<[1], [0], [0], [1], [0, 0, 1, 1], [], []>} : vector<8x32xf32>, vector<32x32xf32>, vector<8x32xf32> -> vector<8x32xf32>
    %c1_70 = arith.constant 1 : index
    %c0_71 = arith.constant 0 : index
    %c0_72 = arith.constant 0 : index
    %190 = vector.load %arg5[%c1_70, %c0_71, %c0_72] : memref<2x1x32xf32, #tpu.memory_space<vmem>>, vector<1x1x32xf32>
    %191 = vector.shape_cast %190 : vector<1x1x32xf32> to vector<1x32xf32>
    %192 = vector.broadcast %191 : vector<1x32xf32> to vector<8x32xf32>
    %193 = arith.addf %189, %192 : vector<8x32xf32>
    %194 = arith.addf %132, %193 : vector<8x32xf32>
    %c1_73 = arith.constant 1 : index
    %c0_74 = arith.constant 0 : index
    %c0_75 = arith.constant 0 : index
    %195 = vector.load %arg6[%c1_73, %c0_74, %c0_75] : memref<2x1x32xf32, #tpu.memory_space<vmem>>, vector<1x1x32xf32>
    %196 = vector.shape_cast %195 : vector<1x1x32xf32> to vector<1x32xf32>
    %c1_76 = arith.constant 1 : index
    %c0_77 = arith.constant 0 : index
    %c0_78 = arith.constant 0 : index
    %197 = vector.load %arg7[%c1_76, %c0_77, %c0_78] : memref<2x1x32xf32, #tpu.memory_space<vmem>>, vector<1x1x32xf32>
    %198 = vector.shape_cast %197 : vector<1x1x32xf32> to vector<1x32xf32>
    %cst_79 = arith.constant dense<0.000000e+00> : vector<8xf32>
    %199 = vector.multi_reduction <add>, %194, %cst_79 [1] : vector<8x32xf32> to vector<8xf32>
    %200 = vector.shape_cast %199 : vector<8xf32> to vector<8x1xf32>
    %cst_80 = arith.constant 3.200000e+01 : f32
    %201 = vector.broadcast %cst_80 : f32 to vector<8x1xf32>
    %202 = arith.divf %200, %201 : vector<8x1xf32>
    %203 = vector.broadcast %202 : vector<8x1xf32> to vector<8x32xf32>
    %204 = arith.subf %194, %203 : vector<8x32xf32>
    %205 = arith.mulf %204, %204 : vector<8x32xf32>
    %cst_81 = arith.constant dense<0.000000e+00> : vector<8xf32>
    %206 = vector.multi_reduction <add>, %205, %cst_81 [1] : vector<8x32xf32> to vector<8xf32>
    %207 = vector.shape_cast %206 : vector<8xf32> to vector<8x1xf32>
    %cst_82 = arith.constant 3.200000e+01 : f32
    %208 = vector.broadcast %cst_82 : f32 to vector<8x1xf32>
    %209 = arith.divf %207, %208 : vector<8x1xf32>
    %210 = vector.broadcast %202 : vector<8x1xf32> to vector<8x32xf32>
    %211 = arith.subf %194, %210 : vector<8x32xf32>
    %cst_83 = arith.constant 9.99999974E-6 : f32
    %212 = vector.broadcast %cst_83 : f32 to vector<8x1xf32>
    %213 = arith.addf %209, %212 : vector<8x1xf32>
    %214 = math.rsqrt %213 : vector<8x1xf32>
    %215 = vector.broadcast %214 : vector<8x1xf32> to vector<8x32xf32>
    %216 = arith.mulf %211, %215 : vector<8x32xf32>
    %217 = vector.broadcast %196 : vector<1x32xf32> to vector<8x32xf32>
    %218 = arith.mulf %216, %217 : vector<8x32xf32>
    %219 = vector.broadcast %198 : vector<1x32xf32> to vector<8x32xf32>
    %220 = arith.addf %218, %219 : vector<8x32xf32>
    %c1_84 = arith.constant 1 : index
    %c0_85 = arith.constant 0 : index
    %c0_86 = arith.constant 0 : index
    %221 = vector.load %arg8[%c1_84, %c0_85, %c0_86] : memref<2x32x64xf32, #tpu.memory_space<vmem>>, vector<1x32x64xf32>
    %222 = vector.shape_cast %221 : vector<1x32x64xf32> to vector<32x64xf32>
    %cst_87 = arith.constant dense<0.000000e+00> : vector<8x64xf32>
    %223 = tpu.matmul %220, %222, %cst_87 {dimension_numbers = #tpu.dot_dimension_numbers<[1], [0], [0], [1], [0, 0, 1, 1], [], []>} : vector<8x32xf32>, vector<32x64xf32>, vector<8x64xf32> -> vector<8x64xf32>
    %c1_88 = arith.constant 1 : index
    %c0_89 = arith.constant 0 : index
    %c0_90 = arith.constant 0 : index
    %224 = vector.load %arg9[%c1_88, %c0_89, %c0_90] : memref<2x1x64xf32, #tpu.memory_space<vmem>>, vector<1x1x64xf32>
    %225 = vector.shape_cast %224 : vector<1x1x64xf32> to vector<1x64xf32>
    %226 = vector.broadcast %225 : vector<1x64xf32> to vector<8x64xf32>
    %227 = arith.addf %223, %226 : vector<8x64xf32>
    %cst_91 = arith.constant 0.000000e+00 : f32
    %228 = vector.broadcast %cst_91 : f32 to vector<8x64xf32>
    %229 = arith.maximumf %227, %228 : vector<8x64xf32>
    %c1_92 = arith.constant 1 : index
    %c0_93 = arith.constant 0 : index
    %c0_94 = arith.constant 0 : index
    %230 = vector.load %arg10[%c1_92, %c0_93, %c0_94] : memref<2x64x32xf32, #tpu.memory_space<vmem>>, vector<1x64x32xf32>
    %231 = vector.shape_cast %230 : vector<1x64x32xf32> to vector<64x32xf32>
    %cst_95 = arith.constant dense<0.000000e+00> : vector<8x32xf32>
    %232 = tpu.matmul %229, %231, %cst_95 {dimension_numbers = #tpu.dot_dimension_numbers<[1], [0], [0], [1], [0, 0, 1, 1], [], []>} : vector<8x64xf32>, vector<64x32xf32>, vector<8x32xf32> -> vector<8x32xf32>
    %c1_96 = arith.constant 1 : index
    %c0_97 = arith.constant 0 : index
    %c0_98 = arith.constant 0 : index
    %233 = vector.load %arg11[%c1_96, %c0_97, %c0_98] : memref<2x1x32xf32, #tpu.memory_space<vmem>>, vector<1x1x32xf32>
    %234 = vector.shape_cast %233 : vector<1x1x32xf32> to vector<1x32xf32>
    %235 = vector.broadcast %234 : vector<1x32xf32> to vector<8x32xf32>
    %236 = arith.addf %232, %235 : vector<8x32xf32>
    %237 = arith.addf %220, %236 : vector<8x32xf32>
    %c1_99 = arith.constant 1 : index
    %c0_100 = arith.constant 0 : index
    %c0_101 = arith.constant 0 : index
    %238 = vector.load %arg12[%c1_99, %c0_100, %c0_101] : memref<2x1x32xf32, #tpu.memory_space<vmem>>, vector<1x1x32xf32>
    %239 = vector.shape_cast %238 : vector<1x1x32xf32> to vector<1x32xf32>
    %c1_102 = arith.constant 1 : index
    %c0_103 = arith.constant 0 : index
    %c0_104 = arith.constant 0 : index
    %240 = vector.load %arg13[%c1_102, %c0_103, %c0_104] : memref<2x1x32xf32, #tpu.memory_space<vmem>>, vector<1x1x32xf32>
    %241 = vector.shape_cast %240 : vector<1x1x32xf32> to vector<1x32xf32>
    %cst_105 = arith.constant dense<0.000000e+00> : vector<8xf32>
    %242 = vector.multi_reduction <add>, %237, %cst_105 [1] : vector<8x32xf32> to vector<8xf32>
    %243 = vector.shape_cast %242 : vector<8xf32> to vector<8x1xf32>
    %cst_106 = arith.constant 3.200000e+01 : f32
    %244 = vector.broadcast %cst_106 : f32 to vector<8x1xf32>
    %245 = arith.divf %243, %244 : vector<8x1xf32>
    %246 = vector.broadcast %245 : vector<8x1xf32> to vector<8x32xf32>
    %247 = arith.subf %237, %246 : vector<8x32xf32>
    %248 = arith.mulf %247, %247 : vector<8x32xf32>
    %cst_107 = arith.constant dense<0.000000e+00> : vector<8xf32>
    %249 = vector.multi_reduction <add>, %248, %cst_107 [1] : vector<8x32xf32> to vector<8xf32>
    %250 = vector.shape_cast %249 : vector<8xf32> to vector<8x1xf32>
    %cst_108 = arith.constant 3.200000e+01 : f32
    %251 = vector.broadcast %cst_108 : f32 to vector<8x1xf32>
    %252 = arith.divf %250, %251 : vector<8x1xf32>
    %253 = vector.broadcast %245 : vector<8x1xf32> to vector<8x32xf32>
    %254 = arith.subf %237, %253 : vector<8x32xf32>
    %cst_109 = arith.constant 9.99999974E-6 : f32
    %255 = vector.broadcast %cst_109 : f32 to vector<8x1xf32>
    %256 = arith.addf %252, %255 : vector<8x1xf32>
    %257 = math.rsqrt %256 : vector<8x1xf32>
    %258 = vector.broadcast %257 : vector<8x1xf32> to vector<8x32xf32>
    %259 = arith.mulf %254, %258 : vector<8x32xf32>
    %260 = vector.broadcast %239 : vector<1x32xf32> to vector<8x32xf32>
    %261 = arith.mulf %259, %260 : vector<8x32xf32>
    %262 = vector.broadcast %241 : vector<1x32xf32> to vector<8x32xf32>
    %263 = arith.addf %261, %262 : vector<8x32xf32>
    %c0_110 = arith.constant 0 : index
    %c0_111 = arith.constant 0 : index
    %264 = vector.load %arg14[%c0_110, %c0_111] : memref<1x32xf32, #tpu.memory_space<vmem>>, vector<1x32xf32>
    %265 = vector.broadcast %264 : vector<1x32xf32> to vector<8x32xf32>
    %266 = arith.mulf %263, %265 : vector<8x32xf32>
    %cst_112 = arith.constant dense<0.000000e+00> : vector<8xf32>
    %267 = vector.multi_reduction <add>, %266, %cst_112 [1] : vector<8x32xf32> to vector<8xf32>
    %268 = vector.shape_cast %267 : vector<8xf32> to vector<8x1xf32>
    %c0_113 = arith.constant 0 : index
    %c0_114 = arith.constant 0 : index
    %269 = vector.load %arg15[%c0_113, %c0_114] : memref<1x1xf32, #tpu.memory_space<vmem>>, vector<1x1xf32>
    %270 = vector.broadcast %269 : vector<1x1xf32> to vector<8x1xf32>
    %271 = arith.addf %268, %270 : vector<8x1xf32>
    %c0_115 = arith.constant 0 : index
    %c0_116 = arith.constant 0 : index
    %c0_117 = arith.constant 0 : index
    %272 = vector.load %arg16[%c0_115, %c0_116, %c0_117] : memref<1x8x1xf32, #tpu.memory_space<vmem>>, vector<1x8x1xf32>
    %273 = vector.shape_cast %272 : vector<1x8x1xf32> to vector<8x1xf32>
    %274 = vector.shape_cast %271 : vector<8x1xf32> to vector<1x8x1xf32>
    tpu.vector_store %arg16[%c0_115, %c0_116, %c0_117], %274 {strides = array<i32>} : memref<1x8x1xf32, #tpu.memory_space<vmem>>, vector<1x8x1xf32>,
    return
  }
  func.func @transform_0(%arg0: i32) -> (i32, i32, i32) {
    %c0_i32 = arith.constant 0 : i32
    %c0_i32_0 = arith.constant 0 : i32
    %c0_i32_1 = arith.constant 0 : i32
    return %arg0, %c0_i32, %c0_i32_0 : i32, i32, i32
  }
  func.func @transform_1(%arg0: i32) -> (i32, i32, i32) {
    %c0_i32 = arith.constant 0 : i32
    %c0_i32_0 = arith.constant 0 : i32
    %c0_i32_1 = arith.constant 0 : i32
    %c0_i32_2 = arith.constant 0 : i32
    return %c0_i32, %c0_i32_0, %c0_i32_1 : i32, i32, i32
  }
  func.func @transform_2(%arg0: i32) -> (i32, i32, i32) {
    %c0_i32 = arith.constant 0 : i32
    %c0_i32_0 = arith.constant 0 : i32
    %c0_i32_1 = arith.constant 0 : i32
    %c0_i32_2 = arith.constant 0 : i32
    return %c0_i32, %c0_i32_0, %c0_i32_1 : i32, i32, i32
  }
  func.func @transform_3(%arg0: i32) -> (i32, i32, i32) {
    %c0_i32 = arith.constant 0 : i32
    %c0_i32_0 = arith.constant 0 : i32
    %c0_i32_1 = arith.constant 0 : i32
    %c0_i32_2 = arith.constant 0 : i32
    return %c0_i32, %c0_i32_0, %c0_i32_1 : i32, i32, i32
  }
  func.func @transform_4(%arg0: i32) -> (i32, i32, i32) {
    %c0_i32 = arith.constant 0 : i32
    %c0_i32_0 = arith.constant 0 : i32
    %c0_i32_1 = arith.constant 0 : i32
    %c0_i32_2 = arith.constant 0 : i32
    return %c0_i32, %c0_i32_0, %c0_i32_1 : i32, i32, i32
  }
  func.func @transform_5(%arg0: i32) -> (i32, i32, i32) {
    %c0_i32 = arith.constant 0 : i32
    %c0_i32_0 = arith.constant 0 : i32
    %c0_i32_1 = arith.constant 0 : i32
    %c0_i32_2 = arith.constant 0 : i32
    return %c0_i32, %c0_i32_0, %c0_i32_1 : i32, i32, i32
  }
  func.func @transform_6(%arg0: i32) -> (i32, i32, i32) {
    %c0_i32 = arith.constant 0 : i32
    %c0_i32_0 = arith.constant 0 : i32
    %c0_i32_1 = arith.constant 0 : i32
    %c0_i32_2 = arith.constant 0 : i32
    return %c0_i32, %c0_i32_0, %c0_i32_1 : i32, i32, i32
  }
  func.func @transform_7(%arg0: i32) -> (i32, i32, i32) {
    %c0_i32 = arith.constant 0 : i32
    %c0_i32_0 = arith.constant 0 : i32
    %c0_i32_1 = arith.constant 0 : i32
    %c0_i32_2 = arith.constant 0 : i32
    return %c0_i32, %c0_i32_0, %c0_i32_1 : i32, i32, i32
  }
  func.func @transform_8(%arg0: i32) -> (i32, i32, i32) {
    %c0_i32 = arith.constant 0 : i32
    %c0_i32_0 = arith.constant 0 : i32
    %c0_i32_1 = arith.constant 0 : i32
    %c0_i32_2 = arith.constant 0 : i32
    return %c0_i32, %c0_i32_0, %c0_i32_1 : i32, i32, i32
  }
  func.func @transform_9(%arg0: i32) -> (i32, i32, i32) {
    %c0_i32 = arith.constant 0 : i32
    %c0_i32_0 = arith.constant 0 : i32
    %c0_i32_1 = arith.constant 0 : i32
    %c0_i32_2 = arith.constant 0 : i32
    return %c0_i32, %c0_i32_0, %c0_i32_1 : i32, i32, i32
  }
  func.func @transform_10(%arg0: i32) -> (i32, i32, i32) {
    %c0_i32 = arith.constant 0 : i32
    %c0_i32_0 = arith.constant 0 : i32
    %c0_i32_1 = arith.constant 0 : i32
    %c0_i32_2 = arith.constant 0 : i32
    return %c0_i32, %c0_i32_0, %c0_i32_1 : i32, i32, i32
  }
  func.func @transform_11(%arg0: i32) -> (i32, i32, i32) {
    %c0_i32 = arith.constant 0 : i32
    %c0_i32_0 = arith.constant 0 : i32
    %c0_i32_1 = arith.constant 0 : i32
    %c0_i32_2 = arith.constant 0 : i32
    return %c0_i32, %c0_i32_0, %c0_i32_1 : i32, i32, i32
  }
  func.func @transform_12(%arg0: i32) -> (i32, i32, i32) {
    %c0_i32 = arith.constant 0 : i32
    %c0_i32_0 = arith.constant 0 : i32
    %c0_i32_1 = arith.constant 0 : i32
    %c0_i32_2 = arith.constant 0 : i32
    return %c0_i32, %c0_i32_0, %c0_i32_1 : i32, i32, i32
  }
  func.func @transform_13(%arg0: i32) -> (i32, i32) {
    %c0_i32 = arith.constant 0 : i32
    %c0_i32_0 = arith.constant 0 : i32
    %c0_i32_1 = arith.constant 0 : i32
    return %c0_i32, %c0_i32_0 : i32, i32
  }
  func.func @transform_14(%arg0: i32) -> (i32, i32) {
    %c0_i32 = arith.constant 0 : i32
    %c0_i32_0 = arith.constant 0 : i32
    %c0_i32_1 = arith.constant 0 : i32
    return %c0_i32, %c0_i32_0 : i32, i32
  }
  func.func @transform_15(%arg0: i32) -> (i32, i32, i32) {
    %c0_i32 = arith.constant 0 : i32
    %c0_i32_0 = arith.constant 0 : i32
    %c0_i32_1 = arith.constant 0 : i32
    return %arg0, %c0_i32, %c0_i32_0 : i32, i32, i32
  }
}

</mosaic_0001>

<llo_original>
// kernel: tpu_custom_call.1
$region0: #{tpu_custom_call.1}
  #allocation0 [shape = 'u32[]', space=smem, size = 0x4, offset = 0x4, fixed_abs, tag = 'smem constant byte address 0x4 - core index']
  #allocation1 [shape = 'u32[144,128]{1,0:T(1,128)}', space=vmem, size = 0x12000, scoped, tag = 'internal scratch']
  #allocation2 [shape = 'f32[1,1]{1,0:T(1,128)S(1)}', space=vmem, size = 0x200, scoped, tag = 'scoped memory for tpu_custom_call.1']
  %s0 = inlined_call_operand.hbm [shape: f32[2,8,32], index: 0, kind: input, shape index: {}]
  %s1 = inlined_call_operand.vmem [shape: f32[2,32,96], index: 1, kind: input, shape index: {}]
  %s2 = inlined_call_operand.vmem [shape: f32[2,1,96], index: 2, kind: input, shape index: {}]
  %s3 = inlined_call_operand.vmem [shape: f32[2,32,32], index: 3, kind: input, shape index: {}]
  %s4 = inlined_call_operand.vmem [shape: f32[2,1,32], index: 4, kind: input, shape index: {}]
  %s5 = inlined_call_operand.vmem [shape: f32[2,1,32], index: 5, kind: input, shape index: {}]
  %s6 = inlined_call_operand.vmem [shape: f32[2,1,32], index: 6, kind: input, shape index: {}]
  %s7 = inlined_call_operand.vmem [shape: f32[2,32,64], index: 7, kind: input, shape index: {}]
  %s8 = inlined_call_operand.vmem [shape: f32[2,1,64], index: 8, kind: input, shape index: {}]
  %s9 = inlined_call_operand.vmem [shape: f32[2,64,32], index: 9, kind: input, shape index: {}]
  %s10 = inlined_call_operand.vmem [shape: f32[2,1,32], index: 10, kind: input, shape index: {}]
  %s11 = inlined_call_operand.vmem [shape: f32[2,1,32], index: 11, kind: input, shape index: {}]
  %s12 = inlined_call_operand.vmem [shape: f32[2,1,32], index: 12, kind: input, shape index: {}]
  %s13 = inlined_call_operand.vmem [shape: f32[1,32], index: 13, kind: input, shape index: {}]
  %s14 = inlined_call_operand.<no memory space> [shape: f32[1,1], index: 14, kind: input, shape index: {}]
  %s15 = inlined_call_operand.vmem [shape: f32[2,8,1], index: 15, kind: output, shape index: {}]
  %s16 = sld [smem:[#allocation0]]
  $region97: #{tpu_custom_call.1} parent=0
    _
  %s18 = ssub.s32 1, %s16
  %s19 = scalar_select 0, %s18, %s16
  %v20 = vstv %s14
  %21 = vst [vmem:[#allocation2] sm:$0x1] %v20
  $region1: #{tpu_custom_call.1} parent=0
    #allocation3 [shape = 'u8[8192]{0}', space=vmem, size = 0x2000, scoped, tag = 'input window, operand 0']
    #allocation4 [shape = 's32[2]{0}', space=sflag, size = 0x8, scoped, tag = 'scoped memory for tpu_custom_call.1']
    %22 = vsyncpa [#allocation4], 0
    %s23 = scalar_lea.sflag [#allocation4], 1
    %24 = vsyncpa %s23, 0
    loop: start=0, step=1, limit=4
    $region2: #{tpu_custom_call.1} parent=1 // loop_pre_header
      _
    $region3: #{tpu_custom_call.1} parent=1 // loop_header
      %s26 = sphi 0, %s30
      %p27 = scmp.ge.s32.totalorder %s26, 4
      %s36 = sphi 0, %s38
      %s39 = sphi 0, %s36
      %s40 = sphi 0, %s39
      %s56 = sphi 0, %s40
      %s60 = sphi 0, %s60
      %s62 = sphi 0, %s60
      %s63 = sphi 0, %s62
      %s77 = sphi 0, %s63
      %s81 = sphi 0, %s81
      %s83 = sphi 0, %s81
      %s84 = sphi 0, %s83
      %s98 = sphi 0, %s84
      %s102 = sphi 0, %s102
      %s104 = sphi 0, %s102
      %s105 = sphi 0, %s104
      %s119 = sphi 0, %s105
      %s123 = sphi 0, %s123
      %s125 = sphi 0, %s123
      %s126 = sphi 0, %s125
      %s140 = sphi 0, %s126
      %s144 = sphi 0, %s144
      %s146 = sphi 0, %s144
      %s147 = sphi 0, %s146
      %s161 = sphi 0, %s147
      %s165 = sphi 0, %s165
      %s167 = sphi 0, %s165
      %s168 = sphi 0, %s167
      %s182 = sphi 0, %s168
      %s186 = sphi 0, %s186
      %s188 = sphi 0, %s186
      %s189 = sphi 0, %s188
      %s203 = sphi 0, %s189
      %s207 = sphi 0, %s207
      %s209 = sphi 0, %s207
      %s210 = sphi 0, %s209
      %s224 = sphi 0, %s210
      %s228 = sphi 0, %s228
      %s230 = sphi 0, %s228
      %s231 = sphi 0, %s230
      %s245 = sphi 0, %s231
      %s249 = sphi 0, %s249
      %s251 = sphi 0, %s249
      %s252 = sphi 0, %s251
      %s266 = sphi 0, %s252
      %s270 = sphi 0, %s270
      %s272 = sphi 0, %s270
      %s273 = sphi 0, %s272
      %s287 = sphi 0, %s273
      %s291 = sphi 0, %s291
      %s293 = sphi 0, %s291
      %s294 = sphi 0, %s293
      %s308 = sphi 0, %s294
      %s312 = sphi 0, %s312
      %s314 = sphi 0, %s312
      %s315 = sphi 0, %s314
      %s329 = sphi 0, %s315
      %s333 = sphi 0, %s333
      %s335 = sphi 0, %s333
      %s336 = sphi 0, %s335
      %s350 = sphi 0, %s336
      %s356 = sphi 0, %s358
      %s359 = sphi 0, %s356
      %s360 = sphi 0, %s359
      %s376 = sphi 0, %s360
    $region4: #{tpu_custom_call.1} parent=1 // loop_header_branch
      %29 = sbr.rel (%p27) target = $region8
    $region5: #{tpu_custom_call.1} parent=1 // loop_body
      %s31 = ssub.s32 %s26, 1
      %s32 = ssub.s32 %s26, 2
      %s33 = sadd.s32 %s26, 1
      %s34 = ssub.s32 %s26, %s33
      %p35 = scmp.eq.s32.totalorder %s34, 0
      %s37 = sadd.s32 %s36, 1
      %s38 = scalar_select %p35, %s36, %s37
      %p41 = pneg %p35
      %p42 = scmp.eq.s32.totalorder %s26, 1
      %p43 = por %p41, %p42
      %p44 = scmp.ne.s32.totalorder %s36, %s39
      %p45 = scmp.eq.s32.totalorder %s26, 0
      %p46 = por %p44, %p45
      %p47 = scmp.ne.s32.totalorder %s36, %s39
      %p48 = scmp.eq.s32.totalorder %s31, 1
      %p49 = por %p47, %p48
      %p50 = scmp.ne.s32.totalorder %s39, %s40
      %p51 = scmp.eq.s32.totalorder %s31, 0
      %p52 = por %p50, %p51
      %p53 = scmp.ne.s32.totalorder %s39, %s40
      %p54 = scmp.eq.s32.totalorder %s32, 1
      %p55 = por %p53, %p54
      %p57 = scmp.ne.s32.totalorder %s40, %s56
      %p58 = scmp.eq.s32.totalorder %s32, 0
      %p59 = por %p57, %p58
      %s61 = sadd.s32 %s60, 1
      %p64 = scmp.eq.s32.totalorder %s26, 1
      %p65 = scmp.ne.s32.totalorder %s60, %s62
      %p66 = scmp.eq.s32.totalorder %s26, 0
      %p67 = por %p65, %p66
      %p68 = scmp.ne.s32.totalorder %s60, %s62
      %p69 = scmp.eq.s32.totalorder %s31, 1
      %p70 = por %p68, %p69
      %p71 = scmp.ne.s32.totalorder %s62, %s63
      %p72 = scmp.eq.s32.totalorder %s31, 0
      %p73 = por %p71, %p72
      %p74 = scmp.ne.s32.totalorder %s62, %s63
      %p75 = scmp.eq.s32.totalorder %s32, 1
      %p76 = por %p74, %p75
      %p78 = scmp.ne.s32.totalorder %s63, %s77
      %p79 = scmp.eq.s32.totalorder %s32, 0
      %p80 = por %p78, %p79
      %s82 = sadd.s32 %s81, 1
      %p85 = scmp.eq.s32.totalorder %s26, 1
      %p86 = scmp.ne.s32.totalorder %s81, %s83
      %p87 = scmp.eq.s32.totalorder %s26, 0
      %p88 = por %p86, %p87
      %p89 = scmp.ne.s32.totalorder %s81, %s83
      %p90 = scmp.eq.s32.totalorder %s31, 1
      %p91 = por %p89, %p90
      %p92 = scmp.ne.s32.totalorder %s83, %s84
      %p93 = scmp.eq.s32.totalorder %s31, 0
      %p94 = por %p92, %p93
      %p95 = scmp.ne.s32.totalorder %s83, %s84
      %p96 = scmp.eq.s32.totalorder %s32, 1
      %p97 = por %p95, %p96
      %p99 = scmp.ne.s32.totalorder %s84, %s98
      %p100 = scmp.eq.s32.totalorder %s32, 0
      %p101 = por %p99, %p100
      %s103 = sadd.s32 %s102, 1
      %p106 = scmp.eq.s32.totalorder %s26, 1
      %p107 = scmp.ne.s32.totalorder %s102, %s104
      %p108 = scmp.eq.s32.totalorder %s26, 0
      %p109 = por %p107, %p108
      %p110 = scmp.ne.s32.totalorder %s102, %s104
      %p111 = scmp.eq.s32.totalorder %s31, 1
      %p112 = por %p110, %p111
      %p113 = scmp.ne.s32.totalorder %s104, %s105
      %p114 = scmp.eq.s32.totalorder %s31, 0
      %p115 = por %p113, %p114
      %p116 = scmp.ne.s32.totalorder %s104, %s105
      %p117 = scmp.eq.s32.totalorder %s32, 1
      %p118 = por %p116, %p117
      %p120 = scmp.ne.s32.totalorder %s105, %s119
      %p121 = scmp.eq.s32.totalorder %s32, 0
      %p122 = por %p120, %p121
      %s124 = sadd.s32 %s123, 1
      %p127 = scmp.eq.s32.totalorder %s26, 1
      %p128 = scmp.ne.s32.totalorder %s123, %s125
      %p129 = scmp.eq.s32.totalorder %s26, 0
      %p130 = por %p128, %p129
      %p131 = scmp.ne.s32.totalorder %s123, %s125
      %p132 = scmp.eq.s32.totalorder %s31, 1
      %p133 = por %p131, %p132
      %p134 = scmp.ne.s32.totalorder %s125, %s126
      %p135 = scmp.eq.s32.totalorder %s31, 0
      %p136 = por %p134, %p135
      %p137 = scmp.ne.s32.totalorder %s125, %s126
      %p138 = scmp.eq.s32.totalorder %s32, 1
      %p139 = por %p137, %p138
      %p141 = scmp.ne.s32.totalorder %s126, %s140
      %p142 = scmp.eq.s32.totalorder %s32, 0
      %p143 = por %p141, %p142
      %s145 = sadd.s32 %s144, 1
      %p148 = scmp.eq.s32.totalorder %s26, 1
      %p149 = scmp.ne.s32.totalorder %s144, %s146
      %p150 = scmp.eq.s32.totalorder %s26, 0
      %p151 = por %p149, %p150
      %p152 = scmp.ne.s32.totalorder %s144, %s146
      %p153 = scmp.eq.s32.totalorder %s31, 1
      %p154 = por %p152, %p153
      %p155 = scmp.ne.s32.totalorder %s146, %s147
      %p156 = scmp.eq.s32.totalorder %s31, 0
      %p157 = por %p155, %p156
      %p158 = scmp.ne.s32.totalorder %s146, %s147
      %p159 = scmp.eq.s32.totalorder %s32, 1
      %p160 = por %p158, %p159
      %p162 = scmp.ne.s32.totalorder %s147, %s161
      %p163 = scmp.eq.s32.totalorder %s32, 0
      %p164 = por %p162, %p163
      %s166 = sadd.s32 %s165, 1
      %p169 = scmp.eq.s32.totalorder %s26, 1
      %p170 = scmp.ne.s32.totalorder %s165, %s167
      %p171 = scmp.eq.s32.totalorder %s26, 0
      %p172 = por %p170, %p171
      %p173 = scmp.ne.s32.totalorder %s165, %s167
      %p174 = scmp.eq.s32.totalorder %s31, 1
      %p175 = por %p173, %p174
      %p176 = scmp.ne.s32.totalorder %s167, %s168
      %p177 = scmp.eq.s32.totalorder %s31, 0
      %p178 = por %p176, %p177
      %p179 = scmp.ne.s32.totalorder %s167, %s168
      %p180 = scmp.eq.s32.totalorder %s32, 1
      %p181 = por %p179, %p180
      %p183 = scmp.ne.s32.totalorder %s168, %s182
      %p184 = scmp.eq.s32.totalorder %s32, 0
      %p185 = por %p183, %p184
      %s187 = sadd.s32 %s186, 1
      %p190 = scmp.eq.s32.totalorder %s26, 1
      %p191 = scmp.ne.s32.totalorder %s186, %s188
      %p192 = scmp.eq.s32.totalorder %s26, 0
      %p193 = por %p191, %p192
      %p194 = scmp.ne.s32.totalorder %s186, %s188
      %p195 = scmp.eq.s32.totalorder %s31, 1
      %p196 = por %p194, %p195
      %p197 = scmp.ne.s32.totalorder %s188, %s189
      %p198 = scmp.eq.s32.totalorder %s31, 0
      %p199 = por %p197, %p198
      %p200 = scmp.ne.s32.totalorder %s188, %s189
      %p201 = scmp.eq.s32.totalorder %s32, 1
      %p202 = por %p200, %p201
      %p204 = scmp.ne.s32.totalorder %s189, %s203
      %p205 = scmp.eq.s32.totalorder %s32, 0
      %p206 = por %p204, %p205
      %s208 = sadd.s32 %s207, 1
      %p211 = scmp.eq.s32.totalorder %s26, 1
      %p212 = scmp.ne.s32.totalorder %s207, %s209
      %p213 = scmp.eq.s32.totalorder %s26, 0
      %p214 = por %p212, %p213
      %p215 = scmp.ne.s32.totalorder %s207, %s209
      %p216 = scmp.eq.s32.totalorder %s31, 1
      %p217 = por %p215, %p216
      %p218 = scmp.ne.s32.totalorder %s209, %s210
      %p219 = scmp.eq.s32.totalorder %s31, 0
      %p220 = por %p218, %p219
      %p221 = scmp.ne.s32.totalorder %s209, %s210
      %p222 = scmp.eq.s32.totalorder %s32, 1
      %p223 = por %p221, %p222
      %p225 = scmp.ne.s32.totalorder %s210, %s224
      %p226 = scmp.eq.s32.totalorder %s32, 0
      %p227 = por %p225, %p226
      %s229 = sadd.s32 %s228, 1
      %p232 = scmp.eq.s32.totalorder %s26, 1
      %p233 = scmp.ne.s32.totalorder %s228, %s230
      %p234 = scmp.eq.s32.totalorder %s26, 0
      %p235 = por %p233, %p234
      %p236 = scmp.ne.s32.totalorder %s228, %s230
      %p237 = scmp.eq.s32.totalorder %s31, 1
      %p238 = por %p236, %p237
      %p239 = scmp.ne.s32.totalorder %s230, %s231
      %p240 = scmp.eq.s32.totalorder %s31, 0
      %p241 = por %p239, %p240
      %p242 = scmp.ne.s32.totalorder %s230, %s231
      %p243 = scmp.eq.s32.totalorder %s32, 1
      %p244 = por %p242, %p243
      %p246 = scmp.ne.s32.totalorder %s231, %s245
      %p247 = scmp.eq.s32.totalorder %s32, 0
      %p248 = por %p246, %p247
      %s250 = sadd.s32 %s249, 1
      %p253 = scmp.eq.s32.totalorder %s26, 1
      %p254 = scmp.ne.s32.totalorder %s249, %s251
      %p255 = scmp.eq.s32.totalorder %s26, 0
      %p256 = por %p254, %p255
      %p257 = scmp.ne.s32.totalorder %s249, %s251
      %p258 = scmp.eq.s32.totalorder %s31, 1
      %p259 = por %p257, %p258
      %p260 = scmp.ne.s32.totalorder %s251, %s252
      %p261 = scmp.eq.s32.totalorder %s31, 0
      %p262 = por %p260, %p261
      %p263 = scmp.ne.s32.totalorder %s251, %s252
      %p264 = scmp.eq.s32.totalorder %s32, 1
      %p265 = por %p263, %p264
      %p267 = scmp.ne.s32.totalorder %s252, %s266
      %p268 = scmp.eq.s32.totalorder %s32, 0
      %p269 = por %p267, %p268
      %s271 = sadd.s32 %s270, 1
      %p274 = scmp.eq.s32.totalorder %s26, 1
      %p275 = scmp.ne.s32.totalorder %s270, %s272
      %p276 = scmp.eq.s32.totalorder %s26, 0
      %p277 = por %p275, %p276
      %p278 = scmp.ne.s32.totalorder %s270, %s272
      %p279 = scmp.eq.s32.totalorder %s31, 1
      %p280 = por %p278, %p279
      %p281 = scmp.ne.s32.totalorder %s272, %s273
      %p282 = scmp.eq.s32.totalorder %s31, 0
      %p283 = por %p281, %p282
      %p284 = scmp.ne.s32.totalorder %s272, %s273
      %p285 = scmp.eq.s32.totalorder %s32, 1
      %p286 = por %p284, %p285
      %p288 = scmp.ne.s32.totalorder %s273, %s287
      %p289 = scmp.eq.s32.totalorder %s32, 0
      %p290 = por %p288, %p289
      %s292 = sadd.s32 %s291, 1
      %p295 = scmp.eq.s32.totalorder %s26, 1
      %p296 = scmp.ne.s32.totalorder %s291, %s293
      %p297 = scmp.eq.s32.totalorder %s26, 0
      %p298 = por %p296, %p297
      %p299 = scmp.ne.s32.totalorder %s291, %s293
      %p300 = scmp.eq.s32.totalorder %s31, 1
      %p301 = por %p299, %p300
      %p302 = scmp.ne.s32.totalorder %s293, %s294
      %p303 = scmp.eq.s32.totalorder %s31, 0
      %p304 = por %p302, %p303
      %p305 = scmp.ne.s32.totalorder %s293, %s294
      %p306 = scmp.eq.s32.totalorder %s32, 1
      %p307 = por %p305, %p306
      %p309 = scmp.ne.s32.totalorder %s294, %s308
      %p310 = scmp.eq.s32.totalorder %s32, 0
      %p311 = por %p309, %p310
      %s313 = sadd.s32 %s312, 1
      %p316 = scmp.eq.s32.totalorder %s26, 1
      %p317 = scmp.ne.s32.totalorder %s312, %s314
      %p318 = scmp.eq.s32.totalorder %s26, 0
      %p319 = por %p317, %p318
      %p320 = scmp.ne.s32.totalorder %s312, %s314
      %p321 = scmp.eq.s32.totalorder %s31, 1
      %p322 = por %p320, %p321
      %p323 = scmp.ne.s32.totalorder %s314, %s315
      %p324 = scmp.eq.s32.totalorder %s31, 0
      %p325 = por %p323, %p324
      %p326 = scmp.ne.s32.totalorder %s314, %s315
      %p327 = scmp.eq.s32.totalorder %s32, 1
      %p328 = por %p326, %p327
      %p330 = scmp.ne.s32.totalorder %s315, %s329
      %p331 = scmp.eq.s32.totalorder %s32, 0
      %p332 = por %p330, %p331
      %s334 = sadd.s32 %s333, 1
      %p337 = scmp.eq.s32.totalorder %s26, 1
      %p338 = scmp.ne.s32.totalorder %s333, %s335
      %p339 = scmp.eq.s32.totalorder %s26, 0
      %p340 = por %p338, %p339
      %p341 = scmp.ne.s32.totalorder %s333, %s335
      %p342 = scmp.eq.s32.totalorder %s31, 1
      %p343 = por %p341, %p342
      %p344 = scmp.ne.s32.totalorder %s335, %s336
      %p345 = scmp.eq.s32.totalorder %s31, 0
      %p346 = por %p344, %p345
      %p347 = scmp.ne.s32.totalorder %s335, %s336
      %p348 = scmp.eq.s32.totalorder %s32, 1
      %p349 = por %p347, %p348
      %p351 = scmp.ne.s32.totalorder %s336, %s350
      %p352 = scmp.eq.s32.totalorder %s32, 0
      %p353 = por %p351, %p352
      %s354 = ssub.s32 %s26, %s33
      %p355 = scmp.eq.s32.totalorder %s354, 0
      %s357 = sadd.s32 %s356, 1
      %s358 = scalar_select %p355, %s356, %s357
      %p361 = pneg %p355
      %p362 = scmp.eq.s32.totalorder %s26, 1
      %p363 = por %p361, %p362
      %p364 = scmp.ne.s32.totalorder %s356, %s359
      %p365 = scmp.eq.s32.totalorder %s26, 0
      %p366 = por %p364, %p365
      %p367 = scmp.ne.s32.totalorder %s356, %s359
      %p368 = scmp.eq.s32.totalorder %s31, 1
      %p369 = por %p367, %p368
      %p370 = scmp.ne.s32.totalorder %s359, %s360
      %p371 = scmp.eq.s32.totalorder %s31, 0
      %p372 = por %p370, %p371
      %p373 = scmp.ne.s32.totalorder %s359, %s360
      %p374 = scmp.eq.s32.totalorder %s32, 1
      %p375 = por %p373, %p374
      %p377 = scmp.ne.s32.totalorder %s360, %s376
      %p378 = scmp.eq.s32.totalorder %s32, 0
      %p379 = por %p377, %p378
      %p380 = scmp.le.s32.totalorder 1, %s26
      %p381 = scmp.lt.s32.totalorder %s26, 3
      %p382 = pnand %p380, %p381
      %p383 = pneg %p382
      // Predicated region
      $region9: #{tpu_custom_call.1} parent=5 // pred_check
        _
      $region10: #{tpu_custom_call.1} parent=5 // pred_check_branch
        %385 = sbr.rel (%p382) target = $region12
      $region11: #{tpu_custom_call.1} parent=5 // pred_region
        %s386 = ssub.s32 %s26, 1
        // Predicated region
        $region13: #{tpu_custom_call.1} parent=11 // pred_check
          %p387 = pneg %p73
        $region14: #{tpu_custom_call.1} parent=11 // pred_check_branch
          %389 = sbr.rel (%p387) target = $region16
        $region15: #{tpu_custom_call.1} parent=11 // pred_region
          _
        $region16: #{tpu_custom_call.1} parent=11 // pred_fallthru
          _
        // Predicated region
        $region17: #{tpu_custom_call.1} parent=11 // pred_check
          %p390 = pneg %p94
        $region18: #{tpu_custom_call.1} parent=11 // pred_check_branch
          %392 = sbr.rel (%p390) target = $region20
        $region19: #{tpu_custom_call.1} parent=11 // pred_region
          _
        $region20: #{tpu_custom_call.1} parent=11 // pred_fallthru
          _
        // Predicated region
        $region21: #{tpu_custom_call.1} parent=11 // pred_check
          %p393 = pneg %p115
        $region22: #{tpu_custom_call.1} parent=11 // pred_check_branch
          %395 = sbr.rel (%p393) target = $region24
        $region23: #{tpu_custom_call.1} parent=11 // pred_region
          _
        $region24: #{tpu_custom_call.1} parent=11 // pred_fallthru
          _
        // Predicated region
        $region25: #{tpu_custom_call.1} parent=11 // pred_check
          %p396 = pneg %p136
        $region26: #{tpu_custom_call.1} parent=11 // pred_check_branch
          %398 = sbr.rel (%p396) target = $region28
        $region27: #{tpu_custom_call.1} parent=11 // pred_region
          _
        $region28: #{tpu_custom_call.1} parent=11 // pred_fallthru
          _
        // Predicated region
        $region29: #{tpu_custom_call.1} parent=11 // pred_check
          %p399 = pneg %p157
        $region30: #{tpu_custom_call.1} parent=11 // pred_check_branch
          %401 = sbr.rel (%p399) target = $region32
        $region31: #{tpu_custom_call.1} parent=11 // pred_region
          _
        $region32: #{tpu_custom_call.1} parent=11 // pred_fallthru
          _
        // Predicated region
        $region33: #{tpu_custom_call.1} parent=11 // pred_check
          %p402 = pneg %p178
        $region34: #{tpu_custom_call.1} parent=11 // pred_check_branch
          %404 = sbr.rel (%p402) target = $region36
        $region35: #{tpu_custom_call.1} parent=11 // pred_region
          _
        $region36: #{tpu_custom_call.1} parent=11 // pred_fallthru
          _
        // Predicated region
        $region37: #{tpu_custom_call.1} parent=11 // pred_check
          %p405 = pneg %p199
        $region38: #{tpu_custom_call.1} parent=11 // pred_check_branch
          %407 = sbr.rel (%p405) target = $region40
        $region39: #{tpu_custom_call.1} parent=11 // pred_region
          _
        $region40: #{tpu_custom_call.1} parent=11 // pred_fallthru
          _
        // Predicated region
        $region41: #{tpu_custom_call.1} parent=11 // pred_check
          %p408 = pneg %p220
        $region42: #{tpu_custom_call.1} parent=11 // pred_check_branch
          %410 = sbr.rel (%p408) target = $region44
        $region43: #{tpu_custom_call.1} parent=11 // pred_region
          _
        $region44: #{tpu_custom_call.1} parent=11 // pred_fallthru
          _
        // Predicated region
        $region45: #{tpu_custom_call.1} parent=11 // pred_check
          %p411 = pneg %p241
        $region46: #{tpu_custom_call.1} parent=11 // pred_check_branch
          %413 = sbr.rel (%p411) target = $region48
        $region47: #{tpu_custom_call.1} parent=11 // pred_region
          _
        $region48: #{tpu_custom_call.1} parent=11 // pred_fallthru
          _
        // Predicated region
        $region49: #{tpu_custom_call.1} parent=11 // pred_check
          %p414 = pneg %p262
        $region50: #{tpu_custom_call.1} parent=11 // pred_check_branch
          %416 = sbr.rel (%p414) target = $region52
        $region51: #{tpu_custom_call.1} parent=11 // pred_region
          _
        $region52: #{tpu_custom_call.1} parent=11 // pred_fallthru
          _
        // Predicated region
        $region53: #{tpu_custom_call.1} parent=11 // pred_check
          %p417 = pneg %p283
        $region54: #{tpu_custom_call.1} parent=11 // pred_check_branch
          %419 = sbr.rel (%p417) target = $region56
        $region55: #{tpu_custom_call.1} parent=11 // pred_region
          _
        $region56: #{tpu_custom_call.1} parent=11 // pred_fallthru
          _
        // Predicated region
        $region57: #{tpu_custom_call.1} parent=11 // pred_check
          %p420 = pneg %p304
        $region58: #{tpu_custom_call.1} parent=11 // pred_check_branch
          %422 = sbr.rel (%p420) target = $region60
        $region59: #{tpu_custom_call.1} parent=11 // pred_region
          _
        $region60: #{tpu_custom_call.1} parent=11 // pred_fallthru
          _
        // Predicated region
        $region61: #{tpu_custom_call.1} parent=11 // pred_check
          %p423 = pneg %p325
        $region62: #{tpu_custom_call.1} parent=11 // pred_check_branch
          %425 = sbr.rel (%p423) target = $region64
        $region63: #{tpu_custom_call.1} parent=11 // pred_region
          _
        $region64: #{tpu_custom_call.1} parent=11 // pred_fallthru
          _
        // Predicated region
        $region65: #{tpu_custom_call.1} parent=11 // pred_check
          %p426 = pneg %p346
        $region66: #{tpu_custom_call.1} parent=11 // pred_check_branch
          %428 = sbr.rel (%p426) target = $region68
        $region67: #{tpu_custom_call.1} parent=11 // pred_region
          _
        $region68: #{tpu_custom_call.1} parent=11 // pred_fallthru
          _
      $region12: #{tpu_custom_call.1} parent=5 // pred_fallthru
        _
      %p429 = scmp.lt.s32.totalorder %s26, 2
      // Predicated region
      $region69: #{tpu_custom_call.1} parent=5 // pred_check
        %p430 = pneg %p429
      $region70: #{tpu_custom_call.1} parent=5 // pred_check_branch
        %432 = sbr.rel (%p430) target = $region72
      $region71: #{tpu_custom_call.1} parent=5 // pred_region
        // Predicated region
        $region73: #{tpu_custom_call.1} parent=71 // pred_check
          %p433 = pneg %p46
        $region74: #{tpu_custom_call.1} parent=71 // pred_check_branch
          %435 = sbr.rel (%p433) target = $region76
        $region75: #{tpu_custom_call.1} parent=71 // pred_region
          %s436 = sand.u32 %s36, 1
          %s437 = scalar_lea.sflag [#allocation4], %s436
          %s438 = sand.u32 %s36, 1
          %s439 = smul.addr %s438, 8
          %s440 = scalar_lea.vmem [#allocation3], %s439
          %s442 = ssub.s32 128, 128
          %443 = vsyncadd %s437, %s442
          %s444 = smul.addr %s26, 128
          %s445 = scalar_lea.hbm %s0, %s444
          %s447 = sshll.u32 %s440, 4
          %s448 = int_to_ptr.vmem [resolvable:$true] %s447
          %450 = dma.hbm_to_vmem [thread:$0]  %s445, 128, %s448, %s437
        $region76: #{tpu_custom_call.1} parent=71 // pred_fallthru
          _
      $region72: #{tpu_custom_call.1} parent=5 // pred_fallthru
        _
      %p451 = scmp.le.s32.totalorder 1, %s26
      %p452 = scmp.lt.s32.totalorder %s26, 3
      %p453 = pnand %p451, %p452
      %p454 = pneg %p453
      // Predicated region
      $region77: #{tpu_custom_call.1} parent=5 // pred_check
        _
      $region78: #{tpu_custom_call.1} parent=5 // pred_check_branch
        %456 = sbr.rel (%p453) target = $region80
      $region79: #{tpu_custom_call.1} parent=5 // pred_region
        %s457 = ssub.s32 %s26, 1
        %s458 = sand.u32 %s39, 1
        %s459 = scalar_lea.sflag [#allocation4], %s458
        %s460 = sand.u32 %s39, 1
        %s461 = smul.addr %s460, 8
        %s462 = scalar_lea.vmem [#allocation3], %s461
        // Predicated region
        $region81: #{tpu_custom_call.1} parent=79 // pred_check
          %p463 = pneg %p52
        $region82: #{tpu_custom_call.1} parent=79 // pred_check_branch
          %465 = sbr.rel (%p463) target = $region84
        $region83: #{tpu_custom_call.1} parent=79 // pred_region
          %466 = dma.done %s459, 128
        $region84: #{tpu_custom_call.1} parent=79 // pred_fallthru
          _
        %s467 = sand.u32 %s39, 1
        %s468 = scalar_lea.sflag [#allocation4], %s467
        %s469 = sand.u32 %s39, 1
        %s470 = smul.addr %s469, 8
        %s471 = scalar_lea.vmem [#allocation3], %s470
        %p472 = pneg %p52
        %p473 = pneg %p49
        %p474 = pneg %p73
        %p475 = pneg %p70
        %p476 = pneg %p94
        %p477 = pneg %p91
        %p478 = pneg %p115
        %p479 = pneg %p112
        %p480 = pneg %p136
        %p481 = pneg %p133
        %p482 = pneg %p157
        %p483 = pneg %p154
        %p484 = pneg %p178
        %p485 = pneg %p175
        %p486 = pneg %p199
        %p487 = pneg %p196
        %p488 = pneg %p220
        %p489 = pneg %p217
        %p490 = pneg %p241
        %p491 = pneg %p238
        %p492 = pneg %p262
        %p493 = pneg %p259
        %p494 = pneg %p283
        %p495 = pneg %p280
        %p496 = pneg %p304
        %p497 = pneg %p301
        %p498 = pneg %p325
        %p499 = pneg %p322
        %p500 = pneg %p346
        %p501 = pneg %p343
        %p502 = pneg %p372
        %p503 = pneg %p369
        %p504 = scmp.lt.s32.totalorder %s31, 1
        %s505 = scalar_select %p504, %s31, 1
        %s506 = smul.addr %s505, 8
        %s507 = scalar_lea.vmem %s15, %s506
        %p508 = scmp.lt.s32.totalorder %s31, 1
        %s509 = scalar_select %p508, %s31, 1
        %s510 = smul.addr %s509, 8
        %s511 = scalar_lea.vmem %s15, %s510
        %v512 = vld [vmem:[%s462] sm:$0xff]
        %v513 = vld [vmem:[%s1] sm:$0xff]
        %v514 = vld [vmem:[%s1 + $0x8] sm:$0xff]
        %v515 = vld [vmem:[%s1 + $0x10] sm:$0xff]
        %v516 = vld [vmem:[%s1 + $0x18] sm:$0xff]
        %v517 = vld [vmem:[%s2] sm:$0x1]
        %v519 = vlaneseq
        %v520 = vshrl.u32 %v519, 7
        %v521 = vsub.s32 0, %v520
        %v522 = vrot.slane %v517, %v521
        %vm524 = vcmask 261120
        %v526 = vsel %vm524, %v512, 0
        %528 = vmatprep.subr.mxu0 0.0
        %529 = vmatpush1.msra.mxu0 0.0
        %530 = vmatprep.subr.mxu0 0.0
        %531 = vmatpush1.msra.mxu0 0.0
        %532 = vmatprep.subr.mxu0 0.0
        %533 = vmatpush1.msra.mxu0 0.0
        %534 = vmatprep.subr.mxu0 0.0
        %535 = vmatpush1.msra.mxu0 0.0
        %536 = vmatprep.subr.mxu0 0.0
        %537 = vmatpush1.msra.mxu0 0.0
        %538 = vmatprep.subr.mxu0 0.0
        %539 = vmatpush1.msra.mxu0 0.0
        %540 = vmatprep.subr.mxu0 0.0
        %541 = vmatpush1.msra.mxu0 0.0
        %542 = vmatprep.subr.mxu0 0.0
        %543 = vmatpush1.msra.mxu0 0.0
        %544 = vmatprep.subr.mxu0 0.0
        %545 = vmatpush1.msra.mxu0 0.0
        %546 = vmatprep.subr.mxu0 0.0
        %547 = vmatpush1.msra.mxu0 0.0
        %548 = vmatprep.subr.mxu0 0.0
        %549 = vmatpush1.msra.mxu0 0.0
        %550 = vmatprep.subr.mxu0 0.0
        %551 = vmatpush1.msra.mxu0 0.0
        %552 = vmatprep.subr.mxu0 0.0
        %553 = vmatpush1.msra.mxu0 %v516
        %554 = vmatprep.subr.mxu0 0.0
        %555 = vmatpush1.msra.mxu0 %v515
        %556 = vmatprep.subr.mxu0 0.0
        %557 = vmatpush1.msra.mxu0 %v514
        %558 = vmatprep.subr.mxu0 0.0
        %559 = vmatpush1.msra.mxu0 %v513
        %560 = vmatprep.subr.mxu0 0.0
        %561 = vmatpush2.msra.mxu0 0.0
        %562 = vmatprep.subr.mxu0 0.0
        %563 = vmatpush2.msra.mxu0 0.0
        %564 = vmatprep.subr.mxu0 0.0
        %565 = vmatpush2.msra.mxu0 0.0
        %566 = vmatprep.subr.mxu0 0.0
        %567 = vmatpush2.msra.mxu0 0.0
        %568 = vmatprep.subr.mxu0 0.0
        %569 = vmatpush2.msra.mxu0 0.0
        %570 = vmatprep.subr.mxu0 0.0
        %571 = vmatpush2.msra.mxu0 0.0
        %572 = vmatprep.subr.mxu0 0.0
        %573 = vmatpush2.msra.mxu0 0.0
        %574 = vmatprep.subr.mxu0 0.0
        %575 = vmatpush2.msra.mxu0 0.0
        %576 = vmatprep.subr.mxu0 0.0
        %577 = vmatpush2.msra.mxu0 0.0
        %578 = vmatprep.subr.mxu0 0.0
        %579 = vmatpush2.msra.mxu0 0.0
        %580 = vmatprep.subr.mxu0 0.0
        %581 = vmatpush2.msra.mxu0 0.0
        %582 = vmatprep.subr.mxu0 0.0
        %583 = vmatpush2.msra.mxu0 0.0
        %584 = vmatprep.subr.mxu0 0.0
        %585 = vmatpush2.msra.mxu0 0.0
        %586 = vmatprep.subr.mxu0 0.0
        %587 = vmatpush2.msra.mxu0 0.0
        %588 = vmatprep.subr.mxu0 0.0
        %589 = vmatpush2.msra.mxu0 0.0
        %590 = vmatprep.subr.mxu0 0.0
        %591 = vmatpush2.msra.mxu0 0.0
        %592 = vmatprep.mubr.f32.mxu0 0.0
        %593 = vmatmul.mubr.f32.gmra.mxu0 %v526
        %v594 = vpop.f32.mrf.mxu0
        %v595 = vadd.f32 %v522, %v594
        %v596 = vpop.f32.mrf.mxu0
        %597 = vdwg.mxu0
        %599 = vrot.lane.b32.xlu0 %v595, 120
        %v600 = vpop.permute.xlu0 %599
        %601 = vrot.lane.b32.xlu0 %v595, 112
        %v602 = vpop.permute.xlu0 %601
        %603 = vrot.lane.b32.xlu0 %v595, 104
        %v604 = vpop.permute.xlu0 %603
        %605 = vrot.lane.b32.xlu0 %v595, 96
        %v606 = vpop.permute.xlu0 %605
        %vm607 = vcmask 64512
        %v608 = vsel %vm607, %v595, 0
        %v610 = vsel %vm607, %v606, 0
        %612 = vmatprep.subr.mxu0 0.0
        %613 = vmatpush1.xpose.msra.mxu0 0.0
        %614 = vmatprep.subr.mxu0 0.0
        %615 = vmatpush1.xpose.msra.mxu0 0.0
        %616 = vmatprep.subr.mxu0 0.0
        %617 = vmatpush1.xpose.msra.mxu0 0.0
        %618 = vmatprep.subr.mxu0 0.0
        %619 = vmatpush1.xpose.msra.mxu0 0.0
        %620 = vmatprep.subr.mxu0 0.0
        %621 = vmatpush1.xpose.msra.mxu0 0.0
        %622 = vmatprep.subr.mxu0 0.0
        %623 = vmatpush1.xpose.msra.mxu0 0.0
        %624 = vmatprep.subr.mxu0 0.0
        %625 = vmatpush1.xpose.msra.mxu0 0.0
        %626 = vmatprep.subr.mxu0 0.0
        %627 = vmatpush1.xpose.msra.mxu0 0.0
        %628 = vmatprep.subr.mxu0 0.0
        %629 = vmatpush1.xpose.msra.mxu0 0.0
        %630 = vmatprep.subr.mxu0 0.0
        %631 = vmatpush1.xpose.msra.mxu0 0.0
        %632 = vmatprep.subr.mxu0 0.0
        %633 = vmatpush1.xpose.msra.mxu0 0.0
        %634 = vmatprep.subr.mxu0 0.0
        %635 = vmatpush1.xpose.msra.mxu0 0.0
        %636 = vmatprep.subr.mxu0 0.0
        %637 = vmatpush1.xpose.msra.mxu0 0.0
        %638 = vmatprep.subr.mxu0 0.0
        %639 = vmatpush1.xpose.msra.mxu0 0.0
        %640 = vmatprep.subr.mxu0 0.0
        %641 = vmatpush1.xpose.msra.mxu0 0.0
        %642 = vmatprep.subr.mxu0 0.0
        %643 = vmatpush1.xpose.msra.mxu0 %v610
        %644 = vmatprep.subr.mxu0 0.0
        %645 = vmatpush2.xpose.msra.mxu0 0.0
        %646 = vmatprep.subr.mxu0 0.0
        %647 = vmatpush2.xpose.msra.mxu0 0.0
        %648 = vmatprep.subr.mxu0 0.0
        %649 = vmatpush2.xpose.msra.mxu0 0.0
        %650 = vmatprep.subr.mxu0 0.0
        %651 = vmatpush2.xpose.msra.mxu0 0.0
        %652 = vmatprep.subr.mxu0 0.0
        %653 = vmatpush2.xpose.msra.mxu0 0.0
        %654 = vmatprep.subr.mxu0 0.0
        %655 = vmatpush2.xpose.msra.mxu0 0.0
        %656 = vmatprep.subr.mxu0 0.0
        %657 = vmatpush2.xpose.msra.mxu0 0.0
        %658 = vmatprep.subr.mxu0 0.0
        %659 = vmatpush2.xpose.msra.mxu0 0.0
        %660 = vmatprep.subr.mxu0 0.0
        %661 = vmatpush2.xpose.msra.mxu0 0.0
        %662 = vmatprep.subr.mxu0 0.0
        %663 = vmatpush2.xpose.msra.mxu0 0.0
        %664 = vmatprep.subr.mxu0 0.0
        %665 = vmatpush2.xpose.msra.mxu0 0.0
        %666 = vmatprep.subr.mxu0 0.0
        %667 = vmatpush2.xpose.msra.mxu0 0.0
        %668 = vmatprep.subr.mxu0 0.0
        %669 = vmatpush2.xpose.msra.mxu0 0.0
        %670 = vmatprep.subr.mxu0 0.0
        %671 = vmatpush2.xpose.msra.mxu0 0.0
        %672 = vmatprep.subr.mxu0 0.0
        %673 = vmatpush2.xpose.msra.mxu0 0.0
        %674 = vmatprep.subr.mxu0 0.0
        %675 = vmatpush2.xpose.msra.mxu0 0.0
        %676 = vmatprep.mubr.f32.mxu0 0.0
        %677 = vmatmul.mubr.f32.gmra.mxu0 %v608
        %v678 = vpop.f32.mrf.mxu0
        %v679 = vadd.f32 0.0, %v678
        %v680 = vpop.f32.mrf.mxu0
        %681 = vdwg.mxu0
        %682 = vrot.lane.b32.xlu0 %v600, 96
        %v683 = vpop.permute.xlu0 %682
        %v684 = vsel %vm607, %v600, 0
        %v686 = vsel %vm607, %v683, 0
        %688 = vmatprep.subr.mxu0 0.0
        %689 = vmatpush1.xpose.msra.mxu0 0.0
        %690 = vmatprep.subr.mxu0 0.0
        %691 = vmatpush1.xpose.msra.mxu0 0.0
        %692 = vmatprep.subr.mxu0 0.0
        %693 = vmatpush1.xpose.msra.mxu0 0.0
        %694 = vmatprep.subr.mxu0 0.0
        %695 = vmatpush1.xpose.msra.mxu0 0.0
        %696 = vmatprep.subr.mxu0 0.0
        %697 = vmatpush1.xpose.msra.mxu0 0.0
        %698 = vmatprep.subr.mxu0 0.0
        %699 = vmatpush1.xpose.msra.mxu0 0.0
        %700 = vmatprep.subr.mxu0 0.0
        %701 = vmatpush1.xpose.msra.mxu0 0.0
        %702 = vmatprep.subr.mxu0 0.0
        %703 = vmatpush1.xpose.msra.mxu0 0.0
        %704 = vmatprep.subr.mxu0 0.0
        %705 = vmatpush1.xpose.msra.mxu0 0.0
        %706 = vmatprep.subr.mxu0 0.0
        %707 = vmatpush1.xpose.msra.mxu0 0.0
        %708 = vmatprep.subr.mxu0 0.0
        %709 = vmatpush1.xpose.msra.mxu0 0.0
        %710 = vmatprep.subr.mxu0 0.0
        %711 = vmatpush1.xpose.msra.mxu0 0.0
        %712 = vmatprep.subr.mxu0 0.0
        %713 = vmatpush1.xpose.msra.mxu0 0.0
        %714 = vmatprep.subr.mxu0 0.0
        %715 = vmatpush1.xpose.msra.mxu0 0.0
        %716 = vmatprep.subr.mxu0 0.0
        %717 = vmatpush1.xpose.msra.mxu0 0.0
        %718 = vmatprep.subr.mxu0 0.0
        %719 = vmatpush1.xpose.msra.mxu0 %v686
        %720 = vmatprep.subr.mxu0 0.0
        %721 = vmatpush2.xpose.msra.mxu0 0.0
        %722 = vmatprep.subr.mxu0 0.0
        %723 = vmatpush2.xpose.msra.mxu0 0.0
        %724 = vmatprep.subr.mxu0 0.0
        %725 = vmatpush2.xpose.msra.mxu0 0.0
        %726 = vmatprep.subr.mxu0 0.0
        %727 = vmatpush2.xpose.msra.mxu0 0.0
        %728 = vmatprep.subr.mxu0 0.0
        %729 = vmatpush2.xpose.msra.mxu0 0.0
        %730 = vmatprep.subr.mxu0 0.0
        %731 = vmatpush2.xpose.msra.mxu0 0.0
        %732 = vmatprep.subr.mxu0 0.0
        %733 = vmatpush2.xpose.msra.mxu0 0.0
        %734 = vmatprep.subr.mxu0 0.0
        %735 = vmatpush2.xpose.msra.mxu0 0.0
        %736 = vmatprep.subr.mxu0 0.0
        %737 = vmatpush2.xpose.msra.mxu0 0.0
        %738 = vmatprep.subr.mxu0 0.0
        %739 = vmatpush2.xpose.msra.mxu0 0.0
        %740 = vmatprep.subr.mxu0 0.0
        %741 = vmatpush2.xpose.msra.mxu0 0.0
        %742 = vmatprep.subr.mxu0 0.0
        %743 = vmatpush2.xpose.msra.mxu0 0.0
        %744 = vmatprep.subr.mxu0 0.0
        %745 = vmatpush2.xpose.msra.mxu0 0.0
        %746 = vmatprep.subr.mxu0 0.0
        %747 = vmatpush2.xpose.msra.mxu0 0.0
        %748 = vmatprep.subr.mxu0 0.0
        %749 = vmatpush2.xpose.msra.mxu0 0.0
        %750 = vmatprep.subr.mxu0 0.0
        %751 = vmatpush2.xpose.msra.mxu0 0.0
        %752 = vmatprep.mubr.f32.mxu0 0.0
        %753 = vmatmul.mubr.f32.gmra.mxu0 %v684
        %v754 = vpop.f32.mrf.mxu0
        %v755 = vadd.f32 0.0, %v754
        %v756 = vpop.f32.mrf.mxu0
        %757 = vdwg.mxu0
        %758 = vrot.lane.b32.xlu0 %v602, 96
        %v759 = vpop.permute.xlu0 %758
        %v760 = vsel %vm607, %v602, 0
        %v762 = vsel %vm607, %v759, 0
        %764 = vmatprep.subr.mxu0 0.0
        %765 = vmatpush1.xpose.msra.mxu0 0.0
        %766 = vmatprep.subr.mxu0 0.0
        %767 = vmatpush1.xpose.msra.mxu0 0.0
        %768 = vmatprep.subr.mxu0 0.0
        %769 = vmatpush1.xpose.msra.mxu0 0.0
        %770 = vmatprep.subr.mxu0 0.0
        %771 = vmatpush1.xpose.msra.mxu0 0.0
        %772 = vmatprep.subr.mxu0 0.0
        %773 = vmatpush1.xpose.msra.mxu0 0.0
        %774 = vmatprep.subr.mxu0 0.0
        %775 = vmatpush1.xpose.msra.mxu0 0.0
        %776 = vmatprep.subr.mxu0 0.0
        %777 = vmatpush1.xpose.msra.mxu0 0.0
        %778 = vmatprep.subr.mxu0 0.0
        %779 = vmatpush1.xpose.msra.mxu0 0.0
        %780 = vmatprep.subr.mxu0 0.0
        %781 = vmatpush1.xpose.msra.mxu0 0.0
        %782 = vmatprep.subr.mxu0 0.0
        %783 = vmatpush1.xpose.msra.mxu0 0.0
        %784 = vmatprep.subr.mxu0 0.0
        %785 = vmatpush1.xpose.msra.mxu0 0.0
        %786 = vmatprep.subr.mxu0 0.0
        %787 = vmatpush1.xpose.msra.mxu0 0.0
        %788 = vmatprep.subr.mxu0 0.0
        %789 = vmatpush1.xpose.msra.mxu0 0.0
        %790 = vmatprep.subr.mxu0 0.0
        %791 = vmatpush1.xpose.msra.mxu0 0.0
        %792 = vmatprep.subr.mxu0 0.0
        %793 = vmatpush1.xpose.msra.mxu0 0.0
        %794 = vmatprep.subr.mxu0 0.0
        %795 = vmatpush1.xpose.msra.mxu0 %v762
        %796 = vmatprep.subr.mxu0 0.0
        %797 = vmatpush2.xpose.msra.mxu0 0.0
        %798 = vmatprep.subr.mxu0 0.0
        %799 = vmatpush2.xpose.msra.mxu0 0.0
        %800 = vmatprep.subr.mxu0 0.0
        %801 = vmatpush2.xpose.msra.mxu0 0.0
        %802 = vmatprep.subr.mxu0 0.0
        %803 = vmatpush2.xpose.msra.mxu0 0.0
        %804 = vmatprep.subr.mxu0 0.0
        %805 = vmatpush2.xpose.msra.mxu0 0.0
        %806 = vmatprep.subr.mxu0 0.0
        %807 = vmatpush2.xpose.msra.mxu0 0.0
        %808 = vmatprep.subr.mxu0 0.0
        %809 = vmatpush2.xpose.msra.mxu0 0.0
        %810 = vmatprep.subr.mxu0 0.0
        %811 = vmatpush2.xpose.msra.mxu0 0.0
        %812 = vmatprep.subr.mxu0 0.0
        %813 = vmatpush2.xpose.msra.mxu0 0.0
        %814 = vmatprep.subr.mxu0 0.0
        %815 = vmatpush2.xpose.msra.mxu0 0.0
        %816 = vmatprep.subr.mxu0 0.0
        %817 = vmatpush2.xpose.msra.mxu0 0.0
        %818 = vmatprep.subr.mxu0 0.0
        %819 = vmatpush2.xpose.msra.mxu0 0.0
        %820 = vmatprep.subr.mxu0 0.0
        %821 = vmatpush2.xpose.msra.mxu0 0.0
        %822 = vmatprep.subr.mxu0 0.0
        %823 = vmatpush2.xpose.msra.mxu0 0.0
        %824 = vmatprep.subr.mxu0 0.0
        %825 = vmatpush2.xpose.msra.mxu0 0.0
        %826 = vmatprep.subr.mxu0 0.0
        %827 = vmatpush2.xpose.msra.mxu0 0.0
        %828 = vmatprep.mubr.f32.mxu0 0.0
        %829 = vmatmul.mubr.f32.gmra.mxu0 %v760
        %v830 = vpop.f32.mrf.mxu0
        %v831 = vadd.f32 0.0, %v830
        %v832 = vpop.f32.mrf.mxu0
        %833 = vdwg.mxu0
        %834 = vrot.lane.b32.xlu0 %v604, 96
        %v835 = vpop.permute.xlu0 %834
        %v836 = vsel %vm607, %v604, 0
        %v838 = vsel %vm607, %v835, 0
        %840 = vmatprep.subr.mxu0 0.0
        %841 = vmatpush1.xpose.msra.mxu0 0.0
        %842 = vmatprep.subr.mxu0 0.0
        %843 = vmatpush1.xpose.msra.mxu0 0.0
        %844 = vmatprep.subr.mxu0 0.0
        %845 = vmatpush1.xpose.msra.mxu0 0.0
        %846 = vmatprep.subr.mxu0 0.0
        %847 = vmatpush1.xpose.msra.mxu0 0.0
        %848 = vmatprep.subr.mxu0 0.0
        %849 = vmatpush1.xpose.msra.mxu0 0.0
        %850 = vmatprep.subr.mxu0 0.0
        %851 = vmatpush1.xpose.msra.mxu0 0.0
        %852 = vmatprep.subr.mxu0 0.0
        %853 = vmatpush1.xpose.msra.mxu0 0.0
        %854 = vmatprep.subr.mxu0 0.0
        %855 = vmatpush1.xpose.msra.mxu0 0.0
        %856 = vmatprep.subr.mxu0 0.0
        %857 = vmatpush1.xpose.msra.mxu0 0.0
        %858 = vmatprep.subr.mxu0 0.0
        %859 = vmatpush1.xpose.msra.mxu0 0.0
        %860 = vmatprep.subr.mxu0 0.0
        %861 = vmatpush1.xpose.msra.mxu0 0.0
        %862 = vmatprep.subr.mxu0 0.0
        %863 = vmatpush1.xpose.msra.mxu0 0.0
        %864 = vmatprep.subr.mxu0 0.0
        %865 = vmatpush1.xpose.msra.mxu0 0.0
        %866 = vmatprep.subr.mxu0 0.0
        %867 = vmatpush1.xpose.msra.mxu0 0.0
        %868 = vmatprep.subr.mxu0 0.0
        %869 = vmatpush1.xpose.msra.mxu0 0.0
        %870 = vmatprep.subr.mxu0 0.0
        %871 = vmatpush1.xpose.msra.mxu0 %v838
        %872 = vmatprep.subr.mxu0 0.0
        %873 = vmatpush2.xpose.msra.mxu0 0.0
        %874 = vmatprep.subr.mxu0 0.0
        %875 = vmatpush2.xpose.msra.mxu0 0.0
        %876 = vmatprep.subr.mxu0 0.0
        %877 = vmatpush2.xpose.msra.mxu0 0.0
        %878 = vmatprep.subr.mxu0 0.0
        %879 = vmatpush2.xpose.msra.mxu0 0.0
        %880 = vmatprep.subr.mxu0 0.0
        %881 = vmatpush2.xpose.msra.mxu0 0.0
        %882 = vmatprep.subr.mxu0 0.0
        %883 = vmatpush2.xpose.msra.mxu0 0.0
        %884 = vmatprep.subr.mxu0 0.0
        %885 = vmatpush2.xpose.msra.mxu0 0.0
        %886 = vmatprep.subr.mxu0 0.0
        %887 = vmatpush2.xpose.msra.mxu0 0.0
        %888 = vmatprep.subr.mxu0 0.0
        %889 = vmatpush2.xpose.msra.mxu0 0.0
        %890 = vmatprep.subr.mxu0 0.0
        %891 = vmatpush2.xpose.msra.mxu0 0.0
        %892 = vmatprep.subr.mxu0 0.0
        %893 = vmatpush2.xpose.msra.mxu0 0.0
        %894 = vmatprep.subr.mxu0 0.0
        %895 = vmatpush2.xpose.msra.mxu0 0.0
        %896 = vmatprep.subr.mxu0 0.0
        %897 = vmatpush2.xpose.msra.mxu0 0.0
        %898 = vmatprep.subr.mxu0 0.0
        %899 = vmatpush2.xpose.msra.mxu0 0.0
        %900 = vmatprep.subr.mxu0 0.0
        %901 = vmatpush2.xpose.msra.mxu0 0.0
        %902 = vmatprep.subr.mxu0 0.0
        %903 = vmatpush2.xpose.msra.mxu0 0.0
        %904 = vmatprep.mubr.f32.mxu0 0.0
        %905 = vmatmul.mubr.f32.gmra.mxu0 %v836
        %v906 = vpop.f32.mrf.mxu0
        %v907 = vadd.f32 0.0, %v906
        %v908 = vpop.f32.mrf.mxu0
        %909 = vdwg.mxu0
        %v910 = vsel %vm607, %v679, -inf
        %911 = vmax.xlane.f32.xlu0 %v910
        %v912 = vpop.xlane.xlu0 %911
        %v913 = vsel %vm607, %v755, -inf
        %914 = vmax.xlane.f32.xlu0 %v913
        %v915 = vpop.xlane.xlu0 %914
        %v916 = vsel %vm607, %v831, -inf
        %917 = vmax.xlane.f32.xlu0 %v916
        %v918 = vpop.xlane.xlu0 %917
        %v919 = vsel %vm607, %v907, -inf
        %920 = vmax.xlane.f32.xlu0 %v919
        %v921 = vpop.xlane.xlu0 %920
        %v922 = vsub.f32 %v679, %v912
        %v923 = vsub.f32 %v755, %v915
        %v924 = vsub.f32 %v831, %v918
        %v925 = vsub.f32 %v907, %v921
        %v926 = vmul.f32 %v922, 1.442695
        %v927 = vpow.pop %v926
        %v928 = vmul.f32 %v923, 1.442695
        %v929 = vpow.pop %v928
        %v930 = vmul.f32 %v924, 1.442695
        %v931 = vpow.pop %v930
        %v932 = vmul.f32 %v925, 1.442695
        %v933 = vpow.pop %v932
        %v934 = vsel %vm607, %v927, 0.0
        %935 = vadd.xlane.f32.xlu0 %v934
        %v936 = vpop.xlane.xlu0 %935
        %v937 = vsel %vm607, %v929, 0.0
        %938 = vadd.xlane.f32.xlu0 %v937
        %v939 = vpop.xlane.xlu0 %938
        %v940 = vsel %vm607, %v931, 0.0
        %941 = vadd.xlane.f32.xlu0 %v940
        %v942 = vpop.xlane.xlu0 %941
        %v943 = vsel %vm607, %v933, 0.0
        %944 = vadd.xlane.f32.xlu0 %v943
        %v945 = vpop.xlane.xlu0 %944
        %v946 = vrcp.pop %v936
        %v947 = vmul.f32 %v927, %v946
        %v948 = vrcp.pop %v939
        %v949 = vmul.f32 %v929, %v948
        %v950 = vrcp.pop %v942
        %v951 = vmul.f32 %v931, %v950
        %v952 = vrcp.pop %v945
        %v953 = vmul.f32 %v933, %v952
        %954 = vrot.lane.b32.xlu0 %v595, 64
        %v955 = vpop.permute.xlu0 %954
        %v958 = vsel %vm607, %v947, 0
        %960 = vmatprep.subr.mxu0 0.0
        %961 = vmatpush1.msra.mxu0 0.0
        %962 = vmatprep.subr.mxu0 0.0
        %963 = vmatpush1.msra.mxu0 0.0
        %964 = vmatprep.subr.mxu0 0.0
        %965 = vmatpush1.msra.mxu0 0.0
        %966 = vmatprep.subr.mxu0 0.0
        %967 = vmatpush1.msra.mxu0 0.0
        %968 = vmatprep.subr.mxu0 0.0
        %969 = vmatpush1.msra.mxu0 0.0
        %970 = vmatprep.subr.mxu0 0.0
        %971 = vmatpush1.msra.mxu0 0.0
        %972 = vmatprep.subr.mxu0 0.0
        %973 = vmatpush1.msra.mxu0 0.0
        %974 = vmatprep.subr.mxu0 0.0
        %975 = vmatpush1.msra.mxu0 0.0
        %976 = vmatprep.subr.mxu0 0.0
        %977 = vmatpush1.msra.mxu0 0.0
        %978 = vmatprep.subr.mxu0 0.0
        %979 = vmatpush1.msra.mxu0 0.0
        %980 = vmatprep.subr.mxu0 0.0
        %981 = vmatpush1.msra.mxu0 0.0
        %982 = vmatprep.subr.mxu0 0.0
        %983 = vmatpush1.msra.mxu0 0.0
        %984 = vmatprep.subr.mxu0 0.0
        %985 = vmatpush1.msra.mxu0 0.0
        %986 = vmatprep.subr.mxu0 0.0
        %987 = vmatpush1.msra.mxu0 0.0
        %988 = vmatprep.subr.mxu0 0.0
        %989 = vmatpush1.msra.mxu0 0.0
        %990 = vmatprep.subr.mxu0 0.0
        %991 = vmatpush1.msra.mxu0 %v955
        %992 = vmatprep.subr.mxu0 0.0
        %993 = vmatpush2.msra.mxu0 0.0
        %994 = vmatprep.subr.mxu0 0.0
        %995 = vmatpush2.msra.mxu0 0.0
        %996 = vmatprep.subr.mxu0 0.0
        %997 = vmatpush2.msra.mxu0 0.0
        %998 = vmatprep.subr.mxu0 0.0
        %999 = vmatpush2.msra.mxu0 0.0
        %1000 = vmatprep.subr.mxu0 0.0
        %1001 = vmatpush2.msra.mxu0 0.0
        %1002 = vmatprep.subr.mxu0 0.0
        %1003 = vmatpush2.msra.mxu0 0.0
        %1004 = vmatprep.subr.mxu0 0.0
        %1005 = vmatpush2.msra.mxu0 0.0
        %1006 = vmatprep.subr.mxu0 0.0
        %1007 = vmatpush2.msra.mxu0 0.0
        %1008 = vmatprep.subr.mxu0 0.0
        %1009 = vmatpush2.msra.mxu0 0.0
        %1010 = vmatprep.subr.mxu0 0.0
        %1011 = vmatpush2.msra.mxu0 0.0
        %1012 = vmatprep.subr.mxu0 0.0
        %1013 = vmatpush2.msra.mxu0 0.0
        %1014 = vmatprep.subr.mxu0 0.0
        %1015 = vmatpush2.msra.mxu0 0.0
        %1016 = vmatprep.subr.mxu0 0.0
        %1017 = vmatpush2.msra.mxu0 0.0
        %1018 = vmatprep.subr.mxu0 0.0
        %1019 = vmatpush2.msra.mxu0 0.0
        %1020 = vmatprep.subr.mxu0 0.0
        %1021 = vmatpush2.msra.mxu0 0.0
        %1022 = vmatprep.subr.mxu0 0.0
        %1023 = vmatpush2.msra.mxu0 0.0
        %1024 = vmatprep.mubr.f32.mxu0 0.0
        %1025 = vmatmul.mubr.f32.gmra.mxu0 %v958
        %v1026 = vpop.f32.mrf.mxu0
        %v1027 = vadd.f32 0.0, %v1026
        %v1028 = vpop.f32.mrf.mxu0
        %1029 = vdwg.mxu0
        %1030 = vrot.lane.b32.xlu0 %v600, 64
        %v1031 = vpop.permute.xlu0 %1030
        %v1034 = vsel %vm607, %v949, 0
        %1036 = vmatprep.subr.mxu0 0.0
        %1037 = vmatpush1.msra.mxu0 0.0
        %1038 = vmatprep.subr.mxu0 0.0
        %1039 = vmatpush1.msra.mxu0 0.0
        %1040 = vmatprep.subr.mxu0 0.0
        %1041 = vmatpush1.msra.mxu0 0.0
        %1042 = vmatprep.subr.mxu0 0.0
        %1043 = vmatpush1.msra.mxu0 0.0
        %1044 = vmatprep.subr.mxu0 0.0
        %1045 = vmatpush1.msra.mxu0 0.0
        %1046 = vmatprep.subr.mxu0 0.0
        %1047 = vmatpush1.msra.mxu0 0.0
        %1048 = vmatprep.subr.mxu0 0.0
        %1049 = vmatpush1.msra.mxu0 0.0
        %1050 = vmatprep.subr.mxu0 0.0
        %1051 = vmatpush1.msra.mxu0 0.0
        %1052 = vmatprep.subr.mxu0 0.0
        %1053 = vmatpush1.msra.mxu0 0.0
        %1054 = vmatprep.subr.mxu0 0.0
        %1055 = vmatpush1.msra.mxu0 0.0
        %1056 = vmatprep.subr.mxu0 0.0
        %1057 = vmatpush1.msra.mxu0 0.0
        %1058 = vmatprep.subr.mxu0 0.0
        %1059 = vmatpush1.msra.mxu0 0.0
        %1060 = vmatprep.subr.mxu0 0.0
        %1061 = vmatpush1.msra.mxu0 0.0
        %1062 = vmatprep.subr.mxu0 0.0
        %1063 = vmatpush1.msra.mxu0 0.0
        %1064 = vmatprep.subr.mxu0 0.0
        %1065 = vmatpush1.msra.mxu0 0.0
        %1066 = vmatprep.subr.mxu0 0.0
        %1067 = vmatpush1.msra.mxu0 %v1031
        %1068 = vmatprep.subr.mxu0 0.0
        %1069 = vmatpush2.msra.mxu0 0.0
        %1070 = vmatprep.subr.mxu0 0.0
        %1071 = vmatpush2.msra.mxu0 0.0
        %1072 = vmatprep.subr.mxu0 0.0
        %1073 = vmatpush2.msra.mxu0 0.0
        %1074 = vmatprep.subr.mxu0 0.0
        %1075 = vmatpush2.msra.mxu0 0.0
        %1076 = vmatprep.subr.mxu0 0.0
        %1077 = vmatpush2.msra.mxu0 0.0
        %1078 = vmatprep.subr.mxu0 0.0
        %1079 = vmatpush2.msra.mxu0 0.0
        %1080 = vmatprep.subr.mxu0 0.0
        %1081 = vmatpush2.msra.mxu0 0.0
        %1082 = vmatprep.subr.mxu0 0.0
        %1083 = vmatpush2.msra.mxu0 0.0
        %1084 = vmatprep.subr.mxu0 0.0
        %1085 = vmatpush2.msra.mxu0 0.0
        %1086 = vmatprep.subr.mxu0 0.0
        %1087 = vmatpush2.msra.mxu0 0.0
        %1088 = vmatprep.subr.mxu0 0.0
        %1089 = vmatpush2.msra.mxu0 0.0
        %1090 = vmatprep.subr.mxu0 0.0
        %1091 = vmatpush2.msra.mxu0 0.0
        %1092 = vmatprep.subr.mxu0 0.0
        %1093 = vmatpush2.msra.mxu0 0.0
        %1094 = vmatprep.subr.mxu0 0.0
        %1095 = vmatpush2.msra.mxu0 0.0
        %1096 = vmatprep.subr.mxu0 0.0
        %1097 = vmatpush2.msra.mxu0 0.0
        %1098 = vmatprep.subr.mxu0 0.0
        %1099 = vmatpush2.msra.mxu0 0.0
        %1100 = vmatprep.mubr.f32.mxu0 0.0
        %1101 = vmatmul.mubr.f32.gmra.mxu0 %v1034
        %v1102 = vpop.f32.mrf.mxu0
        %v1103 = vadd.f32 0.0, %v1102
        %v1104 = vpop.f32.mrf.mxu0
        %1105 = vdwg.mxu0
        %1106 = vrot.lane.b32.xlu0 %v602, 64
        %v1107 = vpop.permute.xlu0 %1106
        %v1110 = vsel %vm607, %v951, 0
        %1112 = vmatprep.subr.mxu0 0.0
        %1113 = vmatpush1.msra.mxu0 0.0
        %1114 = vmatprep.subr.mxu0 0.0
        %1115 = vmatpush1.msra.mxu0 0.0
        %1116 = vmatprep.subr.mxu0 0.0
        %1117 = vmatpush1.msra.mxu0 0.0
        %1118 = vmatprep.subr.mxu0 0.0
        %1119 = vmatpush1.msra.mxu0 0.0
        %1120 = vmatprep.subr.mxu0 0.0
        %1121 = vmatpush1.msra.mxu0 0.0
        %1122 = vmatprep.subr.mxu0 0.0
        %1123 = vmatpush1.msra.mxu0 0.0
        %1124 = vmatprep.subr.mxu0 0.0
        %1125 = vmatpush1.msra.mxu0 0.0
        %1126 = vmatprep.subr.mxu0 0.0
        %1127 = vmatpush1.msra.mxu0 0.0
        %1128 = vmatprep.subr.mxu0 0.0
        %1129 = vmatpush1.msra.mxu0 0.0
        %1130 = vmatprep.subr.mxu0 0.0
        %1131 = vmatpush1.msra.mxu0 0.0
        %1132 = vmatprep.subr.mxu0 0.0
        %1133 = vmatpush1.msra.mxu0 0.0
        %1134 = vmatprep.subr.mxu0 0.0
        %1135 = vmatpush1.msra.mxu0 0.0
        %1136 = vmatprep.subr.mxu0 0.0
        %1137 = vmatpush1.msra.mxu0 0.0
        %1138 = vmatprep.subr.mxu0 0.0
        %1139 = vmatpush1.msra.mxu0 0.0
        %1140 = vmatprep.subr.mxu0 0.0
        %1141 = vmatpush1.msra.mxu0 0.0
        %1142 = vmatprep.subr.mxu0 0.0
        %1143 = vmatpush1.msra.mxu0 %v1107
        %1144 = vmatprep.subr.mxu0 0.0
        %1145 = vmatpush2.msra.mxu0 0.0
        %1146 = vmatprep.subr.mxu0 0.0
        %1147 = vmatpush2.msra.mxu0 0.0
        %1148 = vmatprep.subr.mxu0 0.0
        %1149 = vmatpush2.msra.mxu0 0.0
        %1150 = vmatprep.subr.mxu0 0.0
        %1151 = vmatpush2.msra.mxu0 0.0
        %1152 = vmatprep.subr.mxu0 0.0
        %1153 = vmatpush2.msra.mxu0 0.0
        %1154 = vmatprep.subr.mxu0 0.0
        %1155 = vmatpush2.msra.mxu0 0.0
        %1156 = vmatprep.subr.mxu0 0.0
        %1157 = vmatpush2.msra.mxu0 0.0
        %1158 = vmatprep.subr.mxu0 0.0
        %1159 = vmatpush2.msra.mxu0 0.0
        %1160 = vmatprep.subr.mxu0 0.0
        %1161 = vmatpush2.msra.mxu0 0.0
        %1162 = vmatprep.subr.mxu0 0.0
        %1163 = vmatpush2.msra.mxu0 0.0
        %1164 = vmatprep.subr.mxu0 0.0
        %1165 = vmatpush2.msra.mxu0 0.0
        %1166 = vmatprep.subr.mxu0 0.0
        %1167 = vmatpush2.msra.mxu0 0.0
        %1168 = vmatprep.subr.mxu0 0.0
        %1169 = vmatpush2.msra.mxu0 0.0
        %1170 = vmatprep.subr.mxu0 0.0
        %1171 = vmatpush2.msra.mxu0 0.0
        %1172 = vmatprep.subr.mxu0 0.0
        %1173 = vmatpush2.msra.mxu0 0.0
        %1174 = vmatprep.subr.mxu0 0.0
        %1175 = vmatpush2.msra.mxu0 0.0
        %1176 = vmatprep.mubr.f32.mxu0 0.0
        %1177 = vmatmul.mubr.f32.gmra.mxu0 %v1110
        %v1178 = vpop.f32.mrf.mxu0
        %v1179 = vadd.f32 0.0, %v1178
        %v1180 = vpop.f32.mrf.mxu0
        %1181 = vdwg.mxu0
        %1182 = vrot.lane.b32.xlu0 %v604, 64
        %v1183 = vpop.permute.xlu0 %1182
        %v1186 = vsel %vm607, %v953, 0
        %1188 = vmatprep.subr.mxu0 0.0
        %1189 = vmatpush1.msra.mxu0 0.0
        %1190 = vmatprep.subr.mxu0 0.0
        %1191 = vmatpush1.msra.mxu0 0.0
        %1192 = vmatprep.subr.mxu0 0.0
        %1193 = vmatpush1.msra.mxu0 0.0
        %1194 = vmatprep.subr.mxu0 0.0
        %1195 = vmatpush1.msra.mxu0 0.0
        %1196 = vmatprep.subr.mxu0 0.0
        %1197 = vmatpush1.msra.mxu0 0.0
        %1198 = vmatprep.subr.mxu0 0.0
        %1199 = vmatpush1.msra.mxu0 0.0
        %1200 = vmatprep.subr.mxu0 0.0
        %1201 = vmatpush1.msra.mxu0 0.0
        %1202 = vmatprep.subr.mxu0 0.0
        %1203 = vmatpush1.msra.mxu0 0.0
        %1204 = vmatprep.subr.mxu0 0.0
        %1205 = vmatpush1.msra.mxu0 0.0
        %1206 = vmatprep.subr.mxu0 0.0
        %1207 = vmatpush1.msra.mxu0 0.0
        %1208 = vmatprep.subr.mxu0 0.0
        %1209 = vmatpush1.msra.mxu0 0.0
        %1210 = vmatprep.subr.mxu0 0.0
        %1211 = vmatpush1.msra.mxu0 0.0
        %1212 = vmatprep.subr.mxu0 0.0
        %1213 = vmatpush1.msra.mxu0 0.0
        %1214 = vmatprep.subr.mxu0 0.0
        %1215 = vmatpush1.msra.mxu0 0.0
        %1216 = vmatprep.subr.mxu0 0.0
        %1217 = vmatpush1.msra.mxu0 0.0
        %1218 = vmatprep.subr.mxu0 0.0
        %1219 = vmatpush1.msra.mxu0 %v1183
        %1220 = vmatprep.subr.mxu0 0.0
        %1221 = vmatpush2.msra.mxu0 0.0
        %1222 = vmatprep.subr.mxu0 0.0
        %1223 = vmatpush2.msra.mxu0 0.0
        %1224 = vmatprep.subr.mxu0 0.0
        %1225 = vmatpush2.msra.mxu0 0.0
        %1226 = vmatprep.subr.mxu0 0.0
        %1227 = vmatpush2.msra.mxu0 0.0
        %1228 = vmatprep.subr.mxu0 0.0
        %1229 = vmatpush2.msra.mxu0 0.0
        %1230 = vmatprep.subr.mxu0 0.0
        %1231 = vmatpush2.msra.mxu0 0.0
        %1232 = vmatprep.subr.mxu0 0.0
        %1233 = vmatpush2.msra.mxu0 0.0
        %1234 = vmatprep.subr.mxu0 0.0
        %1235 = vmatpush2.msra.mxu0 0.0
        %1236 = vmatprep.subr.mxu0 0.0
        %1237 = vmatpush2.msra.mxu0 0.0
        %1238 = vmatprep.subr.mxu0 0.0
        %1239 = vmatpush2.msra.mxu0 0.0
        %1240 = vmatprep.subr.mxu0 0.0
        %1241 = vmatpush2.msra.mxu0 0.0
        %1242 = vmatprep.subr.mxu0 0.0
        %1243 = vmatpush2.msra.mxu0 0.0
        %1244 = vmatprep.subr.mxu0 0.0
        %1245 = vmatpush2.msra.mxu0 0.0
        %1246 = vmatprep.subr.mxu0 0.0
        %1247 = vmatpush2.msra.mxu0 0.0
        %1248 = vmatprep.subr.mxu0 0.0
        %1249 = vmatpush2.msra.mxu0 0.0
        %1250 = vmatprep.subr.mxu0 0.0
        %1251 = vmatpush2.msra.mxu0 0.0
        %1252 = vmatprep.mubr.f32.mxu0 0.0
        %1253 = vmatmul.mubr.f32.gmra.mxu0 %v1186
        %v1254 = vpop.f32.mrf.mxu0
        %v1255 = vadd.f32 0.0, %v1254
        %v1256 = vpop.f32.mrf.mxu0
        %1257 = vdwg.mxu0
        %1259 = vrot.lane.b32.xlu0 %v1103, 8
        %v1260 = vpop.permute.xlu0 %1259
        %1263 = vrot.lane.b32.xlu0 %v1179, 16
        %v1264 = vpop.permute.xlu0 %1263
        %1267 = vrot.lane.b32.xlu0 %v1255, 24
        %v1268 = vpop.permute.xlu0 %1267
        %v1270 = vsel %vm607, %v1027, %v1260
        %vm1271 = vcmask 130048
        %v1272 = vsel %vm1271, %v1270, %v1264
        %vm1273 = vcmask 195584
        %v1274 = vsel %vm1273, %v1272, %v1268
        %v1275 = vld [vmem:[%s3] sm:$0xff]
        %v1276 = vld [vmem:[%s3 + $0x8] sm:$0xff]
        %v1277 = vld [vmem:[%s3 + $0x10] sm:$0xff]
        %v1278 = vld [vmem:[%s3 + $0x18] sm:$0xff]
        %v1279 = vld [vmem:[%s4] sm:$0x1]
        %v1281 = vlaneseq
        %v1282 = vshrl.u32 %v1281, 7
        %v1283 = vsub.s32 0, %v1282
        %v1284 = vrot.slane %v1279, %v1283
        %v1287 = vsel %vm524, %v1274, 0
        %1289 = vmatprep.subr.mxu0 0.0
        %1290 = vmatpush1.msra.mxu0 0.0
        %1291 = vmatprep.subr.mxu0 0.0
        %1292 = vmatpush1.msra.mxu0 0.0
        %1293 = vmatprep.subr.mxu0 0.0
        %1294 = vmatpush1.msra.mxu0 0.0
        %1295 = vmatprep.subr.mxu0 0.0
        %1296 = vmatpush1.msra.mxu0 0.0
        %1297 = vmatprep.subr.mxu0 0.0
        %1298 = vmatpush1.msra.mxu0 0.0
        %1299 = vmatprep.subr.mxu0 0.0
        %1300 = vmatpush1.msra.mxu0 0.0
        %1301 = vmatprep.subr.mxu0 0.0
        %1302 = vmatpush1.msra.mxu0 0.0
        %1303 = vmatprep.subr.mxu0 0.0
        %1304 = vmatpush1.msra.mxu0 0.0
        %1305 = vmatprep.subr.mxu0 0.0
        %1306 = vmatpush1.msra.mxu0 0.0
        %1307 = vmatprep.subr.mxu0 0.0
        %1308 = vmatpush1.msra.mxu0 0.0
        %1309 = vmatprep.subr.mxu0 0.0
        %1310 = vmatpush1.msra.mxu0 0.0
        %1311 = vmatprep.subr.mxu0 0.0
        %1312 = vmatpush1.msra.mxu0 0.0
        %1313 = vmatprep.subr.mxu0 0.0
        %1314 = vmatpush1.msra.mxu0 %v1278
        %1315 = vmatprep.subr.mxu0 0.0
        %1316 = vmatpush1.msra.mxu0 %v1277
        %1317 = vmatprep.subr.mxu0 0.0
        %1318 = vmatpush1.msra.mxu0 %v1276
        %1319 = vmatprep.subr.mxu0 0.0
        %1320 = vmatpush1.msra.mxu0 %v1275
        %1321 = vmatprep.subr.mxu0 0.0
        %1322 = vmatpush2.msra.mxu0 0.0
        %1323 = vmatprep.subr.mxu0 0.0
        %1324 = vmatpush2.msra.mxu0 0.0
        %1325 = vmatprep.subr.mxu0 0.0
        %1326 = vmatpush2.msra.mxu0 0.0
        %1327 = vmatprep.subr.mxu0 0.0
        %1328 = vmatpush2.msra.mxu0 0.0
        %1329 = vmatprep.subr.mxu0 0.0
        %1330 = vmatpush2.msra.mxu0 0.0
        %1331 = vmatprep.subr.mxu0 0.0
        %1332 = vmatpush2.msra.mxu0 0.0
        %1333 = vmatprep.subr.mxu0 0.0
        %1334 = vmatpush2.msra.mxu0 0.0
        %1335 = vmatprep.subr.mxu0 0.0
        %1336 = vmatpush2.msra.mxu0 0.0
        %1337 = vmatprep.subr.mxu0 0.0
        %1338 = vmatpush2.msra.mxu0 0.0
        %1339 = vmatprep.subr.mxu0 0.0
        %1340 = vmatpush2.msra.mxu0 0.0
        %1341 = vmatprep.subr.mxu0 0.0
        %1342 = vmatpush2.msra.mxu0 0.0
        %1343 = vmatprep.subr.mxu0 0.0
        %1344 = vmatpush2.msra.mxu0 0.0
        %1345 = vmatprep.subr.mxu0 0.0
        %1346 = vmatpush2.msra.mxu0 0.0
        %1347 = vmatprep.subr.mxu0 0.0
        %1348 = vmatpush2.msra.mxu0 0.0
        %1349 = vmatprep.subr.mxu0 0.0
        %1350 = vmatpush2.msra.mxu0 0.0
        %1351 = vmatprep.subr.mxu0 0.0
        %1352 = vmatpush2.msra.mxu0 0.0
        %1353 = vmatprep.mubr.f32.mxu0 0.0
        %1354 = vmatmul.mubr.f32.gmra.mxu0 %v1287
        %v1355 = vpop.f32.mrf.mxu0
        %v1356 = vadd.f32 %v1284, %v1355
        %v1357 = vpop.f32.mrf.mxu0
        %1358 = vdwg.mxu0
        %v1359 = vadd.f32 %v512, %v1356
        %v1360 = vld [vmem:[%s5] sm:$0x1]
        %v1361 = vld [vmem:[%s6] sm:$0x1]
        %v1362 = vsel %vm524, %v1359, 0.0
        %1363 = vadd.xlane.f32.xlu0 %v1362
        %v1364 = vpop.xlane.xlu0 %1363
        %v1365 = vrcp.pop 32.0
        %v1366 = vmul.f32 %v1364, %v1365
        %v1367 = vsub.f32 %v1359, %v1366
        %v1368 = vmul.f32 %v1367, %v1367
        %v1369 = vsel %vm524, %v1368, 0.0
        %1370 = vadd.xlane.f32.xlu0 %v1369
        %v1371 = vpop.xlane.xlu0 %1370
        %v1372 = vmul.f32 %v1371, %v1365
        %v1373 = vadd.f32 %v1372, 1e-05
        %v1374 = vrsqrt.pop %v1373
        %v1375 = vmul.f32 %v1367, %v1374
        %v1377 = vlaneseq
        %v1378 = vshrl.u32 %v1377, 7
        %v1379 = vsub.s32 0, %v1378
        %v1380 = vrot.slane %v1360, %v1379
        %v1382 = vmul.f32 %v1375, %v1380
        %v1384 = vlaneseq
        %v1385 = vshrl.u32 %v1384, 7
        %v1386 = vsub.s32 0, %v1385
        %v1387 = vrot.slane %v1361, %v1386
        %v1389 = vadd.f32 %v1382, %v1387
        %v1390 = vld [vmem:[%s7] sm:$0xff]
        %v1391 = vld [vmem:[%s7 + $0x8] sm:$0xff]
        %v1392 = vld [vmem:[%s7 + $0x10] sm:$0xff]
        %v1393 = vld [vmem:[%s7 + $0x18] sm:$0xff]
        %v1394 = vld [vmem:[%s8] sm:$0x1]
        %v1396 = vlaneseq
        %v1397 = vshrl.u32 %v1396, 7
        %v1398 = vsub.s32 0, %v1397
        %v1399 = vrot.slane %v1394, %v1398
        %v1402 = vsel %vm524, %v1389, 0
        %1404 = vmatprep.subr.mxu0 0.0
        %1405 = vmatpush1.msra.mxu0 0.0
        %1406 = vmatprep.subr.mxu0 0.0
        %1407 = vmatpush1.msra.mxu0 0.0
        %1408 = vmatprep.subr.mxu0 0.0
        %1409 = vmatpush1.msra.mxu0 0.0
        %1410 = vmatprep.subr.mxu0 0.0
        %1411 = vmatpush1.msra.mxu0 0.0
        %1412 = vmatprep.subr.mxu0 0.0
        %1413 = vmatpush1.msra.mxu0 0.0
        %1414 = vmatprep.subr.mxu0 0.0
        %1415 = vmatpush1.msra.mxu0 0.0
        %1416 = vmatprep.subr.mxu0 0.0
        %1417 = vmatpush1.msra.mxu0 0.0
        %1418 = vmatprep.subr.mxu0 0.0
        %1419 = vmatpush1.msra.mxu0 0.0
        %1420 = vmatprep.subr.mxu0 0.0
        %1421 = vmatpush1.msra.mxu0 0.0
        %1422 = vmatprep.subr.mxu0 0.0
        %1423 = vmatpush1.msra.mxu0 0.0
        %1424 = vmatprep.subr.mxu0 0.0
        %1425 = vmatpush1.msra.mxu0 0.0
        %1426 = vmatprep.subr.mxu0 0.0
        %1427 = vmatpush1.msra.mxu0 0.0
        %1428 = vmatprep.subr.mxu0 0.0
        %1429 = vmatpush1.msra.mxu0 %v1393
        %1430 = vmatprep.subr.mxu0 0.0
        %1431 = vmatpush1.msra.mxu0 %v1392
        %1432 = vmatprep.subr.mxu0 0.0
        %1433 = vmatpush1.msra.mxu0 %v1391
        %1434 = vmatprep.subr.mxu0 0.0
        %1435 = vmatpush1.msra.mxu0 %v1390
        %1436 = vmatprep.subr.mxu0 0.0
        %1437 = vmatpush2.msra.mxu0 0.0
        %1438 = vmatprep.subr.mxu0 0.0
        %1439 = vmatpush2.msra.mxu0 0.0
        %1440 = vmatprep.subr.mxu0 0.0
        %1441 = vmatpush2.msra.mxu0 0.0
        %1442 = vmatprep.subr.mxu0 0.0
        %1443 = vmatpush2.msra.mxu0 0.0
        %1444 = vmatprep.subr.mxu0 0.0
        %1445 = vmatpush2.msra.mxu0 0.0
        %1446 = vmatprep.subr.mxu0 0.0
        %1447 = vmatpush2.msra.mxu0 0.0
        %1448 = vmatprep.subr.mxu0 0.0
        %1449 = vmatpush2.msra.mxu0 0.0
        %1450 = vmatprep.subr.mxu0 0.0
        %1451 = vmatpush2.msra.mxu0 0.0
        %1452 = vmatprep.subr.mxu0 0.0
        %1453 = vmatpush2.msra.mxu0 0.0
        %1454 = vmatprep.subr.mxu0 0.0
        %1455 = vmatpush2.msra.mxu0 0.0
        %1456 = vmatprep.subr.mxu0 0.0
        %1457 = vmatpush2.msra.mxu0 0.0
        %1458 = vmatprep.subr.mxu0 0.0
        %1459 = vmatpush2.msra.mxu0 0.0
        %1460 = vmatprep.subr.mxu0 0.0
        %1461 = vmatpush2.msra.mxu0 0.0
        %1462 = vmatprep.subr.mxu0 0.0
        %1463 = vmatpush2.msra.mxu0 0.0
        %1464 = vmatprep.subr.mxu0 0.0
        %1465 = vmatpush2.msra.mxu0 0.0
        %1466 = vmatprep.subr.mxu0 0.0
        %1467 = vmatpush2.msra.mxu0 0.0
        %1468 = vmatprep.mubr.f32.mxu0 0.0
        %1469 = vmatmul.mubr.f32.gmra.mxu0 %v1402
        %v1470 = vpop.f32.mrf.mxu0
        %v1471 = vadd.f32 %v1399, %v1470
        %v1472 = vpop.f32.mrf.mxu0
        %1473 = vdwg.mxu0
        %v1474 = vmax.f32 %v1471, 0.0
        %v1475 = vld [vmem:[%s9] sm:$0xff]
        %v1476 = vld [vmem:[%s9 + $0x8] sm:$0xff]
        %v1477 = vld [vmem:[%s9 + $0x10] sm:$0xff]
        %v1478 = vld [vmem:[%s9 + $0x18] sm:$0xff]
        %v1479 = vld [vmem:[%s9 + $0x20] sm:$0xff]
        %v1480 = vld [vmem:[%s9 + $0x28] sm:$0xff]
        %v1481 = vld [vmem:[%s9 + $0x30] sm:$0xff]
        %v1482 = vld [vmem:[%s9 + $0x38] sm:$0xff]
        %v1483 = vld [vmem:[%s10] sm:$0x1]
        %v1485 = vlaneseq
        %v1486 = vshrl.u32 %v1485, 7
        %v1487 = vsub.s32 0, %v1486
        %v1488 = vrot.slane %v1483, %v1487
        %vm1490 = vcmask 523264
        %v1492 = vsel %vm1490, %v1474, 0
        %1494 = vmatprep.subr.mxu0 0.0
        %1495 = vmatpush1.msra.mxu0 0.0
        %1496 = vmatprep.subr.mxu0 0.0
        %1497 = vmatpush1.msra.mxu0 0.0
        %1498 = vmatprep.subr.mxu0 0.0
        %1499 = vmatpush1.msra.mxu0 0.0
        %1500 = vmatprep.subr.mxu0 0.0
        %1501 = vmatpush1.msra.mxu0 0.0
        %1502 = vmatprep.subr.mxu0 0.0
        %1503 = vmatpush1.msra.mxu0 0.0
        %1504 = vmatprep.subr.mxu0 0.0
        %1505 = vmatpush1.msra.mxu0 0.0
        %1506 = vmatprep.subr.mxu0 0.0
        %1507 = vmatpush1.msra.mxu0 0.0
        %1508 = vmatprep.subr.mxu0 0.0
        %1509 = vmatpush1.msra.mxu0 0.0
        %1510 = vmatprep.subr.mxu0 0.0
        %1511 = vmatpush1.msra.mxu0 %v1482
        %1512 = vmatprep.subr.mxu0 0.0
        %1513 = vmatpush1.msra.mxu0 %v1481
        %1514 = vmatprep.subr.mxu0 0.0
        %1515 = vmatpush1.msra.mxu0 %v1480
        %1516 = vmatprep.subr.mxu0 0.0
        %1517 = vmatpush1.msra.mxu0 %v1479
        %1518 = vmatprep.subr.mxu0 0.0
        %1519 = vmatpush1.msra.mxu0 %v1478
        %1520 = vmatprep.subr.mxu0 0.0
        %1521 = vmatpush1.msra.mxu0 %v1477
        %1522 = vmatprep.subr.mxu0 0.0
        %1523 = vmatpush1.msra.mxu0 %v1476
        %1524 = vmatprep.subr.mxu0 0.0
        %1525 = vmatpush1.msra.mxu0 %v1475
        %1526 = vmatprep.subr.mxu0 0.0
        %1527 = vmatpush2.msra.mxu0 0.0
        %1528 = vmatprep.subr.mxu0 0.0
        %1529 = vmatpush2.msra.mxu0 0.0
        %1530 = vmatprep.subr.mxu0 0.0
        %1531 = vmatpush2.msra.mxu0 0.0
        %1532 = vmatprep.subr.mxu0 0.0
        %1533 = vmatpush2.msra.mxu0 0.0
        %1534 = vmatprep.subr.mxu0 0.0
        %1535 = vmatpush2.msra.mxu0 0.0
        %1536 = vmatprep.subr.mxu0 0.0
        %1537 = vmatpush2.msra.mxu0 0.0
        %1538 = vmatprep.subr.mxu0 0.0
        %1539 = vmatpush2.msra.mxu0 0.0
        %1540 = vmatprep.subr.mxu0 0.0
        %1541 = vmatpush2.msra.mxu0 0.0
        %1542 = vmatprep.subr.mxu0 0.0
        %1543 = vmatpush2.msra.mxu0 0.0
        %1544 = vmatprep.subr.mxu0 0.0
        %1545 = vmatpush2.msra.mxu0 0.0
        %1546 = vmatprep.subr.mxu0 0.0
        %1547 = vmatpush2.msra.mxu0 0.0
        %1548 = vmatprep.subr.mxu0 0.0
        %1549 = vmatpush2.msra.mxu0 0.0
        %1550 = vmatprep.subr.mxu0 0.0
        %1551 = vmatpush2.msra.mxu0 0.0
        %1552 = vmatprep.subr.mxu0 0.0
        %1553 = vmatpush2.msra.mxu0 0.0
        %1554 = vmatprep.subr.mxu0 0.0
        %1555 = vmatpush2.msra.mxu0 0.0
        %1556 = vmatprep.subr.mxu0 0.0
        %1557 = vmatpush2.msra.mxu0 0.0
        %1558 = vmatprep.mubr.f32.mxu0 0.0
        %1559 = vmatmul.mubr.f32.gmra.mxu0 %v1492
        %v1560 = vpop.f32.mrf.mxu0
        %v1561 = vadd.f32 %v1488, %v1560
        %v1562 = vpop.f32.mrf.mxu0
        %1563 = vdwg.mxu0
        %v1564 = vadd.f32 %v1389, %v1561
        %v1565 = vld [vmem:[%s11] sm:$0x1]
        %v1566 = vld [vmem:[%s12] sm:$0x1]
        %v1567 = vsel %vm524, %v1564, 0.0
        %1568 = vadd.xlane.f32.xlu0 %v1567
        %v1569 = vpop.xlane.xlu0 %1568
        %v1570 = vmul.f32 %v1569, %v1365
        %v1571 = vsub.f32 %v1564, %v1570
        %v1572 = vmul.f32 %v1571, %v1571
        %v1573 = vsel %vm524, %v1572, 0.0
        %1574 = vadd.xlane.f32.xlu0 %v1573
        %v1575 = vpop.xlane.xlu0 %1574
        %v1576 = vmul.f32 %v1575, %v1365
        %v1577 = vadd.f32 %v1576, 1e-05
        %v1578 = vrsqrt.pop %v1577
        %v1579 = vmul.f32 %v1571, %v1578
        %v1581 = vlaneseq
        %v1582 = vshrl.u32 %v1581, 7
        %v1583 = vsub.s32 0, %v1582
        %v1584 = vrot.slane %v1565, %v1583
        %v1586 = vmul.f32 %v1579, %v1584
        %v1588 = vlaneseq
        %v1589 = vshrl.u32 %v1588, 7
        %v1590 = vsub.s32 0, %v1589
        %v1591 = vrot.slane %v1566, %v1590
        %v1593 = vadd.f32 %v1586, %v1591
        %s1594 = scalar_lea.vmem %s1, 32
        %v1595 = vld [vmem:[%s1594] sm:$0xff]
        %v1596 = vld [vmem:[%s1594 + $0x8] sm:$0xff]
        %v1597 = vld [vmem:[%s1594 + $0x10] sm:$0xff]
        %v1598 = vld [vmem:[%s1594 + $0x18] sm:$0xff]
        %s1599 = scalar_lea.vmem %s2, 1
        %v1600 = vld [vmem:[%s1599] sm:$0x1]
        %v1602 = vlaneseq
        %v1603 = vshrl.u32 %v1602, 7
        %v1604 = vsub.s32 0, %v1603
        %v1605 = vrot.slane %v1600, %v1604
        %v1608 = vsel %vm524, %v1593, 0
        %1610 = vmatprep.subr.mxu0 0.0
        %1611 = vmatpush1.msra.mxu0 0.0
        %1612 = vmatprep.subr.mxu0 0.0
        %1613 = vmatpush1.msra.mxu0 0.0
        %1614 = vmatprep.subr.mxu0 0.0
        %1615 = vmatpush1.msra.mxu0 0.0
        %1616 = vmatprep.subr.mxu0 0.0
        %1617 = vmatpush1.msra.mxu0 0.0
        %1618 = vmatprep.subr.mxu0 0.0
        %1619 = vmatpush1.msra.mxu0 0.0
        %1620 = vmatprep.subr.mxu0 0.0
        %1621 = vmatpush1.msra.mxu0 0.0
        %1622 = vmatprep.subr.mxu0 0.0
        %1623 = vmatpush1.msra.mxu0 0.0
        %1624 = vmatprep.subr.mxu0 0.0
        %1625 = vmatpush1.msra.mxu0 0.0
        %1626 = vmatprep.subr.mxu0 0.0
        %1627 = vmatpush1.msra.mxu0 0.0
        %1628 = vmatprep.subr.mxu0 0.0
        %1629 = vmatpush1.msra.mxu0 0.0
        %1630 = vmatprep.subr.mxu0 0.0
        %1631 = vmatpush1.msra.mxu0 0.0
        %1632 = vmatprep.subr.mxu0 0.0
        %1633 = vmatpush1.msra.mxu0 0.0
        %1634 = vmatprep.subr.mxu0 0.0
        %1635 = vmatpush1.msra.mxu0 %v1598
        %1636 = vmatprep.subr.mxu0 0.0
        %1637 = vmatpush1.msra.mxu0 %v1597
        %1638 = vmatprep.subr.mxu0 0.0
        %1639 = vmatpush1.msra.mxu0 %v1596
        %1640 = vmatprep.subr.mxu0 0.0
        %1641 = vmatpush1.msra.mxu0 %v1595
        %1642 = vmatprep.subr.mxu0 0.0
        %1643 = vmatpush2.msra.mxu0 0.0
        %1644 = vmatprep.subr.mxu0 0.0
        %1645 = vmatpush2.msra.mxu0 0.0
        %1646 = vmatprep.subr.mxu0 0.0
        %1647 = vmatpush2.msra.mxu0 0.0
        %1648 = vmatprep.subr.mxu0 0.0
        %1649 = vmatpush2.msra.mxu0 0.0
        %1650 = vmatprep.subr.mxu0 0.0
        %1651 = vmatpush2.msra.mxu0 0.0
        %1652 = vmatprep.subr.mxu0 0.0
        %1653 = vmatpush2.msra.mxu0 0.0
        %1654 = vmatprep.subr.mxu0 0.0
        %1655 = vmatpush2.msra.mxu0 0.0
        %1656 = vmatprep.subr.mxu0 0.0
        %1657 = vmatpush2.msra.mxu0 0.0
        %1658 = vmatprep.subr.mxu0 0.0
        %1659 = vmatpush2.msra.mxu0 0.0
        %1660 = vmatprep.subr.mxu0 0.0
        %1661 = vmatpush2.msra.mxu0 0.0
        %1662 = vmatprep.subr.mxu0 0.0
        %1663 = vmatpush2.msra.mxu0 0.0
        %1664 = vmatprep.subr.mxu0 0.0
        %1665 = vmatpush2.msra.mxu0 0.0
        %1666 = vmatprep.subr.mxu0 0.0
        %1667 = vmatpush2.msra.mxu0 0.0
        %1668 = vmatprep.subr.mxu0 0.0
        %1669 = vmatpush2.msra.mxu0 0.0
        %1670 = vmatprep.subr.mxu0 0.0
        %1671 = vmatpush2.msra.mxu0 0.0
        %1672 = vmatprep.subr.mxu0 0.0
        %1673 = vmatpush2.msra.mxu0 0.0
        %1674 = vmatprep.mubr.f32.mxu0 0.0
        %1675 = vmatmul.mubr.f32.gmra.mxu0 %v1608
        %v1676 = vpop.f32.mrf.mxu0
        %v1677 = vadd.f32 %v1605, %v1676
        %v1678 = vpop.f32.mrf.mxu0
        %1679 = vdwg.mxu0
        %1681 = vrot.lane.b32.xlu0 %v1677, 120
        %v1682 = vpop.permute.xlu0 %1681
        %1683 = vrot.lane.b32.xlu0 %v1677, 112
        %v1684 = vpop.permute.xlu0 %1683
        %1685 = vrot.lane.b32.xlu0 %v1677, 104
        %v1686 = vpop.permute.xlu0 %1685
        %1687 = vrot.lane.b32.xlu0 %v1677, 96
        %v1688 = vpop.permute.xlu0 %1687
        %v1689 = vsel %vm607, %v1677, 0
        %v1691 = vsel %vm607, %v1688, 0
        %1693 = vmatprep.subr.mxu0 0.0
        %1694 = vmatpush1.xpose.msra.mxu0 0.0
        %1695 = vmatprep.subr.mxu0 0.0
        %1696 = vmatpush1.xpose.msra.mxu0 0.0
        %1697 = vmatprep.subr.mxu0 0.0
        %1698 = vmatpush1.xpose.msra.mxu0 0.0
        %1699 = vmatprep.subr.mxu0 0.0
        %1700 = vmatpush1.xpose.msra.mxu0 0.0
        %1701 = vmatprep.subr.mxu0 0.0
        %1702 = vmatpush1.xpose.msra.mxu0 0.0
        %1703 = vmatprep.subr.mxu0 0.0
        %1704 = vmatpush1.xpose.msra.mxu0 0.0
        %1705 = vmatprep.subr.mxu0 0.0
        %1706 = vmatpush1.xpose.msra.mxu0 0.0
        %1707 = vmatprep.subr.mxu0 0.0
        %1708 = vmatpush1.xpose.msra.mxu0 0.0
        %1709 = vmatprep.subr.mxu0 0.0
        %1710 = vmatpush1.xpose.msra.mxu0 0.0
        %1711 = vmatprep.subr.mxu0 0.0
        %1712 = vmatpush1.xpose.msra.mxu0 0.0
        %1713 = vmatprep.subr.mxu0 0.0
        %1714 = vmatpush1.xpose.msra.mxu0 0.0
        %1715 = vmatprep.subr.mxu0 0.0
        %1716 = vmatpush1.xpose.msra.mxu0 0.0
        %1717 = vmatprep.subr.mxu0 0.0
        %1718 = vmatpush1.xpose.msra.mxu0 0.0
        %1719 = vmatprep.subr.mxu0 0.0
        %1720 = vmatpush1.xpose.msra.mxu0 0.0
        %1721 = vmatprep.subr.mxu0 0.0
        %1722 = vmatpush1.xpose.msra.mxu0 0.0
        %1723 = vmatprep.subr.mxu0 0.0
        %1724 = vmatpush1.xpose.msra.mxu0 %v1691
        %1725 = vmatprep.subr.mxu0 0.0
        %1726 = vmatpush2.xpose.msra.mxu0 0.0
        %1727 = vmatprep.subr.mxu0 0.0
        %1728 = vmatpush2.xpose.msra.mxu0 0.0
        %1729 = vmatprep.subr.mxu0 0.0
        %1730 = vmatpush2.xpose.msra.mxu0 0.0
        %1731 = vmatprep.subr.mxu0 0.0
        %1732 = vmatpush2.xpose.msra.mxu0 0.0
        %1733 = vmatprep.subr.mxu0 0.0
        %1734 = vmatpush2.xpose.msra.mxu0 0.0
        %1735 = vmatprep.subr.mxu0 0.0
        %1736 = vmatpush2.xpose.msra.mxu0 0.0
        %1737 = vmatprep.subr.mxu0 0.0
        %1738 = vmatpush2.xpose.msra.mxu0 0.0
        %1739 = vmatprep.subr.mxu0 0.0
        %1740 = vmatpush2.xpose.msra.mxu0 0.0
        %1741 = vmatprep.subr.mxu0 0.0
        %1742 = vmatpush2.xpose.msra.mxu0 0.0
        %1743 = vmatprep.subr.mxu0 0.0
        %1744 = vmatpush2.xpose.msra.mxu0 0.0
        %1745 = vmatprep.subr.mxu0 0.0
        %1746 = vmatpush2.xpose.msra.mxu0 0.0
        %1747 = vmatprep.subr.mxu0 0.0
        %1748 = vmatpush2.xpose.msra.mxu0 0.0
        %1749 = vmatprep.subr.mxu0 0.0
        %1750 = vmatpush2.xpose.msra.mxu0 0.0
        %1751 = vmatprep.subr.mxu0 0.0
        %1752 = vmatpush2.xpose.msra.mxu0 0.0
        %1753 = vmatprep.subr.mxu0 0.0
        %1754 = vmatpush2.xpose.msra.mxu0 0.0
        %1755 = vmatprep.subr.mxu0 0.0
        %1756 = vmatpush2.xpose.msra.mxu0 0.0
        %1757 = vmatprep.mubr.f32.mxu0 0.0
        %1758 = vmatmul.mubr.f32.gmra.mxu0 %v1689
        %v1759 = vpop.f32.mrf.mxu0
        %v1760 = vadd.f32 0.0, %v1759
        %v1761 = vpop.f32.mrf.mxu0
        %1762 = vdwg.mxu0
        %1763 = vrot.lane.b32.xlu0 %v1682, 96
        %v1764 = vpop.permute.xlu0 %1763
        %v1765 = vsel %vm607, %v1682, 0
        %v1767 = vsel %vm607, %v1764, 0
        %1769 = vmatprep.subr.mxu0 0.0
        %1770 = vmatpush1.xpose.msra.mxu0 0.0
        %1771 = vmatprep.subr.mxu0 0.0
        %1772 = vmatpush1.xpose.msra.mxu0 0.0
        %1773 = vmatprep.subr.mxu0 0.0
        %1774 = vmatpush1.xpose.msra.mxu0 0.0
        %1775 = vmatprep.subr.mxu0 0.0
        %1776 = vmatpush1.xpose.msra.mxu0 0.0
        %1777 = vmatprep.subr.mxu0 0.0
        %1778 = vmatpush1.xpose.msra.mxu0 0.0
        %1779 = vmatprep.subr.mxu0 0.0
        %1780 = vmatpush1.xpose.msra.mxu0 0.0
        %1781 = vmatprep.subr.mxu0 0.0
        %1782 = vmatpush1.xpose.msra.mxu0 0.0
        %1783 = vmatprep.subr.mxu0 0.0
        %1784 = vmatpush1.xpose.msra.mxu0 0.0
        %1785 = vmatprep.subr.mxu0 0.0
        %1786 = vmatpush1.xpose.msra.mxu0 0.0
        %1787 = vmatprep.subr.mxu0 0.0
        %1788 = vmatpush1.xpose.msra.mxu0 0.0
        %1789 = vmatprep.subr.mxu0 0.0
        %1790 = vmatpush1.xpose.msra.mxu0 0.0
        %1791 = vmatprep.subr.mxu0 0.0
        %1792 = vmatpush1.xpose.msra.mxu0 0.0
        %1793 = vmatprep.subr.mxu0 0.0
        %1794 = vmatpush1.xpose.msra.mxu0 0.0
        %1795 = vmatprep.subr.mxu0 0.0
        %1796 = vmatpush1.xpose.msra.mxu0 0.0
        %1797 = vmatprep.subr.mxu0 0.0
        %1798 = vmatpush1.xpose.msra.mxu0 0.0
        %1799 = vmatprep.subr.mxu0 0.0
        %1800 = vmatpush1.xpose.msra.mxu0 %v1767
        %1801 = vmatprep.subr.mxu0 0.0
        %1802 = vmatpush2.xpose.msra.mxu0 0.0
        %1803 = vmatprep.subr.mxu0 0.0
        %1804 = vmatpush2.xpose.msra.mxu0 0.0
        %1805 = vmatprep.subr.mxu0 0.0
        %1806 = vmatpush2.xpose.msra.mxu0 0.0
        %1807 = vmatprep.subr.mxu0 0.0
        %1808 = vmatpush2.xpose.msra.mxu0 0.0
        %1809 = vmatprep.subr.mxu0 0.0
        %1810 = vmatpush2.xpose.msra.mxu0 0.0
        %1811 = vmatprep.subr.mxu0 0.0
        %1812 = vmatpush2.xpose.msra.mxu0 0.0
        %1813 = vmatprep.subr.mxu0 0.0
        %1814 = vmatpush2.xpose.msra.mxu0 0.0
        %1815 = vmatprep.subr.mxu0 0.0
        %1816 = vmatpush2.xpose.msra.mxu0 0.0
        %1817 = vmatprep.subr.mxu0 0.0
        %1818 = vmatpush2.xpose.msra.mxu0 0.0
        %1819 = vmatprep.subr.mxu0 0.0
        %1820 = vmatpush2.xpose.msra.mxu0 0.0
        %1821 = vmatprep.subr.mxu0 0.0
        %1822 = vmatpush2.xpose.msra.mxu0 0.0
        %1823 = vmatprep.subr.mxu0 0.0
        %1824 = vmatpush2.xpose.msra.mxu0 0.0
        %1825 = vmatprep.subr.mxu0 0.0
        %1826 = vmatpush2.xpose.msra.mxu0 0.0
        %1827 = vmatprep.subr.mxu0 0.0
        %1828 = vmatpush2.xpose.msra.mxu0 0.0
        %1829 = vmatprep.subr.mxu0 0.0
        %1830 = vmatpush2.xpose.msra.mxu0 0.0
        %1831 = vmatprep.subr.mxu0 0.0
        %1832 = vmatpush2.xpose.msra.mxu0 0.0
        %1833 = vmatprep.mubr.f32.mxu0 0.0
        %1834 = vmatmul.mubr.f32.gmra.mxu0 %v1765
        %v1835 = vpop.f32.mrf.mxu0
        %v1836 = vadd.f32 0.0, %v1835
        %v1837 = vpop.f32.mrf.mxu0
        %1838 = vdwg.mxu0
        %1839 = vrot.lane.b32.xlu0 %v1684, 96
        %v1840 = vpop.permute.xlu0 %1839
        %v1841 = vsel %vm607, %v1684, 0
        %v1843 = vsel %vm607, %v1840, 0
        %1845 = vmatprep.subr.mxu0 0.0
        %1846 = vmatpush1.xpose.msra.mxu0 0.0
        %1847 = vmatprep.subr.mxu0 0.0
        %1848 = vmatpush1.xpose.msra.mxu0 0.0
        %1849 = vmatprep.subr.mxu0 0.0
        %1850 = vmatpush1.xpose.msra.mxu0 0.0
        %1851 = vmatprep.subr.mxu0 0.0
        %1852 = vmatpush1.xpose.msra.mxu0 0.0
        %1853 = vmatprep.subr.mxu0 0.0
        %1854 = vmatpush1.xpose.msra.mxu0 0.0
        %1855 = vmatprep.subr.mxu0 0.0
        %1856 = vmatpush1.xpose.msra.mxu0 0.0
        %1857 = vmatprep.subr.mxu0 0.0
        %1858 = vmatpush1.xpose.msra.mxu0 0.0
        %1859 = vmatprep.subr.mxu0 0.0
        %1860 = vmatpush1.xpose.msra.mxu0 0.0
        %1861 = vmatprep.subr.mxu0 0.0
        %1862 = vmatpush1.xpose.msra.mxu0 0.0
        %1863 = vmatprep.subr.mxu0 0.0
        %1864 = vmatpush1.xpose.msra.mxu0 0.0
        %1865 = vmatprep.subr.mxu0 0.0
        %1866 = vmatpush1.xpose.msra.mxu0 0.0
        %1867 = vmatprep.subr.mxu0 0.0
        %1868 = vmatpush1.xpose.msra.mxu0 0.0
        %1869 = vmatprep.subr.mxu0 0.0
        %1870 = vmatpush1.xpose.msra.mxu0 0.0
        %1871 = vmatprep.subr.mxu0 0.0
        %1872 = vmatpush1.xpose.msra.mxu0 0.0
        %1873 = vmatprep.subr.mxu0 0.0
        %1874 = vmatpush1.xpose.msra.mxu0 0.0
        %1875 = vmatprep.subr.mxu0 0.0
        %1876 = vmatpush1.xpose.msra.mxu0 %v1843
        %1877 = vmatprep.subr.mxu0 0.0
        %1878 = vmatpush2.xpose.msra.mxu0 0.0
        %1879 = vmatprep.subr.mxu0 0.0
        %1880 = vmatpush2.xpose.msra.mxu0 0.0
        %1881 = vmatprep.subr.mxu0 0.0
        %1882 = vmatpush2.xpose.msra.mxu0 0.0
        %1883 = vmatprep.subr.mxu0 0.0
        %1884 = vmatpush2.xpose.msra.mxu0 0.0
        %1885 = vmatprep.subr.mxu0 0.0
        %1886 = vmatpush2.xpose.msra.mxu0 0.0
        %1887 = vmatprep.subr.mxu0 0.0
        %1888 = vmatpush2.xpose.msra.mxu0 0.0
        %1889 = vmatprep.subr.mxu0 0.0
        %1890 = vmatpush2.xpose.msra.mxu0 0.0
        %1891 = vmatprep.subr.mxu0 0.0
        %1892 = vmatpush2.xpose.msra.mxu0 0.0
        %1893 = vmatprep.subr.mxu0 0.0
        %1894 = vmatpush2.xpose.msra.mxu0 0.0
        %1895 = vmatprep.subr.mxu0 0.0
        %1896 = vmatpush2.xpose.msra.mxu0 0.0
        %1897 = vmatprep.subr.mxu0 0.0
        %1898 = vmatpush2.xpose.msra.mxu0 0.0
        %1899 = vmatprep.subr.mxu0 0.0
        %1900 = vmatpush2.xpose.msra.mxu0 0.0
        %1901 = vmatprep.subr.mxu0 0.0
        %1902 = vmatpush2.xpose.msra.mxu0 0.0
        %1903 = vmatprep.subr.mxu0 0.0
        %1904 = vmatpush2.xpose.msra.mxu0 0.0
        %1905 = vmatprep.subr.mxu0 0.0
        %1906 = vmatpush2.xpose.msra.mxu0 0.0
        %1907 = vmatprep.subr.mxu0 0.0
        %1908 = vmatpush2.xpose.msra.mxu0 0.0
        %1909 = vmatprep.mubr.f32.mxu0 0.0
        %1910 = vmatmul.mubr.f32.gmra.mxu0 %v1841
        %v1911 = vpop.f32.mrf.mxu0
        %v1912 = vadd.f32 0.0, %v1911
        %v1913 = vpop.f32.mrf.mxu0
        %1914 = vdwg.mxu0
        %1915 = vrot.lane.b32.xlu0 %v1686, 96
        %v1916 = vpop.permute.xlu0 %1915
        %v1917 = vsel %vm607, %v1686, 0
        %v1919 = vsel %vm607, %v1916, 0
        %1921 = vmatprep.subr.mxu0 0.0
        %1922 = vmatpush1.xpose.msra.mxu0 0.0
        %1923 = vmatprep.subr.mxu0 0.0
        %1924 = vmatpush1.xpose.msra.mxu0 0.0
        %1925 = vmatprep.subr.mxu0 0.0
        %1926 = vmatpush1.xpose.msra.mxu0 0.0
        %1927 = vmatprep.subr.mxu0 0.0
        %1928 = vmatpush1.xpose.msra.mxu0 0.0
        %1929 = vmatprep.subr.mxu0 0.0
        %1930 = vmatpush1.xpose.msra.mxu0 0.0
        %1931 = vmatprep.subr.mxu0 0.0
        %1932 = vmatpush1.xpose.msra.mxu0 0.0
        %1933 = vmatprep.subr.mxu0 0.0
        %1934 = vmatpush1.xpose.msra.mxu0 0.0
        %1935 = vmatprep.subr.mxu0 0.0
        %1936 = vmatpush1.xpose.msra.mxu0 0.0
        %1937 = vmatprep.subr.mxu0 0.0
        %1938 = vmatpush1.xpose.msra.mxu0 0.0
        %1939 = vmatprep.subr.mxu0 0.0
        %1940 = vmatpush1.xpose.msra.mxu0 0.0
        %1941 = vmatprep.subr.mxu0 0.0
        %1942 = vmatpush1.xpose.msra.mxu0 0.0
        %1943 = vmatprep.subr.mxu0 0.0
        %1944 = vmatpush1.xpose.msra.mxu0 0.0
        %1945 = vmatprep.subr.mxu0 0.0
        %1946 = vmatpush1.xpose.msra.mxu0 0.0
        %1947 = vmatprep.subr.mxu0 0.0
        %1948 = vmatpush1.xpose.msra.mxu0 0.0
        %1949 = vmatprep.subr.mxu0 0.0
        %1950 = vmatpush1.xpose.msra.mxu0 0.0
        %1951 = vmatprep.subr.mxu0 0.0
        %1952 = vmatpush1.xpose.msra.mxu0 %v1919
        %1953 = vmatprep.subr.mxu0 0.0
        %1954 = vmatpush2.xpose.msra.mxu0 0.0
        %1955 = vmatprep.subr.mxu0 0.0
        %1956 = vmatpush2.xpose.msra.mxu0 0.0
        %1957 = vmatprep.subr.mxu0 0.0
        %1958 = vmatpush2.xpose.msra.mxu0 0.0
        %1959 = vmatprep.subr.mxu0 0.0
        %1960 = vmatpush2.xpose.msra.mxu0 0.0
        %1961 = vmatprep.subr.mxu0 0.0
        %1962 = vmatpush2.xpose.msra.mxu0 0.0
        %1963 = vmatprep.subr.mxu0 0.0
        %1964 = vmatpush2.xpose.msra.mxu0 0.0
        %1965 = vmatprep.subr.mxu0 0.0
        %1966 = vmatpush2.xpose.msra.mxu0 0.0
        %1967 = vmatprep.subr.mxu0 0.0
        %1968 = vmatpush2.xpose.msra.mxu0 0.0
        %1969 = vmatprep.subr.mxu0 0.0
        %1970 = vmatpush2.xpose.msra.mxu0 0.0
        %1971 = vmatprep.subr.mxu0 0.0
        %1972 = vmatpush2.xpose.msra.mxu0 0.0
        %1973 = vmatprep.subr.mxu0 0.0
        %1974 = vmatpush2.xpose.msra.mxu0 0.0
        %1975 = vmatprep.subr.mxu0 0.0
        %1976 = vmatpush2.xpose.msra.mxu0 0.0
        %1977 = vmatprep.subr.mxu0 0.0
        %1978 = vmatpush2.xpose.msra.mxu0 0.0
        %1979 = vmatprep.subr.mxu0 0.0
        %1980 = vmatpush2.xpose.msra.mxu0 0.0
        %1981 = vmatprep.subr.mxu0 0.0
        %1982 = vmatpush2.xpose.msra.mxu0 0.0
        %1983 = vmatprep.subr.mxu0 0.0
        %1984 = vmatpush2.xpose.msra.mxu0 0.0
        %1985 = vmatprep.mubr.f32.mxu0 0.0
        %1986 = vmatmul.mubr.f32.gmra.mxu0 %v1917
        %v1987 = vpop.f32.mrf.mxu0
        %v1988 = vadd.f32 0.0, %v1987
        %v1989 = vpop.f32.mrf.mxu0
        %1990 = vdwg.mxu0
        %v1991 = vsel %vm607, %v1760, -inf
        %1992 = vmax.xlane.f32.xlu0 %v1991
        %v1993 = vpop.xlane.xlu0 %1992
        %v1994 = vsel %vm607, %v1836, -inf
        %1995 = vmax.xlane.f32.xlu0 %v1994
        %v1996 = vpop.xlane.xlu0 %1995
        %v1997 = vsel %vm607, %v1912, -inf
        %1998 = vmax.xlane.f32.xlu0 %v1997
        %v1999 = vpop.xlane.xlu0 %1998
        %v2000 = vsel %vm607, %v1988, -inf
        %2001 = vmax.xlane.f32.xlu0 %v2000
        %v2002 = vpop.xlane.xlu0 %2001
        %v2003 = vsub.f32 %v1760, %v1993
        %v2004 = vsub.f32 %v1836, %v1996
        %v2005 = vsub.f32 %v1912, %v1999
        %v2006 = vsub.f32 %v1988, %v2002
        %v2007 = vmul.f32 %v2003, 1.442695
        %v2008 = vpow.pop %v2007
        %v2009 = vmul.f32 %v2004, 1.442695
        %v2010 = vpow.pop %v2009
        %v2011 = vmul.f32 %v2005, 1.442695
        %v2012 = vpow.pop %v2011
        %v2013 = vmul.f32 %v2006, 1.442695
        %v2014 = vpow.pop %v2013
        %v2015 = vsel %vm607, %v2008, 0.0
        %2016 = vadd.xlane.f32.xlu0 %v2015
        %v2017 = vpop.xlane.xlu0 %2016
        %v2018 = vsel %vm607, %v2010, 0.0
        %2019 = vadd.xlane.f32.xlu0 %v2018
        %v2020 = vpop.xlane.xlu0 %2019
        %v2021 = vsel %vm607, %v2012, 0.0
        %2022 = vadd.xlane.f32.xlu0 %v2021
        %v2023 = vpop.xlane.xlu0 %2022
        %v2024 = vsel %vm607, %v2014, 0.0
        %2025 = vadd.xlane.f32.xlu0 %v2024
        %v2026 = vpop.xlane.xlu0 %2025
        %v2027 = vrcp.pop %v2017
        %v2028 = vmul.f32 %v2008, %v2027
        %v2029 = vrcp.pop %v2020
        %v2030 = vmul.f32 %v2010, %v2029
        %v2031 = vrcp.pop %v2023
        %v2032 = vmul.f32 %v2012, %v2031
        %v2033 = vrcp.pop %v2026
        %v2034 = vmul.f32 %v2014, %v2033
        %2035 = vrot.lane.b32.xlu0 %v1677, 64
        %v2036 = vpop.permute.xlu0 %2035
        %v2039 = vsel %vm607, %v2028, 0
        %2041 = vmatprep.subr.mxu0 0.0
        %2042 = vmatpush1.msra.mxu0 0.0
        %2043 = vmatprep.subr.mxu0 0.0
        %2044 = vmatpush1.msra.mxu0 0.0
        %2045 = vmatprep.subr.mxu0 0.0
        %2046 = vmatpush1.msra.mxu0 0.0
        %2047 = vmatprep.subr.mxu0 0.0
        %2048 = vmatpush1.msra.mxu0 0.0
        %2049 = vmatprep.subr.mxu0 0.0
        %2050 = vmatpush1.msra.mxu0 0.0
        %2051 = vmatprep.subr.mxu0 0.0
        %2052 = vmatpush1.msra.mxu0 0.0
        %2053 = vmatprep.subr.mxu0 0.0
        %2054 = vmatpush1.msra.mxu0 0.0
        %2055 = vmatprep.subr.mxu0 0.0
        %2056 = vmatpush1.msra.mxu0 0.0
        %2057 = vmatprep.subr.mxu0 0.0
        %2058 = vmatpush1.msra.mxu0 0.0
        %2059 = vmatprep.subr.mxu0 0.0
        %2060 = vmatpush1.msra.mxu0 0.0
        %2061 = vmatprep.subr.mxu0 0.0
        %2062 = vmatpush1.msra.mxu0 0.0
        %2063 = vmatprep.subr.mxu0 0.0
        %2064 = vmatpush1.msra.mxu0 0.0
        %2065 = vmatprep.subr.mxu0 0.0
        %2066 = vmatpush1.msra.mxu0 0.0
        %2067 = vmatprep.subr.mxu0 0.0
        %2068 = vmatpush1.msra.mxu0 0.0
        %2069 = vmatprep.subr.mxu0 0.0
        %2070 = vmatpush1.msra.mxu0 0.0
        %2071 = vmatprep.subr.mxu0 0.0
        %2072 = vmatpush1.msra.mxu0 %v2036
        %2073 = vmatprep.subr.mxu0 0.0
        %2074 = vmatpush2.msra.mxu0 0.0
        %2075 = vmatprep.subr.mxu0 0.0
        %2076 = vmatpush2.msra.mxu0 0.0
        %2077 = vmatprep.subr.mxu0 0.0
        %2078 = vmatpush2.msra.mxu0 0.0
        %2079 = vmatprep.subr.mxu0 0.0
        %2080 = vmatpush2.msra.mxu0 0.0
        %2081 = vmatprep.subr.mxu0 0.0
        %2082 = vmatpush2.msra.mxu0 0.0
        %2083 = vmatprep.subr.mxu0 0.0
        %2084 = vmatpush2.msra.mxu0 0.0
        %2085 = vmatprep.subr.mxu0 0.0
        %2086 = vmatpush2.msra.mxu0 0.0
        %2087 = vmatprep.subr.mxu0 0.0
        %2088 = vmatpush2.msra.mxu0 0.0
        %2089 = vmatprep.subr.mxu0 0.0
        %2090 = vmatpush2.msra.mxu0 0.0
        %2091 = vmatprep.subr.mxu0 0.0
        %2092 = vmatpush2.msra.mxu0 0.0
        %2093 = vmatprep.subr.mxu0 0.0
        %2094 = vmatpush2.msra.mxu0 0.0
        %2095 = vmatprep.subr.mxu0 0.0
        %2096 = vmatpush2.msra.mxu0 0.0
        %2097 = vmatprep.subr.mxu0 0.0
        %2098 = vmatpush2.msra.mxu0 0.0
        %2099 = vmatprep.subr.mxu0 0.0
        %2100 = vmatpush2.msra.mxu0 0.0
        %2101 = vmatprep.subr.mxu0 0.0
        %2102 = vmatpush2.msra.mxu0 0.0
        %2103 = vmatprep.subr.mxu0 0.0
        %2104 = vmatpush2.msra.mxu0 0.0
        %2105 = vmatprep.mubr.f32.mxu0 0.0
        %2106 = vmatmul.mubr.f32.gmra.mxu0 %v2039
        %v2107 = vpop.f32.mrf.mxu0
        %v2108 = vadd.f32 0.0, %v2107
        %v2109 = vpop.f32.mrf.mxu0
        %2110 = vdwg.mxu0
        %2111 = vrot.lane.b32.xlu0 %v1682, 64
        %v2112 = vpop.permute.xlu0 %2111
        %v2115 = vsel %vm607, %v2030, 0
        %2117 = vmatprep.subr.mxu0 0.0
        %2118 = vmatpush1.msra.mxu0 0.0
        %2119 = vmatprep.subr.mxu0 0.0
        %2120 = vmatpush1.msra.mxu0 0.0
        %2121 = vmatprep.subr.mxu0 0.0
        %2122 = vmatpush1.msra.mxu0 0.0
        %2123 = vmatprep.subr.mxu0 0.0
        %2124 = vmatpush1.msra.mxu0 0.0
        %2125 = vmatprep.subr.mxu0 0.0
        %2126 = vmatpush1.msra.mxu0 0.0
        %2127 = vmatprep.subr.mxu0 0.0
        %2128 = vmatpush1.msra.mxu0 0.0
        %2129 = vmatprep.subr.mxu0 0.0
        %2130 = vmatpush1.msra.mxu0 0.0
        %2131 = vmatprep.subr.mxu0 0.0
        %2132 = vmatpush1.msra.mxu0 0.0
        %2133 = vmatprep.subr.mxu0 0.0
        %2134 = vmatpush1.msra.mxu0 0.0
        %2135 = vmatprep.subr.mxu0 0.0
        %2136 = vmatpush1.msra.mxu0 0.0
        %2137 = vmatprep.subr.mxu0 0.0
        %2138 = vmatpush1.msra.mxu0 0.0
        %2139 = vmatprep.subr.mxu0 0.0
        %2140 = vmatpush1.msra.mxu0 0.0
        %2141 = vmatprep.subr.mxu0 0.0
        %2142 = vmatpush1.msra.mxu0 0.0
        %2143 = vmatprep.subr.mxu0 0.0
        %2144 = vmatpush1.msra.mxu0 0.0
        %2145 = vmatprep.subr.mxu0 0.0
        %2146 = vmatpush1.msra.mxu0 0.0
        %2147 = vmatprep.subr.mxu0 0.0
        %2148 = vmatpush1.msra.mxu0 %v2112
        %2149 = vmatprep.subr.mxu0 0.0
        %2150 = vmatpush2.msra.mxu0 0.0
        %2151 = vmatprep.subr.mxu0 0.0
        %2152 = vmatpush2.msra.mxu0 0.0
        %2153 = vmatprep.subr.mxu0 0.0
        %2154 = vmatpush2.msra.mxu0 0.0
        %2155 = vmatprep.subr.mxu0 0.0
        %2156 = vmatpush2.msra.mxu0 0.0
        %2157 = vmatprep.subr.mxu0 0.0
        %2158 = vmatpush2.msra.mxu0 0.0
        %2159 = vmatprep.subr.mxu0 0.0
        %2160 = vmatpush2.msra.mxu0 0.0
        %2161 = vmatprep.subr.mxu0 0.0
        %2162 = vmatpush2.msra.mxu0 0.0
        %2163 = vmatprep.subr.mxu0 0.0
        %2164 = vmatpush2.msra.mxu0 0.0
        %2165 = vmatprep.subr.mxu0 0.0
        %2166 = vmatpush2.msra.mxu0 0.0
        %2167 = vmatprep.subr.mxu0 0.0
        %2168 = vmatpush2.msra.mxu0 0.0
        %2169 = vmatprep.subr.mxu0 0.0
        %2170 = vmatpush2.msra.mxu0 0.0
        %2171 = vmatprep.subr.mxu0 0.0
        %2172 = vmatpush2.msra.mxu0 0.0
        %2173 = vmatprep.subr.mxu0 0.0
        %2174 = vmatpush2.msra.mxu0 0.0
        %2175 = vmatprep.subr.mxu0 0.0
        %2176 = vmatpush2.msra.mxu0 0.0
        %2177 = vmatprep.subr.mxu0 0.0
        %2178 = vmatpush2.msra.mxu0 0.0
        %2179 = vmatprep.subr.mxu0 0.0
        %2180 = vmatpush2.msra.mxu0 0.0
        %2181 = vmatprep.mubr.f32.mxu0 0.0
        %2182 = vmatmul.mubr.f32.gmra.mxu0 %v2115
        %v2183 = vpop.f32.mrf.mxu0
        %v2184 = vadd.f32 0.0, %v2183
        %v2185 = vpop.f32.mrf.mxu0
        %2186 = vdwg.mxu0
        %2187 = vrot.lane.b32.xlu0 %v1684, 64
        %v2188 = vpop.permute.xlu0 %2187
        %v2191 = vsel %vm607, %v2032, 0
        %2193 = vmatprep.subr.mxu0 0.0
        %2194 = vmatpush1.msra.mxu0 0.0
        %2195 = vmatprep.subr.mxu0 0.0
        %2196 = vmatpush1.msra.mxu0 0.0
        %2197 = vmatprep.subr.mxu0 0.0
        %2198 = vmatpush1.msra.mxu0 0.0
        %2199 = vmatprep.subr.mxu0 0.0
        %2200 = vmatpush1.msra.mxu0 0.0
        %2201 = vmatprep.subr.mxu0 0.0
        %2202 = vmatpush1.msra.mxu0 0.0
        %2203 = vmatprep.subr.mxu0 0.0
        %2204 = vmatpush1.msra.mxu0 0.0
        %2205 = vmatprep.subr.mxu0 0.0
        %2206 = vmatpush1.msra.mxu0 0.0
        %2207 = vmatprep.subr.mxu0 0.0
        %2208 = vmatpush1.msra.mxu0 0.0
        %2209 = vmatprep.subr.mxu0 0.0
        %2210 = vmatpush1.msra.mxu0 0.0
        %2211 = vmatprep.subr.mxu0 0.0
        %2212 = vmatpush1.msra.mxu0 0.0
        %2213 = vmatprep.subr.mxu0 0.0
        %2214 = vmatpush1.msra.mxu0 0.0
        %2215 = vmatprep.subr.mxu0 0.0
        %2216 = vmatpush1.msra.mxu0 0.0
        %2217 = vmatprep.subr.mxu0 0.0
        %2218 = vmatpush1.msra.mxu0 0.0
        %2219 = vmatprep.subr.mxu0 0.0
        %2220 = vmatpush1.msra.mxu0 0.0
        %2221 = vmatprep.subr.mxu0 0.0
        %2222 = vmatpush1.msra.mxu0 0.0
        %2223 = vmatprep.subr.mxu0 0.0
        %2224 = vmatpush1.msra.mxu0 %v2188
        %2225 = vmatprep.subr.mxu0 0.0
        %2226 = vmatpush2.msra.mxu0 0.0
        %2227 = vmatprep.subr.mxu0 0.0
        %2228 = vmatpush2.msra.mxu0 0.0
        %2229 = vmatprep.subr.mxu0 0.0
        %2230 = vmatpush2.msra.mxu0 0.0
        %2231 = vmatprep.subr.mxu0 0.0
        %2232 = vmatpush2.msra.mxu0 0.0
        %2233 = vmatprep.subr.mxu0 0.0
        %2234 = vmatpush2.msra.mxu0 0.0
        %2235 = vmatprep.subr.mxu0 0.0
        %2236 = vmatpush2.msra.mxu0 0.0
        %2237 = vmatprep.subr.mxu0 0.0
        %2238 = vmatpush2.msra.mxu0 0.0
        %2239 = vmatprep.subr.mxu0 0.0
        %2240 = vmatpush2.msra.mxu0 0.0
        %2241 = vmatprep.subr.mxu0 0.0
        %2242 = vmatpush2.msra.mxu0 0.0
        %2243 = vmatprep.subr.mxu0 0.0
        %2244 = vmatpush2.msra.mxu0 0.0
        %2245 = vmatprep.subr.mxu0 0.0
        %2246 = vmatpush2.msra.mxu0 0.0
        %2247 = vmatprep.subr.mxu0 0.0
        %2248 = vmatpush2.msra.mxu0 0.0
        %2249 = vmatprep.subr.mxu0 0.0
        %2250 = vmatpush2.msra.mxu0 0.0
        %2251 = vmatprep.subr.mxu0 0.0
        %2252 = vmatpush2.msra.mxu0 0.0
        %2253 = vmatprep.subr.mxu0 0.0
        %2254 = vmatpush2.msra.mxu0 0.0
        %2255 = vmatprep.subr.mxu0 0.0
        %2256 = vmatpush2.msra.mxu0 0.0
        %2257 = vmatprep.mubr.f32.mxu0 0.0
        %2258 = vmatmul.mubr.f32.gmra.mxu0 %v2191
        %v2259 = vpop.f32.mrf.mxu0
        %v2260 = vadd.f32 0.0, %v2259
        %v2261 = vpop.f32.mrf.mxu0
        %2262 = vdwg.mxu0
        %2263 = vrot.lane.b32.xlu0 %v1686, 64
        %v2264 = vpop.permute.xlu0 %2263
        %v2267 = vsel %vm607, %v2034, 0
        %2269 = vmatprep.subr.mxu0 0.0
        %2270 = vmatpush1.msra.mxu0 0.0
        %2271 = vmatprep.subr.mxu0 0.0
        %2272 = vmatpush1.msra.mxu0 0.0
        %2273 = vmatprep.subr.mxu0 0.0
        %2274 = vmatpush1.msra.mxu0 0.0
        %2275 = vmatprep.subr.mxu0 0.0
        %2276 = vmatpush1.msra.mxu0 0.0
        %2277 = vmatprep.subr.mxu0 0.0
        %2278 = vmatpush1.msra.mxu0 0.0
        %2279 = vmatprep.subr.mxu0 0.0
        %2280 = vmatpush1.msra.mxu0 0.0
        %2281 = vmatprep.subr.mxu0 0.0
        %2282 = vmatpush1.msra.mxu0 0.0
        %2283 = vmatprep.subr.mxu0 0.0
        %2284 = vmatpush1.msra.mxu0 0.0
        %2285 = vmatprep.subr.mxu0 0.0
        %2286 = vmatpush1.msra.mxu0 0.0
        %2287 = vmatprep.subr.mxu0 0.0
        %2288 = vmatpush1.msra.mxu0 0.0
        %2289 = vmatprep.subr.mxu0 0.0
        %2290 = vmatpush1.msra.mxu0 0.0
        %2291 = vmatprep.subr.mxu0 0.0
        %2292 = vmatpush1.msra.mxu0 0.0
        %2293 = vmatprep.subr.mxu0 0.0
        %2294 = vmatpush1.msra.mxu0 0.0
        %2295 = vmatprep.subr.mxu0 0.0
        %2296 = vmatpush1.msra.mxu0 0.0
        %2297 = vmatprep.subr.mxu0 0.0
        %2298 = vmatpush1.msra.mxu0 0.0
        %2299 = vmatprep.subr.mxu0 0.0
        %2300 = vmatpush1.msra.mxu0 %v2264
        %2301 = vmatprep.subr.mxu0 0.0
        %2302 = vmatpush2.msra.mxu0 0.0
        %2303 = vmatprep.subr.mxu0 0.0
        %2304 = vmatpush2.msra.mxu0 0.0
        %2305 = vmatprep.subr.mxu0 0.0
        %2306 = vmatpush2.msra.mxu0 0.0
        %2307 = vmatprep.subr.mxu0 0.0
        %2308 = vmatpush2.msra.mxu0 0.0
        %2309 = vmatprep.subr.mxu0 0.0
        %2310 = vmatpush2.msra.mxu0 0.0
        %2311 = vmatprep.subr.mxu0 0.0
        %2312 = vmatpush2.msra.mxu0 0.0
        %2313 = vmatprep.subr.mxu0 0.0
        %2314 = vmatpush2.msra.mxu0 0.0
        %2315 = vmatprep.subr.mxu0 0.0
        %2316 = vmatpush2.msra.mxu0 0.0
        %2317 = vmatprep.subr.mxu0 0.0
        %2318 = vmatpush2.msra.mxu0 0.0
        %2319 = vmatprep.subr.mxu0 0.0
        %2320 = vmatpush2.msra.mxu0 0.0
        %2321 = vmatprep.subr.mxu0 0.0
        %2322 = vmatpush2.msra.mxu0 0.0
        %2323 = vmatprep.subr.mxu0 0.0
        %2324 = vmatpush2.msra.mxu0 0.0
        %2325 = vmatprep.subr.mxu0 0.0
        %2326 = vmatpush2.msra.mxu0 0.0
        %2327 = vmatprep.subr.mxu0 0.0
        %2328 = vmatpush2.msra.mxu0 0.0
        %2329 = vmatprep.subr.mxu0 0.0
        %2330 = vmatpush2.msra.mxu0 0.0
        %2331 = vmatprep.subr.mxu0 0.0
        %2332 = vmatpush2.msra.mxu0 0.0
        %2333 = vmatprep.mubr.f32.mxu0 0.0
        %2334 = vmatmul.mubr.f32.gmra.mxu0 %v2267
        %v2335 = vpop.f32.mrf.mxu0
        %v2336 = vadd.f32 0.0, %v2335
        %v2337 = vpop.f32.mrf.mxu0
        %2338 = vdwg.mxu0
        %2340 = vrot.lane.b32.xlu0 %v2184, 8
        %v2341 = vpop.permute.xlu0 %2340
        %2344 = vrot.lane.b32.xlu0 %v2260, 16
        %v2345 = vpop.permute.xlu0 %2344
        %2348 = vrot.lane.b32.xlu0 %v2336, 24
        %v2349 = vpop.permute.xlu0 %2348
        %v2351 = vsel %vm607, %v2108, %v2341
        %v2352 = vsel %vm1271, %v2351, %v2345
        %v2353 = vsel %vm1273, %v2352, %v2349
        %s2354 = scalar_lea.vmem %s3, 32
        %v2355 = vld [vmem:[%s2354] sm:$0xff]
        %v2356 = vld [vmem:[%s2354 + $0x8] sm:$0xff]
        %v2357 = vld [vmem:[%s2354 + $0x10] sm:$0xff]
        %v2358 = vld [vmem:[%s2354 + $0x18] sm:$0xff]
        %s2359 = scalar_lea.vmem %s4, 1
        %v2360 = vld [vmem:[%s2359] sm:$0x1]
        %v2362 = vlaneseq
        %v2363 = vshrl.u32 %v2362, 7
        %v2364 = vsub.s32 0, %v2363
        %v2365 = vrot.slane %v2360, %v2364
        %v2368 = vsel %vm524, %v2353, 0
        %2370 = vmatprep.subr.mxu0 0.0
        %2371 = vmatpush1.msra.mxu0 0.0
        %2372 = vmatprep.subr.mxu0 0.0
        %2373 = vmatpush1.msra.mxu0 0.0
        %2374 = vmatprep.subr.mxu0 0.0
        %2375 = vmatpush1.msra.mxu0 0.0
        %2376 = vmatprep.subr.mxu0 0.0
        %2377 = vmatpush1.msra.mxu0 0.0
        %2378 = vmatprep.subr.mxu0 0.0
        %2379 = vmatpush1.msra.mxu0 0.0
        %2380 = vmatprep.subr.mxu0 0.0
        %2381 = vmatpush1.msra.mxu0 0.0
        %2382 = vmatprep.subr.mxu0 0.0
        %2383 = vmatpush1.msra.mxu0 0.0
        %2384 = vmatprep.subr.mxu0 0.0
        %2385 = vmatpush1.msra.mxu0 0.0
        %2386 = vmatprep.subr.mxu0 0.0
        %2387 = vmatpush1.msra.mxu0 0.0
        %2388 = vmatprep.subr.mxu0 0.0
        %2389 = vmatpush1.msra.mxu0 0.0
        %2390 = vmatprep.subr.mxu0 0.0
        %2391 = vmatpush1.msra.mxu0 0.0
        %2392 = vmatprep.subr.mxu0 0.0
        %2393 = vmatpush1.msra.mxu0 0.0
        %2394 = vmatprep.subr.mxu0 0.0
        %2395 = vmatpush1.msra.mxu0 %v2358
        %2396 = vmatprep.subr.mxu0 0.0
        %2397 = vmatpush1.msra.mxu0 %v2357
        %2398 = vmatprep.subr.mxu0 0.0
        %2399 = vmatpush1.msra.mxu0 %v2356
        %2400 = vmatprep.subr.mxu0 0.0
        %2401 = vmatpush1.msra.mxu0 %v2355
        %2402 = vmatprep.subr.mxu0 0.0
        %2403 = vmatpush2.msra.mxu0 0.0
        %2404 = vmatprep.subr.mxu0 0.0
        %2405 = vmatpush2.msra.mxu0 0.0
        %2406 = vmatprep.subr.mxu0 0.0
        %2407 = vmatpush2.msra.mxu0 0.0
        %2408 = vmatprep.subr.mxu0 0.0
        %2409 = vmatpush2.msra.mxu0 0.0
        %2410 = vmatprep.subr.mxu0 0.0
        %2411 = vmatpush2.msra.mxu0 0.0
        %2412 = vmatprep.subr.mxu0 0.0
        %2413 = vmatpush2.msra.mxu0 0.0
        %2414 = vmatprep.subr.mxu0 0.0
        %2415 = vmatpush2.msra.mxu0 0.0
        %2416 = vmatprep.subr.mxu0 0.0
        %2417 = vmatpush2.msra.mxu0 0.0
        %2418 = vmatprep.subr.mxu0 0.0
        %2419 = vmatpush2.msra.mxu0 0.0
        %2420 = vmatprep.subr.mxu0 0.0
        %2421 = vmatpush2.msra.mxu0 0.0
        %2422 = vmatprep.subr.mxu0 0.0
        %2423 = vmatpush2.msra.mxu0 0.0
        %2424 = vmatprep.subr.mxu0 0.0
        %2425 = vmatpush2.msra.mxu0 0.0
        %2426 = vmatprep.subr.mxu0 0.0
        %2427 = vmatpush2.msra.mxu0 0.0
        %2428 = vmatprep.subr.mxu0 0.0
        %2429 = vmatpush2.msra.mxu0 0.0
        %2430 = vmatprep.subr.mxu0 0.0
        %2431 = vmatpush2.msra.mxu0 0.0
        %2432 = vmatprep.subr.mxu0 0.0
        %2433 = vmatpush2.msra.mxu0 0.0
        %2434 = vmatprep.mubr.f32.mxu0 0.0
        %2435 = vmatmul.mubr.f32.gmra.mxu0 %v2368
        %v2436 = vpop.f32.mrf.mxu0
        %v2437 = vadd.f32 %v2365, %v2436
        %v2438 = vpop.f32.mrf.mxu0
        %2439 = vdwg.mxu0
        %v2440 = vadd.f32 %v1593, %v2437
        %s2441 = scalar_lea.vmem %s5, 1
        %v2442 = vld [vmem:[%s2441] sm:$0x1]
        %s2443 = scalar_lea.vmem %s6, 1
        %v2444 = vld [vmem:[%s2443] sm:$0x1]
        %v2445 = vsel %vm524, %v2440, 0.0
        %2446 = vadd.xlane.f32.xlu0 %v2445
        %v2447 = vpop.xlane.xlu0 %2446
        %v2448 = vmul.f32 %v2447, %v1365
        %v2449 = vsub.f32 %v2440, %v2448
        %v2450 = vmul.f32 %v2449, %v2449
        %v2451 = vsel %vm524, %v2450, 0.0
        %2452 = vadd.xlane.f32.xlu0 %v2451
        %v2453 = vpop.xlane.xlu0 %2452
        %v2454 = vmul.f32 %v2453, %v1365
        %v2455 = vadd.f32 %v2454, 1e-05
        %v2456 = vrsqrt.pop %v2455
        %v2457 = vmul.f32 %v2449, %v2456
        %v2459 = vlaneseq
        %v2460 = vshrl.u32 %v2459, 7
        %v2461 = vsub.s32 0, %v2460
        %v2462 = vrot.slane %v2442, %v2461
        %v2464 = vmul.f32 %v2457, %v2462
        %v2466 = vlaneseq
        %v2467 = vshrl.u32 %v2466, 7
        %v2468 = vsub.s32 0, %v2467
        %v2469 = vrot.slane %v2444, %v2468
        %v2471 = vadd.f32 %v2464, %v2469
        %s2472 = scalar_lea.vmem %s7, 32
        %v2473 = vld [vmem:[%s2472] sm:$0xff]
        %v2474 = vld [vmem:[%s2472 + $0x8] sm:$0xff]
        %v2475 = vld [vmem:[%s2472 + $0x10] sm:$0xff]
        %v2476 = vld [vmem:[%s2472 + $0x18] sm:$0xff]
        %s2477 = scalar_lea.vmem %s8, 1
        %v2478 = vld [vmem:[%s2477] sm:$0x1]
        %v2480 = vlaneseq
        %v2481 = vshrl.u32 %v2480, 7
        %v2482 = vsub.s32 0, %v2481
        %v2483 = vrot.slane %v2478, %v2482
        %v2486 = vsel %vm524, %v2471, 0
        %2488 = vmatprep.subr.mxu0 0.0
        %2489 = vmatpush1.msra.mxu0 0.0
        %2490 = vmatprep.subr.mxu0 0.0
        %2491 = vmatpush1.msra.mxu0 0.0
        %2492 = vmatprep.subr.mxu0 0.0
        %2493 = vmatpush1.msra.mxu0 0.0
        %2494 = vmatprep.subr.mxu0 0.0
        %2495 = vmatpush1.msra.mxu0 0.0
        %2496 = vmatprep.subr.mxu0 0.0
        %2497 = vmatpush1.msra.mxu0 0.0
        %2498 = vmatprep.subr.mxu0 0.0
        %2499 = vmatpush1.msra.mxu0 0.0
        %2500 = vmatprep.subr.mxu0 0.0
        %2501 = vmatpush1.msra.mxu0 0.0
        %2502 = vmatprep.subr.mxu0 0.0
        %2503 = vmatpush1.msra.mxu0 0.0
        %2504 = vmatprep.subr.mxu0 0.0
        %2505 = vmatpush1.msra.mxu0 0.0
        %2506 = vmatprep.subr.mxu0 0.0
        %2507 = vmatpush1.msra.mxu0 0.0
        %2508 = vmatprep.subr.mxu0 0.0
        %2509 = vmatpush1.msra.mxu0 0.0
        %2510 = vmatprep.subr.mxu0 0.0
        %2511 = vmatpush1.msra.mxu0 0.0
        %2512 = vmatprep.subr.mxu0 0.0
        %2513 = vmatpush1.msra.mxu0 %v2476
        %2514 = vmatprep.subr.mxu0 0.0
        %2515 = vmatpush1.msra.mxu0 %v2475
        %2516 = vmatprep.subr.mxu0 0.0
        %2517 = vmatpush1.msra.mxu0 %v2474
        %2518 = vmatprep.subr.mxu0 0.0
        %2519 = vmatpush1.msra.mxu0 %v2473
        %2520 = vmatprep.subr.mxu0 0.0
        %2521 = vmatpush2.msra.mxu0 0.0
        %2522 = vmatprep.subr.mxu0 0.0
        %2523 = vmatpush2.msra.mxu0 0.0
        %2524 = vmatprep.subr.mxu0 0.0
        %2525 = vmatpush2.msra.mxu0 0.0
        %2526 = vmatprep.subr.mxu0 0.0
        %2527 = vmatpush2.msra.mxu0 0.0
        %2528 = vmatprep.subr.mxu0 0.0
        %2529 = vmatpush2.msra.mxu0 0.0
        %2530 = vmatprep.subr.mxu0 0.0
        %2531 = vmatpush2.msra.mxu0 0.0
        %2532 = vmatprep.subr.mxu0 0.0
        %2533 = vmatpush2.msra.mxu0 0.0
        %2534 = vmatprep.subr.mxu0 0.0
        %2535 = vmatpush2.msra.mxu0 0.0
        %2536 = vmatprep.subr.mxu0 0.0
        %2537 = vmatpush2.msra.mxu0 0.0
        %2538 = vmatprep.subr.mxu0 0.0
        %2539 = vmatpush2.msra.mxu0 0.0
        %2540 = vmatprep.subr.mxu0 0.0
        %2541 = vmatpush2.msra.mxu0 0.0
        %2542 = vmatprep.subr.mxu0 0.0
        %2543 = vmatpush2.msra.mxu0 0.0
        %2544 = vmatprep.subr.mxu0 0.0
        %2545 = vmatpush2.msra.mxu0 0.0
        %2546 = vmatprep.subr.mxu0 0.0
        %2547 = vmatpush2.msra.mxu0 0.0
        %2548 = vmatprep.subr.mxu0 0.0
        %2549 = vmatpush2.msra.mxu0 0.0
        %2550 = vmatprep.subr.mxu0 0.0
        %2551 = vmatpush2.msra.mxu0 0.0
        %2552 = vmatprep.mubr.f32.mxu0 0.0
        %2553 = vmatmul.mubr.f32.gmra.mxu0 %v2486
        %v2554 = vpop.f32.mrf.mxu0
        %v2555 = vadd.f32 %v2483, %v2554
        %v2556 = vpop.f32.mrf.mxu0
        %2557 = vdwg.mxu0
        %v2558 = vmax.f32 %v2555, 0.0
        %s2559 = scalar_lea.vmem %s9, 64
        %v2560 = vld [vmem:[%s2559] sm:$0xff]
        %v2561 = vld [vmem:[%s2559 + $0x8] sm:$0xff]
        %v2562 = vld [vmem:[%s2559 + $0x10] sm:$0xff]
        %v2563 = vld [vmem:[%s2559 + $0x18] sm:$0xff]
        %v2564 = vld [vmem:[%s2559 + $0x20] sm:$0xff]
        %v2565 = vld [vmem:[%s2559 + $0x28] sm:$0xff]
        %v2566 = vld [vmem:[%s2559 + $0x30] sm:$0xff]
        %v2567 = vld [vmem:[%s2559 + $0x38] sm:$0xff]
        %s2568 = scalar_lea.vmem %s10, 1
        %v2569 = vld [vmem:[%s2568] sm:$0x1]
        %v2571 = vlaneseq
        %v2572 = vshrl.u32 %v2571, 7
        %v2573 = vsub.s32 0, %v2572
        %v2574 = vrot.slane %v2569, %v2573
        %v2577 = vsel %vm1490, %v2558, 0
        %2579 = vmatprep.subr.mxu0 0.0
        %2580 = vmatpush1.msra.mxu0 0.0
        %2581 = vmatprep.subr.mxu0 0.0
        %2582 = vmatpush1.msra.mxu0 0.0
        %2583 = vmatprep.subr.mxu0 0.0
        %2584 = vmatpush1.msra.mxu0 0.0
        %2585 = vmatprep.subr.mxu0 0.0
        %2586 = vmatpush1.msra.mxu0 0.0
        %2587 = vmatprep.subr.mxu0 0.0
        %2588 = vmatpush1.msra.mxu0 0.0
        %2589 = vmatprep.subr.mxu0 0.0
        %2590 = vmatpush1.msra.mxu0 0.0
        %2591 = vmatprep.subr.mxu0 0.0
        %2592 = vmatpush1.msra.mxu0 0.0
        %2593 = vmatprep.subr.mxu0 0.0
        %2594 = vmatpush1.msra.mxu0 0.0
        %2595 = vmatprep.subr.mxu0 0.0
        %2596 = vmatpush1.msra.mxu0 %v2567
        %2597 = vmatprep.subr.mxu0 0.0
        %2598 = vmatpush1.msra.mxu0 %v2566
        %2599 = vmatprep.subr.mxu0 0.0
        %2600 = vmatpush1.msra.mxu0 %v2565
        %2601 = vmatprep.subr.mxu0 0.0
        %2602 = vmatpush1.msra.mxu0 %v2564
        %2603 = vmatprep.subr.mxu0 0.0
        %2604 = vmatpush1.msra.mxu0 %v2563
        %2605 = vmatprep.subr.mxu0 0.0
        %2606 = vmatpush1.msra.mxu0 %v2562
        %2607 = vmatprep.subr.mxu0 0.0
        %2608 = vmatpush1.msra.mxu0 %v2561
        %2609 = vmatprep.subr.mxu0 0.0
        %2610 = vmatpush1.msra.mxu0 %v2560
        %2611 = vmatprep.subr.mxu0 0.0
        %2612 = vmatpush2.msra.mxu0 0.0
        %2613 = vmatprep.subr.mxu0 0.0
        %2614 = vmatpush2.msra.mxu0 0.0
        %2615 = vmatprep.subr.mxu0 0.0
        %2616 = vmatpush2.msra.mxu0 0.0
        %2617 = vmatprep.subr.mxu0 0.0
        %2618 = vmatpush2.msra.mxu0 0.0
        %2619 = vmatprep.subr.mxu0 0.0
        %2620 = vmatpush2.msra.mxu0 0.0
        %2621 = vmatprep.subr.mxu0 0.0
        %2622 = vmatpush2.msra.mxu0 0.0
        %2623 = vmatprep.subr.mxu0 0.0
        %2624 = vmatpush2.msra.mxu0 0.0
        %2625 = vmatprep.subr.mxu0 0.0
        %2626 = vmatpush2.msra.mxu0 0.0
        %2627 = vmatprep.subr.mxu0 0.0
        %2628 = vmatpush2.msra.mxu0 0.0
        %2629 = vmatprep.subr.mxu0 0.0
        %2630 = vmatpush2.msra.mxu0 0.0
        %2631 = vmatprep.subr.mxu0 0.0
        %2632 = vmatpush2.msra.mxu0 0.0
        %2633 = vmatprep.subr.mxu0 0.0
        %2634 = vmatpush2.msra.mxu0 0.0
        %2635 = vmatprep.subr.mxu0 0.0
        %2636 = vmatpush2.msra.mxu0 0.0
        %2637 = vmatprep.subr.mxu0 0.0
        %2638 = vmatpush2.msra.mxu0 0.0
        %2639 = vmatprep.subr.mxu0 0.0
        %2640 = vmatpush2.msra.mxu0 0.0
        %2641 = vmatprep.subr.mxu0 0.0
        %2642 = vmatpush2.msra.mxu0 0.0
        %2643 = vmatprep.mubr.f32.mxu0 0.0
        %2644 = vmatmul.mubr.f32.gmra.mxu0 %v2577
        %v2645 = vpop.f32.mrf.mxu0
        %v2646 = vadd.f32 %v2574, %v2645
        %v2647 = vpop.f32.mrf.mxu0
        %2648 = vdwg.mxu0
        %v2649 = vadd.f32 %v2471, %v2646
        %s2650 = scalar_lea.vmem %s11, 1
        %v2651 = vld [vmem:[%s2650] sm:$0x1]
        %s2652 = scalar_lea.vmem %s12, 1
        %v2653 = vld [vmem:[%s2652] sm:$0x1]
        %v2654 = vsel %vm524, %v2649, 0.0
        %2655 = vadd.xlane.f32.xlu0 %v2654
        %v2656 = vpop.xlane.xlu0 %2655
        %v2657 = vmul.f32 %v2656, %v1365
        %v2658 = vsub.f32 %v2649, %v2657
        %v2659 = vmul.f32 %v2658, %v2658
        %v2660 = vsel %vm524, %v2659, 0.0
        %2661 = vadd.xlane.f32.xlu0 %v2660
        %v2662 = vpop.xlane.xlu0 %2661
        %v2663 = vmul.f32 %v2662, %v1365
        %v2664 = vadd.f32 %v2663, 1e-05
        %v2665 = vrsqrt.pop %v2664
        %v2666 = vmul.f32 %v2658, %v2665
        %v2668 = vlaneseq
        %v2669 = vshrl.u32 %v2668, 7
        %v2670 = vsub.s32 0, %v2669
        %v2671 = vrot.slane %v2651, %v2670
        %v2673 = vmul.f32 %v2666, %v2671
        %v2675 = vlaneseq
        %v2676 = vshrl.u32 %v2675, 7
        %v2677 = vsub.s32 0, %v2676
        %v2678 = vrot.slane %v2653, %v2677
        %v2680 = vadd.f32 %v2673, %v2678
        %v2681 = vld [vmem:[%s13] sm:$0x1]
        %v2683 = vlaneseq
        %v2684 = vshrl.u32 %v2683, 7
        %v2685 = vsub.s32 0, %v2684
        %v2686 = vrot.slane %v2681, %v2685
        %v2688 = vmul.f32 %v2680, %v2686
        %v2689 = vsel %vm524, %v2688, 0.0
        %2690 = vadd.xlane.f32.xlu0 %v2689
        %v2691 = vpop.xlane.xlu0 %2690
        %v2692 = vld [vmem:[#allocation2] sm:$0x1]
        %v2694 = vlaneseq
        %v2695 = vshrl.u32 %v2694, 7
        %v2696 = vsub.s32 0, %v2695
        %v2697 = vrot.slane %v2692, %v2696
        %v2699 = vadd.f32 %v2691, %v2697
        %vm2700 = vcmask 7168
        %2701 = vst.msk [vmem:[%s511] sm:$0xff] %vm2700, %v2699
        %p2702 = scmp.lt.s32.totalorder %s31, 1
        %s2703 = scalar_select %p2702, %s31, 1
        %s2704 = smul.addr %s2703, 8
        %s2705 = scalar_lea.vmem %s15, %s2704
        // Predicated region
        $region85: #{tpu_custom_call.1} parent=79 // pred_check
          %p2706 = pneg %p369
        $region86: #{tpu_custom_call.1} parent=79 // pred_check_branch
          %2708 = sbr.rel (%p2706) target = $region88
        $region87: #{tpu_custom_call.1} parent=79 // pred_region
          _
        $region88: #{tpu_custom_call.1} parent=79 // pred_fallthru
          _
      $region80: #{tpu_custom_call.1} parent=5 // pred_fallthru
        _
      %p2709 = scmp.le.s32.totalorder 2, %s26
      // Predicated region
      $region89: #{tpu_custom_call.1} parent=5 // pred_check
        %p2710 = pneg %p2709
      $region90: #{tpu_custom_call.1} parent=5 // pred_check_branch
        %2712 = sbr.rel (%p2710) target = $region92
      $region91: #{tpu_custom_call.1} parent=5 // pred_region
        %s2713 = ssub.s32 %s26, 2
        // Predicated region
        $region93: #{tpu_custom_call.1} parent=91 // pred_check
          %p2714 = pneg %p375
        $region94: #{tpu_custom_call.1} parent=91 // pred_check_branch
          %2716 = sbr.rel (%p2714) target = $region96
        $region95: #{tpu_custom_call.1} parent=91 // pred_region
          %p2717 = scmp.lt.s32.totalorder %s32, 1
          %s2718 = scalar_select %p2717, %s32, 1
          %s2719 = smul.addr %s2718, 8
          %s2720 = scalar_lea.vmem %s15, %s2719
        $region96: #{tpu_custom_call.1} parent=91 // pred_fallthru
          _
      $region92: #{tpu_custom_call.1} parent=5 // pred_fallthru
        _
    $region6: #{tpu_custom_call.1} parent=1 // loop_footer
      %s30 = sadd.s32 1, %s26
    $region7: #{tpu_custom_call.1} parent=1 // loop_footer_branch
      %25 = sbr.rel target = $region3
    $region8: #{tpu_custom_call.1} parent=1 // loop_exit
      _
    %2721 = vsyncpa [#allocation4], 1
    %s2722 = scalar_lea.sflag [#allocation4], 1
    %2723 = vsyncpa %s2722, 1

</llo_original>
